<compile_context>
chip_gen: v5e
topology: v5e:2x2
jax: 0.10.0
libtpu: 0.0.40
codegen_flags: <defaults>
</compile_context>

<pallas_src>
import math

import jax
import jax.numpy as jnp
from jax import lax
from jax.experimental import pallas as pl
from jax.experimental.pallas import tpu as pltpu


def _round_up(x, m):
    return ((x + m - 1) // m) * m


# ---------------------------------------------------------------------------
# Kernel factory: the whole stacked bidirectional LSTM + FC in ONE pallas_call
# ---------------------------------------------------------------------------
def _make_fused_model_kernel(T, B, H, num_fused, n_hseq, unroll):
    H2, H3, H4 = 2 * H, 3 * H, 4 * H

    def cell_ifog(gates, c):
        """LSTM cell with gate columns repacked to (i, f, o, g):
        one contiguous sigmoid slab + one contiguous tanh slab."""
        sig = jax.nn.sigmoid(gates[:, :H3])
        g = jnp.tanh(gates[:, H3:])
        i, f, o = sig[:, :H], sig[:, H:H2], sig[:, H2:H3]
        c_new = f * c + i * g
        h_new = o * jnp.tanh(c_new)
        return h_new, c_new

    def kernel(*args):
        it = iter(args)
        x_ref = next(it)
        mid = [(next(it), next(it), next(it)) for _ in range(num_fused)]
        wihf_ref = next(it)
        whhf_ref = next(it)
        bf_ref = next(it)
        wihb_ref = next(it)
        bb_ref = next(it)
        fcwf_ref = next(it)
        fcwb_ref = next(it)
        fcb_ref = next(it)
        out_ref = next(it)
        gin_ref = next(it)
        hbufs = [next(it) for _ in range(n_hseq)]

        zero_h = jnp.zeros((B, H), jnp.float32)

        def run_fused_layer(src, wih_ref, whh_ref, b_ref, dst_ref):
            # Hoisted input projection for BOTH directions: one big MXU matmul.
            gin_ref[...] = (jnp.dot(src, wih_ref[...],
                                    preferred_element_type=jnp.float32)
                            + b_ref[...])
            whh_blk = whh_ref[...]          # (2H, 8H) block-diagonal [fwd | bwd]

            def step(s, carry):
                h2, c_f, c_b = carry
                rf = pl.multiple_of(s * B, 8)              # fwd time s
                rb = pl.multiple_of((T - 1 - s) * B, 8)    # bwd time T-1-s
                # ONE recurrent matmul covering both directions.
                gp = jnp.dot(h2, whh_blk, preferred_element_type=jnp.float32)
                g_f = gp[:, :H4] + gin_ref[pl.ds(rf, B), :H4]
                g_b = gp[:, H4:] + gin_ref[pl.ds(rb, B), H4:]
                h_f, c_f = cell_ifog(g_f, c_f)
                h_b, c_b = cell_ifog(g_b, c_b)
                dst_ref[pl.ds(rf, B), :H] = h_f
                dst_ref[pl.ds(rb, B), H:] = h_b
                return (jnp.concatenate([h_f, h_b], axis=1), c_f, c_b)

            lax.fori_loop(0, T, step,
                          (jnp.zeros((B, H2), jnp.float32), zero_h, zero_h),
                          unroll=unroll)

        # ---- layers 0 .. num_fused-1: full bidirectional hidden sequences ----
        src = x_ref[...]
        for li, (wih_ref, whh_ref, b_ref) in enumerate(mid):
            dst_ref = hbufs[li % n_hseq]
            run_fused_layer(src, wih_ref, whh_ref, b_ref, dst_ref)
            src = dst_ref[...]

        # ---- last layer: forward recurrence only + single bwd step + FC ----
        # Only out[:, T-1, :] feeds the Linear, so:
        #  * the bwd-direction input projection over all T is never computed,
        #  * the full hidden sequence of this layer is never written.
        gin_ref[:, :H4] = (jnp.dot(src, wihf_ref[...],
                                   preferred_element_type=jnp.float32)
                           + bf_ref[...])
        whh_f = whhf_ref[...]

        def last_step(s, carry):
            h, c = carry
            rf = pl.multiple_of(s * B, 8)
            gates = (jnp.dot(h, whh_f, preferred_element_type=jnp.float32)
                     + gin_ref[pl.ds(rf, B), :H4])
            return cell_ifog(gates, c)

        h_f, _ = lax.fori_loop(0, T, last_step, (zero_h, zero_h), unroll=unroll)

        # Backward direction at t = T-1 is its FIRST step (h0 = c0 = 0):
        # one small matmul on the last time row only, no recurrence.
        x_last = src[(T - 1) * B:T * B, :]
        g_b = (jnp.dot(x_last, wihb_ref[...], preferred_element_type=jnp.float32)
               + bb_ref[...])
        h_b, _ = cell_ifog(g_b, zero_h)

        # FC head split per direction (no in-kernel concat on the serial tail).
        out_ref[...] = (jnp.dot(h_f, fcwf_ref[...],
                                preferred_element_type=jnp.float32)
                        + jnp.dot(h_b, fcwb_ref[...],
                                  preferred_element_type=jnp.float32)
                        + fcb_ref[...])

    return kernel


# ---------------------------------------------------------------------------
# pallas_call wrapper
# ---------------------------------------------------------------------------
def _vmem_limit_bytes(io_bytes, scratch_bytes):
    try:
        cap = int(pltpu.get_tpu_info().vmem_capacity_bytes)
    except Exception:
        cap = 64 << 20
    # BlockSpec-managed inputs/outputs are double-buffered; add headroom.
    est = 2 * io_bytes + scratch_bytes + (4 << 20)
    return int(min(max(est, 16 << 20), (3 * cap) // 4))


def bilstm_forward(params, x):
    """Equivalent of BiLSTMModel.forward. x: (B, T, input_size) -> (B, output_size)."""
    b_orig, T, D = x.shape
    B = _round_up(b_orig, 8)                       # pad batch to 8-sublane granule
    if B != b_orig:
        x = jnp.pad(x, ((0, B - b_orig), (0, 0), (0, 0)))
    # Batch-first -> flat time-major (T*B, D); the only layout pass in XLA.
    x2d = jnp.transpose(x, (1, 0, 2)).reshape(T * B, D)
    TB = T * B

    fused = params["fused_layers"]
    last = params["last"]
    H = last["whh_f"].shape[0]
    O = params["fc_b"].shape[1]
    num_fused = len(fused)
    n_hseq = min(num_fused, 2)                     # ping-pong inter-layer buffers
    gin_cols = 8 * H if num_fused else 4 * H
    unroll = max(1, min(T, 8))

    inputs = [x2d]
    in_specs = [pl.BlockSpec((TB, D), lambda i: (0, 0))]
    for lp in fused:
        f_in = lp["wih_blk"].shape[0]
        inputs += [lp["wih_blk"], lp["whh_blk"], lp["b_blk"]]
        in_specs += [pl.BlockSpec((f_in, 8 * H), lambda i: (0, 0)),
                     pl.BlockSpec((2 * H, 8 * H), lambda i: (0, 0)),
                     pl.BlockSpec((1, 8 * H), lambda i: (0, 0))]
    f_last = last["wih_f"].shape[0]
    inputs += [last["wih_f"], last["whh_f"], last["b_f"],
               last["wih_b"], last["b_b"],
               params["fc_wf"], params["fc_wb"], params["fc_b"]]
    in_specs += [pl.BlockSpec((f_last, 4 * H), lambda i: (0, 0)),
                 pl.BlockSpec((H, 4 * H), lambda i: (0, 0)),
                 pl.BlockSpec((1, 4 * H), lambda i: (0, 0)),
                 pl.BlockSpec((f_last, 4 * H), lambda i: (0, 0)),
                 pl.BlockSpec((1, 4 * H), lambda i: (0, 0)),
                 pl.BlockSpec((H, O), lambda i: (0, 0)),
                 pl.BlockSpec((H, O), lambda i: (0, 0)),
                 pl.BlockSpec((1, O), lambda i: (0, 0))]

    scratch_shapes = [pltpu.VMEM((TB, gin_cols), jnp.float32)]
    scratch_shapes += [pltpu.VMEM((TB, 2 * H), jnp.float32)] * n_hseq

    io_bytes = sum(int(math.prod(a.shape)) * a.dtype.itemsize for a in inputs)
    io_bytes += B * O * 4
    scratch_bytes = (TB * gin_cols + n_hseq * TB * 2 * H) * 4

    kernel = _make_fused_model_kernel(T, B, H, num_fused, n_hseq, unroll)
    out = pl.pallas_call(
        kernel,
        out_shape=jax.ShapeDtypeStruct((B, O), jnp.float32),
        grid=(1,),
        in_specs=in_specs,
        out_specs=pl.BlockSpec((B, O), lambda i: (0, 0)),
        scratch_shapes=scratch_shapes,
        compiler_params=pltpu.CompilerParams(
            dimension_semantics=("arbitrary",),
            vmem_limit_bytes=_vmem_limit_bytes(io_bytes, scratch_bytes)),
    )(*inputs)
    return out[:b_orig]


# ---------------------------------------------------------------------------
# Deterministic parameter init (same shapes/semantics as the PyTorch module)
# ---------------------------------------------------------------------------
def _reorder_ifog(w):
    """Reorder PyTorch gate blocks (i, f, g, o) -> (i, f, o, g) along axis 0."""
    h = w.shape[0] // 4
    return jnp.concatenate([w[:2 * h], w[3 * h:], w[2 * h:3 * h]], axis=0)


def init_params(key, input_size, hidden_size, num_layers, output_size):
    H = hidden_size
    k = 1.0 / math.sqrt(H)
    raw_layers = []
    for layer in range(num_layers):
        in_sz = input_size if layer == 0 else 2 * H
        dirs = {}
        for name in ("fwd", "bwd"):
            key, k1, k2, k3, k4 = jax.random.split(key, 5)
            w_ih = jax.random.uniform(k1, (4 * H, in_sz), jnp.float32, -k, k)
            w_hh = jax.random.uniform(k2, (4 * H, H), jnp.float32, -k, k)
            b_ih = jax.random.uniform(k3, (4 * H,), jnp.float32, -k, k)
            b_hh = jax.random.uniform(k4, (4 * H,), jnp.float32, -k, k)
            dirs[name] = (w_ih, w_hh, b_ih, b_hh)
        raw_layers.append(dirs)
    key, k1, k2 = jax.random.split(key, 3)
    kf = 1.0 / math.sqrt(2 * H)
    fc_w = jax.random.uniform(k1, (output_size, 2 * H), jnp.float32, -kf, kf)
    fc_b = jax.random.uniform(k2, (output_size,), jnp.float32, -kf, kf)

    params = {"raw_layers": raw_layers, "fc_w_raw": fc_w, "fc_b_raw": fc_b}

    # Packed forms for the fused kernel (gate columns repacked to (i,f,o,g)).
    zeros_hh = jnp.zeros((H, 4 * H), jnp.float32)
    fused = []
    for dirs in raw_layers[:-1]:
        w_ih_f, w_hh_f, b_if, b_hf = dirs["fwd"]
        w_ih_b, w_hh_b, b_ib, b_hb = dirs["bwd"]
        wih_blk = jnp.concatenate(
            [_reorder_ifog(w_ih_f).T, _reorder_ifog(w_ih_b).T], axis=1)  # (F, 8H)
        b_blk = jnp.concatenate(
            [_reorder_ifog(b_if + b_hf), _reorder_ifog(b_ib + b_hb)])[None, :]
        whh_f_t = _reorder_ifog(w_hh_f).T                                # (H, 4H)
        whh_b_t = _reorder_ifog(w_hh_b).T
        whh_blk = jnp.concatenate(                                       # (2H, 8H)
            [jnp.concatenate([whh_f_t, zeros_hh], axis=1),
             jnp.concatenate([zeros_hh, whh_b_t], axis=1)], axis=0)
        fused.append({"wih_blk": wih_blk, "whh_blk": whh_blk, "b_blk": b_blk})

    dirs = raw_layers[-1]
    w_ih_f, w_hh_f, b_if, b_hf = dirs["fwd"]
    w_ih_b, w_hh_b, b_ib, b_hb = dirs["bwd"]
    params["fused_layers"] = fused
    params["last"] = {
        "wih_f": _reorder_ifog(w_ih_f).T,                 # (F_last, 4H)
        "whh_f": _reorder_ifog(w_hh_f).T,                 # (H, 4H)
        "b_f": _reorder_ifog(b_if + b_hf)[None, :],       # (1, 4H)
        "wih_b": _reorder_ifog(w_ih_b).T,                 # (F_last, 4H)
        "b_b": _reorder_ifog(b_ib + b_hb)[None, :],       # (1, 4H)
    }
    params["fc_wf"] = fc_w.T[:H]                          # (H, O)
    params["fc_wb"] = fc_w.T[H:]                          # (H, O)
    params["fc_b"] = fc_b[None, :]                        # (1, O)
    return params


# ---------------------------------------------------------------------------
# Pure-JAX reference (numerical check, PyTorch gate order)
# ---------------------------------------------------------------------------
def _ref_lstm_direction(x_tbd, w_ih, w_hh, b_ih, b_hh):
    _, Bb, _ = x_tbd.shape
    H = w_hh.shape[1]
    w_ih_t, w_hh_t = w_ih.T, w_hh.T
    b = (b_ih + b_hh)[None, :]

    def step(carry, x_t):
        h, c = carry
        gates = (jnp.dot(x_t, w_ih_t, precision=lax.Precision.HIGHEST)
                 + jnp.dot(h, w_hh_t, precision=lax.Precision.HIGHEST) + b)
        i = jax.nn.sigmoid(gates[:, 0 * H:1 * H])
        f = jax.nn.sigmoid(gates[:, 1 * H:2 * H])
        g = jnp.tanh(gates[:, 2 * H:3 * H])
        o = jax.nn.sigmoid(gates[:, 3 * H:4 * H])
        c = f * c + i * g
        h = o * jnp.tanh(c)
        return (h, c), h

    init = (jnp.zeros((Bb, H), jnp.float32), jnp.zeros((Bb, H), jnp.float32))
    _, hs = lax.scan(step, init, x_tbd)
    return hs


def ref_forward(params, x):
    h = jnp.transpose(x, (1, 0, 2))
    for dirs in params["raw_layers"]:
        fwd = _ref_lstm_direction(h, *dirs["fwd"])
        bwd = _ref_lstm_direction(h[::-1], *dirs["bwd"])[::-1]
        h = jnp.concatenate([fwd, bwd], axis=-1)
    return (jnp.dot(h[-1], params["fc_w_raw"].T, precision=lax.Precision.HIGHEST)
            + params["fc_b_raw"][None, :])


# ---------------------------------------------------------------------------
if __name__ == "__main__":
    B, T = 2, 8
    INPUT_SIZE, HIDDEN_SIZE, NUM_LAYERS, OUTPUT_SIZE = 8, 32, 2, 4

    key = jax.random.PRNGKey(0)
    key, pkey, xkey = jax.random.split(key, 3)
    params = init_params(pkey, INPUT_SIZE, HIDDEN_SIZE, NUM_LAYERS, OUTPUT_SIZE)
    x = jax.random.normal(xkey, (B, T, INPUT_SIZE), jnp.float32)

    out = jax.block_until_ready(jax.jit(bilstm_forward)(params, x))
    assert out.shape == (B, OUTPUT_SIZE), out.shape

    ref = jax.block_until_ready(ref_forward(params, x))
    max_diff = float(jnp.max(jnp.abs(out - ref)))
    assert jnp.allclose(out, ref, atol=1e-3, rtol=1e-3), (
        f"mismatch: max abs diff {max_diff}")

    print("KERNEL_OK")
</pallas_src>

<mosaic_0001>
module attributes {stable_mosaic.version = 11 : i64} {
  func.func @kernel(%arg0: i32, %arg1: memref<64x8xf32, #tpu.memory_space<vmem>>, %arg2: memref<8x256xf32, #tpu.memory_space<vmem>>, %arg3: memref<64x256xf32, #tpu.memory_space<vmem>>, %arg4: memref<1x256xf32, #tpu.memory_space<vmem>>, %arg5: memref<64x128xf32, #tpu.memory_space<vmem>>, %arg6: memref<32x128xf32, #tpu.memory_space<vmem>>, %arg7: memref<1x128xf32, #tpu.memory_space<vmem>>, %arg8: memref<64x128xf32, #tpu.memory_space<vmem>>, %arg9: memref<1x128xf32, #tpu.memory_space<vmem>>, %arg10: memref<32x4xf32, #tpu.memory_space<vmem>>, %arg11: memref<32x4xf32, #tpu.memory_space<vmem>>, %arg12: memref<1x4xf32, #tpu.memory_space<vmem>>, %arg13: memref<8x4xf32, #tpu.memory_space<vmem>>, %arg14: memref<64x256xf32, #tpu.memory_space<vmem>>, %arg15: memref<64x64xf32, #tpu.memory_space<vmem>>) attributes {dimension_semantics = [#tpu.dimension_semantics<arbitrary>], iteration_bounds = array<i64: 1>, scalar_prefetch = 0 : i64, scratch_operands = 2 : i64, tpu.core_type = #tpu.core_type<tc>, window_params = [{pipeline_mode = #tpu.pipeline_mode<synchronous>, transform_indices = @transform_0, window_bounds = array<i64: 64, 8>}, {pipeline_mode = #tpu.pipeline_mode<synchronous>, transform_indices = @transform_1, window_bounds = array<i64: 8, 256>}, {pipeline_mode = #tpu.pipeline_mode<synchronous>, transform_indices = @transform_2, window_bounds = array<i64: 64, 256>}, {pipeline_mode = #tpu.pipeline_mode<synchronous>, transform_indices = @transform_3, window_bounds = array<i64: 1, 256>}, {pipeline_mode = #tpu.pipeline_mode<synchronous>, transform_indices = @transform_4, window_bounds = array<i64: 64, 128>}, {pipeline_mode = #tpu.pipeline_mode<synchronous>, transform_indices = @transform_5, window_bounds = array<i64: 32, 128>}, {pipeline_mode = #tpu.pipeline_mode<synchronous>, transform_indices = @transform_6, window_bounds = array<i64: 1, 128>}, {pipeline_mode = #tpu.pipeline_mode<synchronous>, transform_indices = @transform_7, window_bounds = array<i64: 64, 128>}, {pipeline_mode = #tpu.pipeline_mode<synchronous>, transform_indices = @transform_8, window_bounds = array<i64: 1, 128>}, {pipeline_mode = #tpu.pipeline_mode<synchronous>, transform_indices = @transform_9, window_bounds = array<i64: 32, 4>}, {pipeline_mode = #tpu.pipeline_mode<synchronous>, transform_indices = @transform_10, window_bounds = array<i64: 32, 4>}, {pipeline_mode = #tpu.pipeline_mode<synchronous>, transform_indices = @transform_11, window_bounds = array<i64: 1, 4>}, {pipeline_mode = #tpu.pipeline_mode<synchronous>, transform_indices = @transform_12, window_bounds = array<i64: 8, 4>}]} {
    %cst = arith.constant 0.000000e+00 : f32
    %0 = vector.broadcast %cst : f32 to vector<8x32xf32>
    %c0 = arith.constant 0 : index
    %c0_0 = arith.constant 0 : index
    %1 = vector.load %arg1[%c0, %c0_0] : memref<64x8xf32, #tpu.memory_space<vmem>>, vector<64x8xf32>
    %c0_1 = arith.constant 0 : index
    %c0_2 = arith.constant 0 : index
    %2 = vector.load %arg2[%c0_1, %c0_2] : memref<8x256xf32, #tpu.memory_space<vmem>>, vector<8x256xf32>
    %cst_3 = arith.constant dense<0.000000e+00> : vector<64x256xf32>
    %3 = tpu.matmul %1, %2, %cst_3 {dimension_numbers = #tpu.dot_dimension_numbers<[1], [0], [0], [1], [0, 0, 1, 1], [], []>} : vector<64x8xf32>, vector<8x256xf32>, vector<64x256xf32> -> vector<64x256xf32>
    %c0_4 = arith.constant 0 : index
    %c0_5 = arith.constant 0 : index
    %4 = vector.load %arg4[%c0_4, %c0_5] : memref<1x256xf32, #tpu.memory_space<vmem>>, vector<1x256xf32>
    %5 = vector.broadcast %4 : vector<1x256xf32> to vector<64x256xf32>
    %6 = arith.addf %3, %5 : vector<64x256xf32>
    %c0_6 = arith.constant 0 : index
    %c0_7 = arith.constant 0 : index
    %7 = vector.load %arg14[%c0_6, %c0_7] : memref<64x256xf32, #tpu.memory_space<vmem>>, vector<64x256xf32>
    tpu.vector_store %arg14[%c0_6, %c0_7], %6 {strides = array<i32>} : memref<64x256xf32, #tpu.memory_space<vmem>>, vector<64x256xf32>,
    %c0_8 = arith.constant 0 : index
    %c0_9 = arith.constant 0 : index
    %8 = vector.load %arg3[%c0_8, %c0_9] : memref<64x256xf32, #tpu.memory_space<vmem>>, vector<64x256xf32>
    %cst_10 = arith.constant 0.000000e+00 : f32
    %9 = vector.broadcast %cst_10 : f32 to vector<8x64xf32>
    %c0_i32 = arith.constant 0 : i32
    %c8_i32 = arith.constant 8 : i32
    %10 = arith.muli %c0_i32, %c8_i32 : i32
    %11 = tpu.assume_multiple %10, 8 : i32
    %c7_i32 = arith.constant 7 : i32
    %12 = arith.subi %c7_i32, %c0_i32 : i32
    %c8_i32_11 = arith.constant 8 : i32
    %13 = arith.muli %12, %c8_i32_11 : i32
    %14 = tpu.assume_multiple %13, 8 : i32
    %cst_12 = arith.constant dense<0.000000e+00> : vector<8x256xf32>
    %15 = tpu.matmul %9, %8, %cst_12 {dimension_numbers = #tpu.dot_dimension_numbers<[1], [0], [0], [1], [0, 0, 1, 1], [], []>} : vector<8x64xf32>, vector<64x256xf32>, vector<8x256xf32> -> vector<8x256xf32>
    %16 = vector.extract_strided_slice %15 {offsets = [0, 0], sizes = [8, 128], strides = [1, 1]} : vector<8x256xf32> to vector<8x128xf32>
    %17 = arith.index_cast %11 : i32 to index
    %c0_13 = arith.constant 0 : index
    %18 = vector.load %arg14[%17, %c0_13] : memref<64x256xf32, #tpu.memory_space<vmem>>, vector<8x128xf32>
    %19 = arith.addf %16, %18 : vector<8x128xf32>
    %20 = vector.extract_strided_slice %15 {offsets = [0, 128], sizes = [8, 128], strides = [1, 1]} : vector<8x256xf32> to vector<8x128xf32>
    %21 = arith.index_cast %14 : i32 to index
    %c128 = arith.constant 128 : index
    %22 = vector.load %arg14[%21, %c128] : memref<64x256xf32, #tpu.memory_space<vmem>>, vector<8x128xf32>
    %23 = arith.addf %20, %22 : vector<8x128xf32>
    %24 = vector.extract_strided_slice %19 {offsets = [0, 0], sizes = [8, 96], strides = [1, 1]} : vector<8x128xf32> to vector<8x96xf32>
    %25 = arith.negf %24 : vector<8x96xf32>
    %26 = math.exp %25 : vector<8x96xf32>
    %cst_14 = arith.constant 1.000000e+00 : f32
    %27 = vector.broadcast %cst_14 : f32 to vector<8x96xf32>
    %28 = arith.addf %27, %26 : vector<8x96xf32>
    %29 = arith.divf %27, %28 : vector<8x96xf32>
    %30 = vector.extract_strided_slice %19 {offsets = [0, 96], sizes = [8, 32], strides = [1, 1]} : vector<8x128xf32> to vector<8x32xf32>
    %31 = math.tanh %30 : vector<8x32xf32>
    %32 = vector.extract_strided_slice %29 {offsets = [0, 0], sizes = [8, 32], strides = [1, 1]} : vector<8x96xf32> to vector<8x32xf32>
    %33 = vector.extract_strided_slice %29 {offsets = [0, 32], sizes = [8, 32], strides = [1, 1]} : vector<8x96xf32> to vector<8x32xf32>
    %34 = vector.extract_strided_slice %29 {offsets = [0, 64], sizes = [8, 32], strides = [1, 1]} : vector<8x96xf32> to vector<8x32xf32>
    %35 = arith.mulf %33, %0 : vector<8x32xf32>
    %36 = arith.mulf %32, %31 : vector<8x32xf32>
    %37 = arith.addf %35, %36 : vector<8x32xf32>
    %38 = math.tanh %37 : vector<8x32xf32>
    %39 = arith.mulf %34, %38 : vector<8x32xf32>
    %40 = vector.extract_strided_slice %23 {offsets = [0, 0], sizes = [8, 96], strides = [1, 1]} : vector<8x128xf32> to vector<8x96xf32>
    %41 = arith.negf %40 : vector<8x96xf32>
    %42 = math.exp %41 : vector<8x96xf32>
    %cst_15 = arith.constant 1.000000e+00 : f32
    %43 = vector.broadcast %cst_15 : f32 to vector<8x96xf32>
    %44 = arith.addf %43, %42 : vector<8x96xf32>
    %45 = arith.divf %43, %44 : vector<8x96xf32>
    %46 = vector.extract_strided_slice %23 {offsets = [0, 96], sizes = [8, 32], strides = [1, 1]} : vector<8x128xf32> to vector<8x32xf32>
    %47 = math.tanh %46 : vector<8x32xf32>
    %48 = vector.extract_strided_slice %45 {offsets = [0, 0], sizes = [8, 32], strides = [1, 1]} : vector<8x96xf32> to vector<8x32xf32>
    %49 = vector.extract_strided_slice %45 {offsets = [0, 32], sizes = [8, 32], strides = [1, 1]} : vector<8x96xf32> to vector<8x32xf32>
    %50 = vector.extract_strided_slice %45 {offsets = [0, 64], sizes = [8, 32], strides = [1, 1]} : vector<8x96xf32> to vector<8x32xf32>
    %51 = arith.mulf %49, %0 : vector<8x32xf32>
    %52 = arith.mulf %48, %47 : vector<8x32xf32>
    %53 = arith.addf %51, %52 : vector<8x32xf32>
    %54 = math.tanh %53 : vector<8x32xf32>
    %55 = arith.mulf %50, %54 : vector<8x32xf32>
    %56 = arith.index_cast %11 : i32 to index
    %c0_16 = arith.constant 0 : index
    %57 = vector.load %arg15[%56, %c0_16] : memref<64x64xf32, #tpu.memory_space<vmem>>, vector<8x32xf32>
    tpu.vector_store %arg15[%56, %c0_16], %39 {strides = array<i32>} : memref<64x64xf32, #tpu.memory_space<vmem>>, vector<8x32xf32>,
    %58 = arith.index_cast %14 : i32 to index
    %c32 = arith.constant 32 : index
    %59 = vector.load %arg15[%58, %c32] : memref<64x64xf32, #tpu.memory_space<vmem>>, vector<8x32xf32>
    tpu.vector_store %arg15[%58, %c32], %55 {strides = array<i32>} : memref<64x64xf32, #tpu.memory_space<vmem>>, vector<8x32xf32>,
    %60 = tpu.concatenate %39, %55 in 1 : vector<8x32xf32>, vector<8x32xf32> -> vector<8x64xf32>
    %c1_i32 = arith.constant 1 : i32
    %c8_i32_17 = arith.constant 8 : i32
    %61 = arith.muli %c1_i32, %c8_i32_17 : i32
    %62 = tpu.assume_multiple %61, 8 : i32
    %c7_i32_18 = arith.constant 7 : i32
    %63 = arith.subi %c7_i32_18, %c1_i32 : i32
    %c8_i32_19 = arith.constant 8 : i32
    %64 = arith.muli %63, %c8_i32_19 : i32
    %65 = tpu.assume_multiple %64, 8 : i32
    %cst_20 = arith.constant dense<0.000000e+00> : vector<8x256xf32>
    %66 = tpu.matmul %60, %8, %cst_20 {dimension_numbers = #tpu.dot_dimension_numbers<[1], [0], [0], [1], [0, 0, 1, 1], [], []>} : vector<8x64xf32>, vector<64x256xf32>, vector<8x256xf32> -> vector<8x256xf32>
    %67 = vector.extract_strided_slice %66 {offsets = [0, 0], sizes = [8, 128], strides = [1, 1]} : vector<8x256xf32> to vector<8x128xf32>
    %68 = arith.index_cast %62 : i32 to index
    %c0_21 = arith.constant 0 : index
    %69 = vector.load %arg14[%68, %c0_21] : memref<64x256xf32, #tpu.memory_space<vmem>>, vector<8x128xf32>
    %70 = arith.addf %67, %69 : vector<8x128xf32>
    %71 = vector.extract_strided_slice %66 {offsets = [0, 128], sizes = [8, 128], strides = [1, 1]} : vector<8x256xf32> to vector<8x128xf32>
    %72 = arith.index_cast %65 : i32 to index
    %c128_22 = arith.constant 128 : index
    %73 = vector.load %arg14[%72, %c128_22] : memref<64x256xf32, #tpu.memory_space<vmem>>, vector<8x128xf32>
    %74 = arith.addf %71, %73 : vector<8x128xf32>
    %75 = vector.extract_strided_slice %70 {offsets = [0, 0], sizes = [8, 96], strides = [1, 1]} : vector<8x128xf32> to vector<8x96xf32>
    %76 = arith.negf %75 : vector<8x96xf32>
    %77 = math.exp %76 : vector<8x96xf32>
    %cst_23 = arith.constant 1.000000e+00 : f32
    %78 = vector.broadcast %cst_23 : f32 to vector<8x96xf32>
    %79 = arith.addf %78, %77 : vector<8x96xf32>
    %80 = arith.divf %78, %79 : vector<8x96xf32>
    %81 = vector.extract_strided_slice %70 {offsets = [0, 96], sizes = [8, 32], strides = [1, 1]} : vector<8x128xf32> to vector<8x32xf32>
    %82 = math.tanh %81 : vector<8x32xf32>
    %83 = vector.extract_strided_slice %80 {offsets = [0, 0], sizes = [8, 32], strides = [1, 1]} : vector<8x96xf32> to vector<8x32xf32>
    %84 = vector.extract_strided_slice %80 {offsets = [0, 32], sizes = [8, 32], strides = [1, 1]} : vector<8x96xf32> to vector<8x32xf32>
    %85 = vector.extract_strided_slice %80 {offsets = [0, 64], sizes = [8, 32], strides = [1, 1]} : vector<8x96xf32> to vector<8x32xf32>
    %86 = arith.mulf %84, %37 : vector<8x32xf32>
    %87 = arith.mulf %83, %82 : vector<8x32xf32>
    %88 = arith.addf %86, %87 : vector<8x32xf32>
    %89 = math.tanh %88 : vector<8x32xf32>
    %90 = arith.mulf %85, %89 : vector<8x32xf32>
    %91 = vector.extract_strided_slice %74 {offsets = [0, 0], sizes = [8, 96], strides = [1, 1]} : vector<8x128xf32> to vector<8x96xf32>
    %92 = arith.negf %91 : vector<8x96xf32>
    %93 = math.exp %92 : vector<8x96xf32>
    %cst_24 = arith.constant 1.000000e+00 : f32
    %94 = vector.broadcast %cst_24 : f32 to vector<8x96xf32>
    %95 = arith.addf %94, %93 : vector<8x96xf32>
    %96 = arith.divf %94, %95 : vector<8x96xf32>
    %97 = vector.extract_strided_slice %74 {offsets = [0, 96], sizes = [8, 32], strides = [1, 1]} : vector<8x128xf32> to vector<8x32xf32>
    %98 = math.tanh %97 : vector<8x32xf32>
    %99 = vector.extract_strided_slice %96 {offsets = [0, 0], sizes = [8, 32], strides = [1, 1]} : vector<8x96xf32> to vector<8x32xf32>
    %100 = vector.extract_strided_slice %96 {offsets = [0, 32], sizes = [8, 32], strides = [1, 1]} : vector<8x96xf32> to vector<8x32xf32>
    %101 = vector.extract_strided_slice %96 {offsets = [0, 64], sizes = [8, 32], strides = [1, 1]} : vector<8x96xf32> to vector<8x32xf32>
    %102 = arith.mulf %100, %53 : vector<8x32xf32>
    %103 = arith.mulf %99, %98 : vector<8x32xf32>
    %104 = arith.addf %102, %103 : vector<8x32xf32>
    %105 = math.tanh %104 : vector<8x32xf32>
    %106 = arith.mulf %101, %105 : vector<8x32xf32>
    %107 = arith.index_cast %62 : i32 to index
    %c0_25 = arith.constant 0 : index
    %108 = vector.load %arg15[%107, %c0_25] : memref<64x64xf32, #tpu.memory_space<vmem>>, vector<8x32xf32>
    tpu.vector_store %arg15[%107, %c0_25], %90 {strides = array<i32>} : memref<64x64xf32, #tpu.memory_space<vmem>>, vector<8x32xf32>,
    %109 = arith.index_cast %65 : i32 to index
    %c32_26 = arith.constant 32 : index
    %110 = vector.load %arg15[%109, %c32_26] : memref<64x64xf32, #tpu.memory_space<vmem>>, vector<8x32xf32>
    tpu.vector_store %arg15[%109, %c32_26], %106 {strides = array<i32>} : memref<64x64xf32, #tpu.memory_space<vmem>>, vector<8x32xf32>,
    %111 = tpu.concatenate %90, %106 in 1 : vector<8x32xf32>, vector<8x32xf32> -> vector<8x64xf32>
    %c2_i32 = arith.constant 2 : i32
    %c8_i32_27 = arith.constant 8 : i32
    %112 = arith.muli %c2_i32, %c8_i32_27 : i32
    %113 = tpu.assume_multiple %112, 8 : i32
    %c7_i32_28 = arith.constant 7 : i32
    %114 = arith.subi %c7_i32_28, %c2_i32 : i32
    %c8_i32_29 = arith.constant 8 : i32
    %115 = arith.muli %114, %c8_i32_29 : i32
    %116 = tpu.assume_multiple %115, 8 : i32
    %cst_30 = arith.constant dense<0.000000e+00> : vector<8x256xf32>
    %117 = tpu.matmul %111, %8, %cst_30 {dimension_numbers = #tpu.dot_dimension_numbers<[1], [0], [0], [1], [0, 0, 1, 1], [], []>} : vector<8x64xf32>, vector<64x256xf32>, vector<8x256xf32> -> vector<8x256xf32>
    %118 = vector.extract_strided_slice %117 {offsets = [0, 0], sizes = [8, 128], strides = [1, 1]} : vector<8x256xf32> to vector<8x128xf32>
    %119 = arith.index_cast %113 : i32 to index
    %c0_31 = arith.constant 0 : index
    %120 = vector.load %arg14[%119, %c0_31] : memref<64x256xf32, #tpu.memory_space<vmem>>, vector<8x128xf32>
    %121 = arith.addf %118, %120 : vector<8x128xf32>
    %122 = vector.extract_strided_slice %117 {offsets = [0, 128], sizes = [8, 128], strides = [1, 1]} : vector<8x256xf32> to vector<8x128xf32>
    %123 = arith.index_cast %116 : i32 to index
    %c128_32 = arith.constant 128 : index
    %124 = vector.load %arg14[%123, %c128_32] : memref<64x256xf32, #tpu.memory_space<vmem>>, vector<8x128xf32>
    %125 = arith.addf %122, %124 : vector<8x128xf32>
    %126 = vector.extract_strided_slice %121 {offsets = [0, 0], sizes = [8, 96], strides = [1, 1]} : vector<8x128xf32> to vector<8x96xf32>
    %127 = arith.negf %126 : vector<8x96xf32>
    %128 = math.exp %127 : vector<8x96xf32>
    %cst_33 = arith.constant 1.000000e+00 : f32
    %129 = vector.broadcast %cst_33 : f32 to vector<8x96xf32>
    %130 = arith.addf %129, %128 : vector<8x96xf32>
    %131 = arith.divf %129, %130 : vector<8x96xf32>
    %132 = vector.extract_strided_slice %121 {offsets = [0, 96], sizes = [8, 32], strides = [1, 1]} : vector<8x128xf32> to vector<8x32xf32>
    %133 = math.tanh %132 : vector<8x32xf32>
    %134 = vector.extract_strided_slice %131 {offsets = [0, 0], sizes = [8, 32], strides = [1, 1]} : vector<8x96xf32> to vector<8x32xf32>
    %135 = vector.extract_strided_slice %131 {offsets = [0, 32], sizes = [8, 32], strides = [1, 1]} : vector<8x96xf32> to vector<8x32xf32>
    %136 = vector.extract_strided_slice %131 {offsets = [0, 64], sizes = [8, 32], strides = [1, 1]} : vector<8x96xf32> to vector<8x32xf32>
    %137 = arith.mulf %135, %88 : vector<8x32xf32>
    %138 = arith.mulf %134, %133 : vector<8x32xf32>
    %139 = arith.addf %137, %138 : vector<8x32xf32>
    %140 = math.tanh %139 : vector<8x32xf32>
    %141 = arith.mulf %136, %140 : vector<8x32xf32>
    %142 = vector.extract_strided_slice %125 {offsets = [0, 0], sizes = [8, 96], strides = [1, 1]} : vector<8x128xf32> to vector<8x96xf32>
    %143 = arith.negf %142 : vector<8x96xf32>
    %144 = math.exp %143 : vector<8x96xf32>
    %cst_34 = arith.constant 1.000000e+00 : f32
    %145 = vector.broadcast %cst_34 : f32 to vector<8x96xf32>
    %146 = arith.addf %145, %144 : vector<8x96xf32>
    %147 = arith.divf %145, %146 : vector<8x96xf32>
    %148 = vector.extract_strided_slice %125 {offsets = [0, 96], sizes = [8, 32], strides = [1, 1]} : vector<8x128xf32> to vector<8x32xf32>
    %149 = math.tanh %148 : vector<8x32xf32>
    %150 = vector.extract_strided_slice %147 {offsets = [0, 0], sizes = [8, 32], strides = [1, 1]} : vector<8x96xf32> to vector<8x32xf32>
    %151 = vector.extract_strided_slice %147 {offsets = [0, 32], sizes = [8, 32], strides = [1, 1]} : vector<8x96xf32> to vector<8x32xf32>
    %152 = vector.extract_strided_slice %147 {offsets = [0, 64], sizes = [8, 32], strides = [1, 1]} : vector<8x96xf32> to vector<8x32xf32>
    %153 = arith.mulf %151, %104 : vector<8x32xf32>
    %154 = arith.mulf %150, %149 : vector<8x32xf32>
    %155 = arith.addf %153, %154 : vector<8x32xf32>
    %156 = math.tanh %155 : vector<8x32xf32>
    %157 = arith.mulf %152, %156 : vector<8x32xf32>
    %158 = arith.index_cast %113 : i32 to index
    %c0_35 = arith.constant 0 : index
    %159 = vector.load %arg15[%158, %c0_35] : memref<64x64xf32, #tpu.memory_space<vmem>>, vector<8x32xf32>
    tpu.vector_store %arg15[%158, %c0_35], %141 {strides = array<i32>} : memref<64x64xf32, #tpu.memory_space<vmem>>, vector<8x32xf32>,
    %160 = arith.index_cast %116 : i32 to index
    %c32_36 = arith.constant 32 : index
    %161 = vector.load %arg15[%160, %c32_36] : memref<64x64xf32, #tpu.memory_space<vmem>>, vector<8x32xf32>
    tpu.vector_store %arg15[%160, %c32_36], %157 {strides = array<i32>} : memref<64x64xf32, #tpu.memory_space<vmem>>, vector<8x32xf32>,
    %162 = tpu.concatenate %141, %157 in 1 : vector<8x32xf32>, vector<8x32xf32> -> vector<8x64xf32>
    %c3_i32 = arith.constant 3 : i32
    %c8_i32_37 = arith.constant 8 : i32
    %163 = arith.muli %c3_i32, %c8_i32_37 : i32
    %164 = tpu.assume_multiple %163, 8 : i32
    %c7_i32_38 = arith.constant 7 : i32
    %165 = arith.subi %c7_i32_38, %c3_i32 : i32
    %c8_i32_39 = arith.constant 8 : i32
    %166 = arith.muli %165, %c8_i32_39 : i32
    %167 = tpu.assume_multiple %166, 8 : i32
    %cst_40 = arith.constant dense<0.000000e+00> : vector<8x256xf32>
    %168 = tpu.matmul %162, %8, %cst_40 {dimension_numbers = #tpu.dot_dimension_numbers<[1], [0], [0], [1], [0, 0, 1, 1], [], []>} : vector<8x64xf32>, vector<64x256xf32>, vector<8x256xf32> -> vector<8x256xf32>
    %169 = vector.extract_strided_slice %168 {offsets = [0, 0], sizes = [8, 128], strides = [1, 1]} : vector<8x256xf32> to vector<8x128xf32>
    %170 = arith.index_cast %164 : i32 to index
    %c0_41 = arith.constant 0 : index
    %171 = vector.load %arg14[%170, %c0_41] : memref<64x256xf32, #tpu.memory_space<vmem>>, vector<8x128xf32>
    %172 = arith.addf %169, %171 : vector<8x128xf32>
    %173 = vector.extract_strided_slice %168 {offsets = [0, 128], sizes = [8, 128], strides = [1, 1]} : vector<8x256xf32> to vector<8x128xf32>
    %174 = arith.index_cast %167 : i32 to index
    %c128_42 = arith.constant 128 : index
    %175 = vector.load %arg14[%174, %c128_42] : memref<64x256xf32, #tpu.memory_space<vmem>>, vector<8x128xf32>
    %176 = arith.addf %173, %175 : vector<8x128xf32>
    %177 = vector.extract_strided_slice %172 {offsets = [0, 0], sizes = [8, 96], strides = [1, 1]} : vector<8x128xf32> to vector<8x96xf32>
    %178 = arith.negf %177 : vector<8x96xf32>
    %179 = math.exp %178 : vector<8x96xf32>
    %cst_43 = arith.constant 1.000000e+00 : f32
    %180 = vector.broadcast %cst_43 : f32 to vector<8x96xf32>
    %181 = arith.addf %180, %179 : vector<8x96xf32>
    %182 = arith.divf %180, %181 : vector<8x96xf32>
    %183 = vector.extract_strided_slice %172 {offsets = [0, 96], sizes = [8, 32], strides = [1, 1]} : vector<8x128xf32> to vector<8x32xf32>
    %184 = math.tanh %183 : vector<8x32xf32>
    %185 = vector.extract_strided_slice %182 {offsets = [0, 0], sizes = [8, 32], strides = [1, 1]} : vector<8x96xf32> to vector<8x32xf32>
    %186 = vector.extract_strided_slice %182 {offsets = [0, 32], sizes = [8, 32], strides = [1, 1]} : vector<8x96xf32> to vector<8x32xf32>
    %187 = vector.extract_strided_slice %182 {offsets = [0, 64], sizes = [8, 32], strides = [1, 1]} : vector<8x96xf32> to vector<8x32xf32>
    %188 = arith.mulf %186, %139 : vector<8x32xf32>
    %189 = arith.mulf %185, %184 : vector<8x32xf32>
    %190 = arith.addf %188, %189 : vector<8x32xf32>
    %191 = math.tanh %190 : vector<8x32xf32>
    %192 = arith.mulf %187, %191 : vector<8x32xf32>
    %193 = vector.extract_strided_slice %176 {offsets = [0, 0], sizes = [8, 96], strides = [1, 1]} : vector<8x128xf32> to vector<8x96xf32>
    %194 = arith.negf %193 : vector<8x96xf32>
    %195 = math.exp %194 : vector<8x96xf32>
    %cst_44 = arith.constant 1.000000e+00 : f32
    %196 = vector.broadcast %cst_44 : f32 to vector<8x96xf32>
    %197 = arith.addf %196, %195 : vector<8x96xf32>
    %198 = arith.divf %196, %197 : vector<8x96xf32>
    %199 = vector.extract_strided_slice %176 {offsets = [0, 96], sizes = [8, 32], strides = [1, 1]} : vector<8x128xf32> to vector<8x32xf32>
    %200 = math.tanh %199 : vector<8x32xf32>
    %201 = vector.extract_strided_slice %198 {offsets = [0, 0], sizes = [8, 32], strides = [1, 1]} : vector<8x96xf32> to vector<8x32xf32>
    %202 = vector.extract_strided_slice %198 {offsets = [0, 32], sizes = [8, 32], strides = [1, 1]} : vector<8x96xf32> to vector<8x32xf32>
    %203 = vector.extract_strided_slice %198 {offsets = [0, 64], sizes = [8, 32], strides = [1, 1]} : vector<8x96xf32> to vector<8x32xf32>
    %204 = arith.mulf %202, %155 : vector<8x32xf32>
    %205 = arith.mulf %201, %200 : vector<8x32xf32>
    %206 = arith.addf %204, %205 : vector<8x32xf32>
    %207 = math.tanh %206 : vector<8x32xf32>
    %208 = arith.mulf %203, %207 : vector<8x32xf32>
    %209 = arith.index_cast %164 : i32 to index
    %c0_45 = arith.constant 0 : index
    %210 = vector.load %arg15[%209, %c0_45] : memref<64x64xf32, #tpu.memory_space<vmem>>, vector<8x32xf32>
    tpu.vector_store %arg15[%209, %c0_45], %192 {strides = array<i32>} : memref<64x64xf32, #tpu.memory_space<vmem>>, vector<8x32xf32>,
    %211 = arith.index_cast %167 : i32 to index
    %c32_46 = arith.constant 32 : index
    %212 = vector.load %arg15[%211, %c32_46] : memref<64x64xf32, #tpu.memory_space<vmem>>, vector<8x32xf32>
    tpu.vector_store %arg15[%211, %c32_46], %208 {strides = array<i32>} : memref<64x64xf32, #tpu.memory_space<vmem>>, vector<8x32xf32>,
    %213 = tpu.concatenate %192, %208 in 1 : vector<8x32xf32>, vector<8x32xf32> -> vector<8x64xf32>
    %c4_i32 = arith.constant 4 : i32
    %c8_i32_47 = arith.constant 8 : i32
    %214 = arith.muli %c4_i32, %c8_i32_47 : i32
    %215 = tpu.assume_multiple %214, 8 : i32
    %c7_i32_48 = arith.constant 7 : i32
    %216 = arith.subi %c7_i32_48, %c4_i32 : i32
    %c8_i32_49 = arith.constant 8 : i32
    %217 = arith.muli %216, %c8_i32_49 : i32
    %218 = tpu.assume_multiple %217, 8 : i32
    %cst_50 = arith.constant dense<0.000000e+00> : vector<8x256xf32>
    %219 = tpu.matmul %213, %8, %cst_50 {dimension_numbers = #tpu.dot_dimension_numbers<[1], [0], [0], [1], [0, 0, 1, 1], [], []>} : vector<8x64xf32>, vector<64x256xf32>, vector<8x256xf32> -> vector<8x256xf32>
    %220 = vector.extract_strided_slice %219 {offsets = [0, 0], sizes = [8, 128], strides = [1, 1]} : vector<8x256xf32> to vector<8x128xf32>
    %221 = arith.index_cast %215 : i32 to index
    %c0_51 = arith.constant 0 : index
    %222 = vector.load %arg14[%221, %c0_51] : memref<64x256xf32, #tpu.memory_space<vmem>>, vector<8x128xf32>
    %223 = arith.addf %220, %222 : vector<8x128xf32>
    %224 = vector.extract_strided_slice %219 {offsets = [0, 128], sizes = [8, 128], strides = [1, 1]} : vector<8x256xf32> to vector<8x128xf32>
    %225 = arith.index_cast %218 : i32 to index
    %c128_52 = arith.constant 128 : index
    %226 = vector.load %arg14[%225, %c128_52] : memref<64x256xf32, #tpu.memory_space<vmem>>, vector<8x128xf32>
    %227 = arith.addf %224, %226 : vector<8x128xf32>
    %228 = vector.extract_strided_slice %223 {offsets = [0, 0], sizes = [8, 96], strides = [1, 1]} : vector<8x128xf32> to vector<8x96xf32>
    %229 = arith.negf %228 : vector<8x96xf32>
    %230 = math.exp %229 : vector<8x96xf32>
    %cst_53 = arith.constant 1.000000e+00 : f32
    %231 = vector.broadcast %cst_53 : f32 to vector<8x96xf32>
    %232 = arith.addf %231, %230 : vector<8x96xf32>
    %233 = arith.divf %231, %232 : vector<8x96xf32>
    %234 = vector.extract_strided_slice %223 {offsets = [0, 96], sizes = [8, 32], strides = [1, 1]} : vector<8x128xf32> to vector<8x32xf32>
    %235 = math.tanh %234 : vector<8x32xf32>
    %236 = vector.extract_strided_slice %233 {offsets = [0, 0], sizes = [8, 32], strides = [1, 1]} : vector<8x96xf32> to vector<8x32xf32>
    %237 = vector.extract_strided_slice %233 {offsets = [0, 32], sizes = [8, 32], strides = [1, 1]} : vector<8x96xf32> to vector<8x32xf32>
    %238 = vector.extract_strided_slice %233 {offsets = [0, 64], sizes = [8, 32], strides = [1, 1]} : vector<8x96xf32> to vector<8x32xf32>
    %239 = arith.mulf %237, %190 : vector<8x32xf32>
    %240 = arith.mulf %236, %235 : vector<8x32xf32>
    %241 = arith.addf %239, %240 : vector<8x32xf32>
    %242 = math.tanh %241 : vector<8x32xf32>
    %243 = arith.mulf %238, %242 : vector<8x32xf32>
    %244 = vector.extract_strided_slice %227 {offsets = [0, 0], sizes = [8, 96], strides = [1, 1]} : vector<8x128xf32> to vector<8x96xf32>
    %245 = arith.negf %244 : vector<8x96xf32>
    %246 = math.exp %245 : vector<8x96xf32>
    %cst_54 = arith.constant 1.000000e+00 : f32
    %247 = vector.broadcast %cst_54 : f32 to vector<8x96xf32>
    %248 = arith.addf %247, %246 : vector<8x96xf32>
    %249 = arith.divf %247, %248 : vector<8x96xf32>
    %250 = vector.extract_strided_slice %227 {offsets = [0, 96], sizes = [8, 32], strides = [1, 1]} : vector<8x128xf32> to vector<8x32xf32>
    %251 = math.tanh %250 : vector<8x32xf32>
    %252 = vector.extract_strided_slice %249 {offsets = [0, 0], sizes = [8, 32], strides = [1, 1]} : vector<8x96xf32> to vector<8x32xf32>
    %253 = vector.extract_strided_slice %249 {offsets = [0, 32], sizes = [8, 32], strides = [1, 1]} : vector<8x96xf32> to vector<8x32xf32>
    %254 = vector.extract_strided_slice %249 {offsets = [0, 64], sizes = [8, 32], strides = [1, 1]} : vector<8x96xf32> to vector<8x32xf32>
    %255 = arith.mulf %253, %206 : vector<8x32xf32>
    %256 = arith.mulf %252, %251 : vector<8x32xf32>
    %257 = arith.addf %255, %256 : vector<8x32xf32>
    %258 = math.tanh %257 : vector<8x32xf32>
    %259 = arith.mulf %254, %258 : vector<8x32xf32>
    %260 = arith.index_cast %215 : i32 to index
    %c0_55 = arith.constant 0 : index
    %261 = vector.load %arg15[%260, %c0_55] : memref<64x64xf32, #tpu.memory_space<vmem>>, vector<8x32xf32>
    tpu.vector_store %arg15[%260, %c0_55], %243 {strides = array<i32>} : memref<64x64xf32, #tpu.memory_space<vmem>>, vector<8x32xf32>,
    %262 = arith.index_cast %218 : i32 to index
    %c32_56 = arith.constant 32 : index
    %263 = vector.load %arg15[%262, %c32_56] : memref<64x64xf32, #tpu.memory_space<vmem>>, vector<8x32xf32>
    tpu.vector_store %arg15[%262, %c32_56], %259 {strides = array<i32>} : memref<64x64xf32, #tpu.memory_space<vmem>>, vector<8x32xf32>,
    %264 = tpu.concatenate %243, %259 in 1 : vector<8x32xf32>, vector<8x32xf32> -> vector<8x64xf32>
    %c5_i32 = arith.constant 5 : i32
    %c8_i32_57 = arith.constant 8 : i32
    %265 = arith.muli %c5_i32, %c8_i32_57 : i32
    %266 = tpu.assume_multiple %265, 8 : i32
    %c7_i32_58 = arith.constant 7 : i32
    %267 = arith.subi %c7_i32_58, %c5_i32 : i32
    %c8_i32_59 = arith.constant 8 : i32
    %268 = arith.muli %267, %c8_i32_59 : i32
    %269 = tpu.assume_multiple %268, 8 : i32
    %cst_60 = arith.constant dense<0.000000e+00> : vector<8x256xf32>
    %270 = tpu.matmul %264, %8, %cst_60 {dimension_numbers = #tpu.dot_dimension_numbers<[1], [0], [0], [1], [0, 0, 1, 1], [], []>} : vector<8x64xf32>, vector<64x256xf32>, vector<8x256xf32> -> vector<8x256xf32>
    %271 = vector.extract_strided_slice %270 {offsets = [0, 0], sizes = [8, 128], strides = [1, 1]} : vector<8x256xf32> to vector<8x128xf32>
    %272 = arith.index_cast %266 : i32 to index
    %c0_61 = arith.constant 0 : index
    %273 = vector.load %arg14[%272, %c0_61] : memref<64x256xf32, #tpu.memory_space<vmem>>, vector<8x128xf32>
    %274 = arith.addf %271, %273 : vector<8x128xf32>
    %275 = vector.extract_strided_slice %270 {offsets = [0, 128], sizes = [8, 128], strides = [1, 1]} : vector<8x256xf32> to vector<8x128xf32>
    %276 = arith.index_cast %269 : i32 to index
    %c128_62 = arith.constant 128 : index
    %277 = vector.load %arg14[%276, %c128_62] : memref<64x256xf32, #tpu.memory_space<vmem>>, vector<8x128xf32>
    %278 = arith.addf %275, %277 : vector<8x128xf32>
    %279 = vector.extract_strided_slice %274 {offsets = [0, 0], sizes = [8, 96], strides = [1, 1]} : vector<8x128xf32> to vector<8x96xf32>
    %280 = arith.negf %279 : vector<8x96xf32>
    %281 = math.exp %280 : vector<8x96xf32>
    %cst_63 = arith.constant 1.000000e+00 : f32
    %282 = vector.broadcast %cst_63 : f32 to vector<8x96xf32>
    %283 = arith.addf %282, %281 : vector<8x96xf32>
    %284 = arith.divf %282, %283 : vector<8x96xf32>
    %285 = vector.extract_strided_slice %274 {offsets = [0, 96], sizes = [8, 32], strides = [1, 1]} : vector<8x128xf32> to vector<8x32xf32>
    %286 = math.tanh %285 : vector<8x32xf32>
    %287 = vector.extract_strided_slice %284 {offsets = [0, 0], sizes = [8, 32], strides = [1, 1]} : vector<8x96xf32> to vector<8x32xf32>
    %288 = vector.extract_strided_slice %284 {offsets = [0, 32], sizes = [8, 32], strides = [1, 1]} : vector<8x96xf32> to vector<8x32xf32>
    %289 = vector.extract_strided_slice %284 {offsets = [0, 64], sizes = [8, 32], strides = [1, 1]} : vector<8x96xf32> to vector<8x32xf32>
    %290 = arith.mulf %288, %241 : vector<8x32xf32>
    %291 = arith.mulf %287, %286 : vector<8x32xf32>
    %292 = arith.addf %290, %291 : vector<8x32xf32>
    %293 = math.tanh %292 : vector<8x32xf32>
    %294 = arith.mulf %289, %293 : vector<8x32xf32>
    %295 = vector.extract_strided_slice %278 {offsets = [0, 0], sizes = [8, 96], strides = [1, 1]} : vector<8x128xf32> to vector<8x96xf32>
    %296 = arith.negf %295 : vector<8x96xf32>
    %297 = math.exp %296 : vector<8x96xf32>
    %cst_64 = arith.constant 1.000000e+00 : f32
    %298 = vector.broadcast %cst_64 : f32 to vector<8x96xf32>
    %299 = arith.addf %298, %297 : vector<8x96xf32>
    %300 = arith.divf %298, %299 : vector<8x96xf32>
    %301 = vector.extract_strided_slice %278 {offsets = [0, 96], sizes = [8, 32], strides = [1, 1]} : vector<8x128xf32> to vector<8x32xf32>
    %302 = math.tanh %301 : vector<8x32xf32>
    %303 = vector.extract_strided_slice %300 {offsets = [0, 0], sizes = [8, 32], strides = [1, 1]} : vector<8x96xf32> to vector<8x32xf32>
    %304 = vector.extract_strided_slice %300 {offsets = [0, 32], sizes = [8, 32], strides = [1, 1]} : vector<8x96xf32> to vector<8x32xf32>
    %305 = vector.extract_strided_slice %300 {offsets = [0, 64], sizes = [8, 32], strides = [1, 1]} : vector<8x96xf32> to vector<8x32xf32>
    %306 = arith.mulf %304, %257 : vector<8x32xf32>
    %307 = arith.mulf %303, %302 : vector<8x32xf32>
    %308 = arith.addf %306, %307 : vector<8x32xf32>
    %309 = math.tanh %308 : vector<8x32xf32>
    %310 = arith.mulf %305, %309 : vector<8x32xf32>
    %311 = arith.index_cast %266 : i32 to index
    %c0_65 = arith.constant 0 : index
    %312 = vector.load %arg15[%311, %c0_65] : memref<64x64xf32, #tpu.memory_space<vmem>>, vector<8x32xf32>
    tpu.vector_store %arg15[%311, %c0_65], %294 {strides = array<i32>} : memref<64x64xf32, #tpu.memory_space<vmem>>, vector<8x32xf32>,
    %313 = arith.index_cast %269 : i32 to index
    %c32_66 = arith.constant 32 : index
    %314 = vector.load %arg15[%313, %c32_66] : memref<64x64xf32, #tpu.memory_space<vmem>>, vector<8x32xf32>
    tpu.vector_store %arg15[%313, %c32_66], %310 {strides = array<i32>} : memref<64x64xf32, #tpu.memory_space<vmem>>, vector<8x32xf32>,
    %315 = tpu.concatenate %294, %310 in 1 : vector<8x32xf32>, vector<8x32xf32> -> vector<8x64xf32>
    %c6_i32 = arith.constant 6 : i32
    %c8_i32_67 = arith.constant 8 : i32
    %316 = arith.muli %c6_i32, %c8_i32_67 : i32
    %317 = tpu.assume_multiple %316, 8 : i32
    %c7_i32_68 = arith.constant 7 : i32
    %318 = arith.subi %c7_i32_68, %c6_i32 : i32
    %c8_i32_69 = arith.constant 8 : i32
    %319 = arith.muli %318, %c8_i32_69 : i32
    %320 = tpu.assume_multiple %319, 8 : i32
    %cst_70 = arith.constant dense<0.000000e+00> : vector<8x256xf32>
    %321 = tpu.matmul %315, %8, %cst_70 {dimension_numbers = #tpu.dot_dimension_numbers<[1], [0], [0], [1], [0, 0, 1, 1], [], []>} : vector<8x64xf32>, vector<64x256xf32>, vector<8x256xf32> -> vector<8x256xf32>
    %322 = vector.extract_strided_slice %321 {offsets = [0, 0], sizes = [8, 128], strides = [1, 1]} : vector<8x256xf32> to vector<8x128xf32>
    %323 = arith.index_cast %317 : i32 to index
    %c0_71 = arith.constant 0 : index
    %324 = vector.load %arg14[%323, %c0_71] : memref<64x256xf32, #tpu.memory_space<vmem>>, vector<8x128xf32>
    %325 = arith.addf %322, %324 : vector<8x128xf32>
    %326 = vector.extract_strided_slice %321 {offsets = [0, 128], sizes = [8, 128], strides = [1, 1]} : vector<8x256xf32> to vector<8x128xf32>
    %327 = arith.index_cast %320 : i32 to index
    %c128_72 = arith.constant 128 : index
    %328 = vector.load %arg14[%327, %c128_72] : memref<64x256xf32, #tpu.memory_space<vmem>>, vector<8x128xf32>
    %329 = arith.addf %326, %328 : vector<8x128xf32>
    %330 = vector.extract_strided_slice %325 {offsets = [0, 0], sizes = [8, 96], strides = [1, 1]} : vector<8x128xf32> to vector<8x96xf32>
    %331 = arith.negf %330 : vector<8x96xf32>
    %332 = math.exp %331 : vector<8x96xf32>
    %cst_73 = arith.constant 1.000000e+00 : f32
    %333 = vector.broadcast %cst_73 : f32 to vector<8x96xf32>
    %334 = arith.addf %333, %332 : vector<8x96xf32>
    %335 = arith.divf %333, %334 : vector<8x96xf32>
    %336 = vector.extract_strided_slice %325 {offsets = [0, 96], sizes = [8, 32], strides = [1, 1]} : vector<8x128xf32> to vector<8x32xf32>
    %337 = math.tanh %336 : vector<8x32xf32>
    %338 = vector.extract_strided_slice %335 {offsets = [0, 0], sizes = [8, 32], strides = [1, 1]} : vector<8x96xf32> to vector<8x32xf32>
    %339 = vector.extract_strided_slice %335 {offsets = [0, 32], sizes = [8, 32], strides = [1, 1]} : vector<8x96xf32> to vector<8x32xf32>
    %340 = vector.extract_strided_slice %335 {offsets = [0, 64], sizes = [8, 32], strides = [1, 1]} : vector<8x96xf32> to vector<8x32xf32>
    %341 = arith.mulf %339, %292 : vector<8x32xf32>
    %342 = arith.mulf %338, %337 : vector<8x32xf32>
    %343 = arith.addf %341, %342 : vector<8x32xf32>
    %344 = math.tanh %343 : vector<8x32xf32>
    %345 = arith.mulf %340, %344 : vector<8x32xf32>
    %346 = vector.extract_strided_slice %329 {offsets = [0, 0], sizes = [8, 96], strides = [1, 1]} : vector<8x128xf32> to vector<8x96xf32>
    %347 = arith.negf %346 : vector<8x96xf32>
    %348 = math.exp %347 : vector<8x96xf32>
    %cst_74 = arith.constant 1.000000e+00 : f32
    %349 = vector.broadcast %cst_74 : f32 to vector<8x96xf32>
    %350 = arith.addf %349, %348 : vector<8x96xf32>
    %351 = arith.divf %349, %350 : vector<8x96xf32>
    %352 = vector.extract_strided_slice %329 {offsets = [0, 96], sizes = [8, 32], strides = [1, 1]} : vector<8x128xf32> to vector<8x32xf32>
    %353 = math.tanh %352 : vector<8x32xf32>
    %354 = vector.extract_strided_slice %351 {offsets = [0, 0], sizes = [8, 32], strides = [1, 1]} : vector<8x96xf32> to vector<8x32xf32>
    %355 = vector.extract_strided_slice %351 {offsets = [0, 32], sizes = [8, 32], strides = [1, 1]} : vector<8x96xf32> to vector<8x32xf32>
    %356 = vector.extract_strided_slice %351 {offsets = [0, 64], sizes = [8, 32], strides = [1, 1]} : vector<8x96xf32> to vector<8x32xf32>
    %357 = arith.mulf %355, %308 : vector<8x32xf32>
    %358 = arith.mulf %354, %353 : vector<8x32xf32>
    %359 = arith.addf %357, %358 : vector<8x32xf32>
    %360 = math.tanh %359 : vector<8x32xf32>
    %361 = arith.mulf %356, %360 : vector<8x32xf32>
    %362 = arith.index_cast %317 : i32 to index
    %c0_75 = arith.constant 0 : index
    %363 = vector.load %arg15[%362, %c0_75] : memref<64x64xf32, #tpu.memory_space<vmem>>, vector<8x32xf32>
    tpu.vector_store %arg15[%362, %c0_75], %345 {strides = array<i32>} : memref<64x64xf32, #tpu.memory_space<vmem>>, vector<8x32xf32>,
    %364 = arith.index_cast %320 : i32 to index
    %c32_76 = arith.constant 32 : index
    %365 = vector.load %arg15[%364, %c32_76] : memref<64x64xf32, #tpu.memory_space<vmem>>, vector<8x32xf32>
    tpu.vector_store %arg15[%364, %c32_76], %361 {strides = array<i32>} : memref<64x64xf32, #tpu.memory_space<vmem>>, vector<8x32xf32>,
    %366 = tpu.concatenate %345, %361 in 1 : vector<8x32xf32>, vector<8x32xf32> -> vector<8x64xf32>
    %c7_i32_77 = arith.constant 7 : i32
    %c8_i32_78 = arith.constant 8 : i32
    %367 = arith.muli %c7_i32_77, %c8_i32_78 : i32
    %368 = tpu.assume_multiple %367, 8 : i32
    %c7_i32_79 = arith.constant 7 : i32
    %369 = arith.subi %c7_i32_79, %c7_i32_77 : i32
    %c8_i32_80 = arith.constant 8 : i32
    %370 = arith.muli %369, %c8_i32_80 : i32
    %371 = tpu.assume_multiple %370, 8 : i32
    %cst_81 = arith.constant dense<0.000000e+00> : vector<8x256xf32>
    %372 = tpu.matmul %366, %8, %cst_81 {dimension_numbers = #tpu.dot_dimension_numbers<[1], [0], [0], [1], [0, 0, 1, 1], [], []>} : vector<8x64xf32>, vector<64x256xf32>, vector<8x256xf32> -> vector<8x256xf32>
    %373 = vector.extract_strided_slice %372 {offsets = [0, 0], sizes = [8, 128], strides = [1, 1]} : vector<8x256xf32> to vector<8x128xf32>
    %374 = arith.index_cast %368 : i32 to index
    %c0_82 = arith.constant 0 : index
    %375 = vector.load %arg14[%374, %c0_82] : memref<64x256xf32, #tpu.memory_space<vmem>>, vector<8x128xf32>
    %376 = arith.addf %373, %375 : vector<8x128xf32>
    %377 = vector.extract_strided_slice %372 {offsets = [0, 128], sizes = [8, 128], strides = [1, 1]} : vector<8x256xf32> to vector<8x128xf32>
    %378 = arith.index_cast %371 : i32 to index
    %c128_83 = arith.constant 128 : index
    %379 = vector.load %arg14[%378, %c128_83] : memref<64x256xf32, #tpu.memory_space<vmem>>, vector<8x128xf32>
    %380 = arith.addf %377, %379 : vector<8x128xf32>
    %381 = vector.extract_strided_slice %376 {offsets = [0, 0], sizes = [8, 96], strides = [1, 1]} : vector<8x128xf32> to vector<8x96xf32>
    %382 = arith.negf %381 : vector<8x96xf32>
    %383 = math.exp %382 : vector<8x96xf32>
    %cst_84 = arith.constant 1.000000e+00 : f32
    %384 = vector.broadcast %cst_84 : f32 to vector<8x96xf32>
    %385 = arith.addf %384, %383 : vector<8x96xf32>
    %386 = arith.divf %384, %385 : vector<8x96xf32>
    %387 = vector.extract_strided_slice %376 {offsets = [0, 96], sizes = [8, 32], strides = [1, 1]} : vector<8x128xf32> to vector<8x32xf32>
    %388 = math.tanh %387 : vector<8x32xf32>
    %389 = vector.extract_strided_slice %386 {offsets = [0, 0], sizes = [8, 32], strides = [1, 1]} : vector<8x96xf32> to vector<8x32xf32>
    %390 = vector.extract_strided_slice %386 {offsets = [0, 32], sizes = [8, 32], strides = [1, 1]} : vector<8x96xf32> to vector<8x32xf32>
    %391 = vector.extract_strided_slice %386 {offsets = [0, 64], sizes = [8, 32], strides = [1, 1]} : vector<8x96xf32> to vector<8x32xf32>
    %392 = arith.mulf %390, %343 : vector<8x32xf32>
    %393 = arith.mulf %389, %388 : vector<8x32xf32>
    %394 = arith.addf %392, %393 : vector<8x32xf32>
    %395 = math.tanh %394 : vector<8x32xf32>
    %396 = arith.mulf %391, %395 : vector<8x32xf32>
    %397 = vector.extract_strided_slice %380 {offsets = [0, 0], sizes = [8, 96], strides = [1, 1]} : vector<8x128xf32> to vector<8x96xf32>
    %398 = arith.negf %397 : vector<8x96xf32>
    %399 = math.exp %398 : vector<8x96xf32>
    %cst_85 = arith.constant 1.000000e+00 : f32
    %400 = vector.broadcast %cst_85 : f32 to vector<8x96xf32>
    %401 = arith.addf %400, %399 : vector<8x96xf32>
    %402 = arith.divf %400, %401 : vector<8x96xf32>
    %403 = vector.extract_strided_slice %380 {offsets = [0, 96], sizes = [8, 32], strides = [1, 1]} : vector<8x128xf32> to vector<8x32xf32>
    %404 = math.tanh %403 : vector<8x32xf32>
    %405 = vector.extract_strided_slice %402 {offsets = [0, 0], sizes = [8, 32], strides = [1, 1]} : vector<8x96xf32> to vector<8x32xf32>
    %406 = vector.extract_strided_slice %402 {offsets = [0, 32], sizes = [8, 32], strides = [1, 1]} : vector<8x96xf32> to vector<8x32xf32>
    %407 = vector.extract_strided_slice %402 {offsets = [0, 64], sizes = [8, 32], strides = [1, 1]} : vector<8x96xf32> to vector<8x32xf32>
    %408 = arith.mulf %406, %359 : vector<8x32xf32>
    %409 = arith.mulf %405, %404 : vector<8x32xf32>
    %410 = arith.addf %408, %409 : vector<8x32xf32>
    %411 = math.tanh %410 : vector<8x32xf32>
    %412 = arith.mulf %407, %411 : vector<8x32xf32>
    %413 = arith.index_cast %368 : i32 to index
    %c0_86 = arith.constant 0 : index
    %414 = vector.load %arg15[%413, %c0_86] : memref<64x64xf32, #tpu.memory_space<vmem>>, vector<8x32xf32>
    tpu.vector_store %arg15[%413, %c0_86], %396 {strides = array<i32>} : memref<64x64xf32, #tpu.memory_space<vmem>>, vector<8x32xf32>,
    %415 = arith.index_cast %371 : i32 to index
    %c32_87 = arith.constant 32 : index
    %416 = vector.load %arg15[%415, %c32_87] : memref<64x64xf32, #tpu.memory_space<vmem>>, vector<8x32xf32>
    tpu.vector_store %arg15[%415, %c32_87], %412 {strides = array<i32>} : memref<64x64xf32, #tpu.memory_space<vmem>>, vector<8x32xf32>,
    %417 = tpu.concatenate %396, %412 in 1 : vector<8x32xf32>, vector<8x32xf32> -> vector<8x64xf32>
    %c8_i32_88 = arith.constant 8 : i32
    %c0_89 = arith.constant 0 : index
    %c0_90 = arith.constant 0 : index
    %418 = vector.load %arg15[%c0_89, %c0_90] : memref<64x64xf32, #tpu.memory_space<vmem>>, vector<64x64xf32>
    %c0_91 = arith.constant 0 : index
    %c0_92 = arith.constant 0 : index
    %419 = vector.load %arg5[%c0_91, %c0_92] : memref<64x128xf32, #tpu.memory_space<vmem>>, vector<64x128xf32>
    %cst_93 = arith.constant dense<0.000000e+00> : vector<64x128xf32>
    %420 = tpu.matmul %418, %419, %cst_93 {dimension_numbers = #tpu.dot_dimension_numbers<[1], [0], [0], [1], [0, 0, 1, 1], [], []>} : vector<64x64xf32>, vector<64x128xf32>, vector<64x128xf32> -> vector<64x128xf32>
    %c0_94 = arith.constant 0 : index
    %c0_95 = arith.constant 0 : index
    %421 = vector.load %arg7[%c0_94, %c0_95] : memref<1x128xf32, #tpu.memory_space<vmem>>, vector<1x128xf32>
    %422 = vector.broadcast %421 : vector<1x128xf32> to vector<64x128xf32>
    %423 = arith.addf %420, %422 : vector<64x128xf32>
    %c0_96 = arith.constant 0 : index
    %c0_97 = arith.constant 0 : index
    %424 = vector.load %arg14[%c0_96, %c0_97] : memref<64x256xf32, #tpu.memory_space<vmem>>, vector<64x128xf32>
    tpu.vector_store %arg14[%c0_96, %c0_97], %423 {strides = array<i32>} : memref<64x256xf32, #tpu.memory_space<vmem>>, vector<64x128xf32>,
    %c0_98 = arith.constant 0 : index
    %c0_99 = arith.constant 0 : index
    %425 = vector.load %arg6[%c0_98, %c0_99] : memref<32x128xf32, #tpu.memory_space<vmem>>, vector<32x128xf32>
    %c0_i32_100 = arith.constant 0 : i32
    %c8_i32_101 = arith.constant 8 : i32
    %426 = arith.muli %c0_i32_100, %c8_i32_101 : i32
    %427 = tpu.assume_multiple %426, 8 : i32
    %cst_102 = arith.constant dense<0.000000e+00> : vector<8x128xf32>
    %428 = tpu.matmul %0, %425, %cst_102 {dimension_numbers = #tpu.dot_dimension_numbers<[1], [0], [0], [1], [0, 0, 1, 1], [], []>} : vector<8x32xf32>, vector<32x128xf32>, vector<8x128xf32> -> vector<8x128xf32>
    %429 = arith.index_cast %427 : i32 to index
    %c0_103 = arith.constant 0 : index
    %430 = vector.load %arg14[%429, %c0_103] : memref<64x256xf32, #tpu.memory_space<vmem>>, vector<8x128xf32>
    %431 = arith.addf %428, %430 : vector<8x128xf32>
    %432 = vector.extract_strided_slice %431 {offsets = [0, 0], sizes = [8, 96], strides = [1, 1]} : vector<8x128xf32> to vector<8x96xf32>
    %433 = arith.negf %432 : vector<8x96xf32>
    %434 = math.exp %433 : vector<8x96xf32>
    %cst_104 = arith.constant 1.000000e+00 : f32
    %435 = vector.broadcast %cst_104 : f32 to vector<8x96xf32>
    %436 = arith.addf %435, %434 : vector<8x96xf32>
    %437 = arith.divf %435, %436 : vector<8x96xf32>
    %438 = vector.extract_strided_slice %431 {offsets = [0, 96], sizes = [8, 32], strides = [1, 1]} : vector<8x128xf32> to vector<8x32xf32>
    %439 = math.tanh %438 : vector<8x32xf32>
    %440 = vector.extract_strided_slice %437 {offsets = [0, 0], sizes = [8, 32], strides = [1, 1]} : vector<8x96xf32> to vector<8x32xf32>
    %441 = vector.extract_strided_slice %437 {offsets = [0, 32], sizes = [8, 32], strides = [1, 1]} : vector<8x96xf32> to vector<8x32xf32>
    %442 = vector.extract_strided_slice %437 {offsets = [0, 64], sizes = [8, 32], strides = [1, 1]} : vector<8x96xf32> to vector<8x32xf32>
    %443 = arith.mulf %441, %0 : vector<8x32xf32>
    %444 = arith.mulf %440, %439 : vector<8x32xf32>
    %445 = arith.addf %443, %444 : vector<8x32xf32>
    %446 = math.tanh %445 : vector<8x32xf32>
    %447 = arith.mulf %442, %446 : vector<8x32xf32>
    %c1_i32_105 = arith.constant 1 : i32
    %c8_i32_106 = arith.constant 8 : i32
    %448 = arith.muli %c1_i32_105, %c8_i32_106 : i32
    %449 = tpu.assume_multiple %448, 8 : i32
    %cst_107 = arith.constant dense<0.000000e+00> : vector<8x128xf32>
    %450 = tpu.matmul %447, %425, %cst_107 {dimension_numbers = #tpu.dot_dimension_numbers<[1], [0], [0], [1], [0, 0, 1, 1], [], []>} : vector<8x32xf32>, vector<32x128xf32>, vector<8x128xf32> -> vector<8x128xf32>
    %451 = arith.index_cast %449 : i32 to index
    %c0_108 = arith.constant 0 : index
    %452 = vector.load %arg14[%451, %c0_108] : memref<64x256xf32, #tpu.memory_space<vmem>>, vector<8x128xf32>
    %453 = arith.addf %450, %452 : vector<8x128xf32>
    %454 = vector.extract_strided_slice %453 {offsets = [0, 0], sizes = [8, 96], strides = [1, 1]} : vector<8x128xf32> to vector<8x96xf32>
    %455 = arith.negf %454 : vector<8x96xf32>
    %456 = math.exp %455 : vector<8x96xf32>
    %cst_109 = arith.constant 1.000000e+00 : f32
    %457 = vector.broadcast %cst_109 : f32 to vector<8x96xf32>
    %458 = arith.addf %457, %456 : vector<8x96xf32>
    %459 = arith.divf %457, %458 : vector<8x96xf32>
    %460 = vector.extract_strided_slice %453 {offsets = [0, 96], sizes = [8, 32], strides = [1, 1]} : vector<8x128xf32> to vector<8x32xf32>
    %461 = math.tanh %460 : vector<8x32xf32>
    %462 = vector.extract_strided_slice %459 {offsets = [0, 0], sizes = [8, 32], strides = [1, 1]} : vector<8x96xf32> to vector<8x32xf32>
    %463 = vector.extract_strided_slice %459 {offsets = [0, 32], sizes = [8, 32], strides = [1, 1]} : vector<8x96xf32> to vector<8x32xf32>
    %464 = vector.extract_strided_slice %459 {offsets = [0, 64], sizes = [8, 32], strides = [1, 1]} : vector<8x96xf32> to vector<8x32xf32>
    %465 = arith.mulf %463, %445 : vector<8x32xf32>
    %466 = arith.mulf %462, %461 : vector<8x32xf32>
    %467 = arith.addf %465, %466 : vector<8x32xf32>
    %468 = math.tanh %467 : vector<8x32xf32>
    %469 = arith.mulf %464, %468 : vector<8x32xf32>
    %c2_i32_110 = arith.constant 2 : i32
    %c8_i32_111 = arith.constant 8 : i32
    %470 = arith.muli %c2_i32_110, %c8_i32_111 : i32
    %471 = tpu.assume_multiple %470, 8 : i32
    %cst_112 = arith.constant dense<0.000000e+00> : vector<8x128xf32>
    %472 = tpu.matmul %469, %425, %cst_112 {dimension_numbers = #tpu.dot_dimension_numbers<[1], [0], [0], [1], [0, 0, 1, 1], [], []>} : vector<8x32xf32>, vector<32x128xf32>, vector<8x128xf32> -> vector<8x128xf32>
    %473 = arith.index_cast %471 : i32 to index
    %c0_113 = arith.constant 0 : index
    %474 = vector.load %arg14[%473, %c0_113] : memref<64x256xf32, #tpu.memory_space<vmem>>, vector<8x128xf32>
    %475 = arith.addf %472, %474 : vector<8x128xf32>
    %476 = vector.extract_strided_slice %475 {offsets = [0, 0], sizes = [8, 96], strides = [1, 1]} : vector<8x128xf32> to vector<8x96xf32>
    %477 = arith.negf %476 : vector<8x96xf32>
    %478 = math.exp %477 : vector<8x96xf32>
    %cst_114 = arith.constant 1.000000e+00 : f32
    %479 = vector.broadcast %cst_114 : f32 to vector<8x96xf32>
    %480 = arith.addf %479, %478 : vector<8x96xf32>
    %481 = arith.divf %479, %480 : vector<8x96xf32>
    %482 = vector.extract_strided_slice %475 {offsets = [0, 96], sizes = [8, 32], strides = [1, 1]} : vector<8x128xf32> to vector<8x32xf32>
    %483 = math.tanh %482 : vector<8x32xf32>
    %484 = vector.extract_strided_slice %481 {offsets = [0, 0], sizes = [8, 32], strides = [1, 1]} : vector<8x96xf32> to vector<8x32xf32>
    %485 = vector.extract_strided_slice %481 {offsets = [0, 32], sizes = [8, 32], strides = [1, 1]} : vector<8x96xf32> to vector<8x32xf32>
    %486 = vector.extract_strided_slice %481 {offsets = [0, 64], sizes = [8, 32], strides = [1, 1]} : vector<8x96xf32> to vector<8x32xf32>
    %487 = arith.mulf %485, %467 : vector<8x32xf32>
    %488 = arith.mulf %484, %483 : vector<8x32xf32>
    %489 = arith.addf %487, %488 : vector<8x32xf32>
    %490 = math.tanh %489 : vector<8x32xf32>
    %491 = arith.mulf %486, %490 : vector<8x32xf32>
    %c3_i32_115 = arith.constant 3 : i32
    %c8_i32_116 = arith.constant 8 : i32
    %492 = arith.muli %c3_i32_115, %c8_i32_116 : i32
    %493 = tpu.assume_multiple %492, 8 : i32
    %cst_117 = arith.constant dense<0.000000e+00> : vector<8x128xf32>
    %494 = tpu.matmul %491, %425, %cst_117 {dimension_numbers = #tpu.dot_dimension_numbers<[1], [0], [0], [1], [0, 0, 1, 1], [], []>} : vector<8x32xf32>, vector<32x128xf32>, vector<8x128xf32> -> vector<8x128xf32>
    %495 = arith.index_cast %493 : i32 to index
    %c0_118 = arith.constant 0 : index
    %496 = vector.load %arg14[%495, %c0_118] : memref<64x256xf32, #tpu.memory_space<vmem>>, vector<8x128xf32>
    %497 = arith.addf %494, %496 : vector<8x128xf32>
    %498 = vector.extract_strided_slice %497 {offsets = [0, 0], sizes = [8, 96], strides = [1, 1]} : vector<8x128xf32> to vector<8x96xf32>
    %499 = arith.negf %498 : vector<8x96xf32>
    %500 = math.exp %499 : vector<8x96xf32>
    %cst_119 = arith.constant 1.000000e+00 : f32
    %501 = vector.broadcast %cst_119 : f32 to vector<8x96xf32>
    %502 = arith.addf %501, %500 : vector<8x96xf32>
    %503 = arith.divf %501, %502 : vector<8x96xf32>
    %504 = vector.extract_strided_slice %497 {offsets = [0, 96], sizes = [8, 32], strides = [1, 1]} : vector<8x128xf32> to vector<8x32xf32>
    %505 = math.tanh %504 : vector<8x32xf32>
    %506 = vector.extract_strided_slice %503 {offsets = [0, 0], sizes = [8, 32], strides = [1, 1]} : vector<8x96xf32> to vector<8x32xf32>
    %507 = vector.extract_strided_slice %503 {offsets = [0, 32], sizes = [8, 32], strides = [1, 1]} : vector<8x96xf32> to vector<8x32xf32>
    %508 = vector.extract_strided_slice %503 {offsets = [0, 64], sizes = [8, 32], strides = [1, 1]} : vector<8x96xf32> to vector<8x32xf32>
    %509 = arith.mulf %507, %489 : vector<8x32xf32>
    %510 = arith.mulf %506, %505 : vector<8x32xf32>
    %511 = arith.addf %509, %510 : vector<8x32xf32>
    %512 = math.tanh %511 : vector<8x32xf32>
    %513 = arith.mulf %508, %512 : vector<8x32xf32>
    %c4_i32_120 = arith.constant 4 : i32
    %c8_i32_121 = arith.constant 8 : i32
    %514 = arith.muli %c4_i32_120, %c8_i32_121 : i32
    %515 = tpu.assume_multiple %514, 8 : i32
    %cst_122 = arith.constant dense<0.000000e+00> : vector<8x128xf32>
    %516 = tpu.matmul %513, %425, %cst_122 {dimension_numbers = #tpu.dot_dimension_numbers<[1], [0], [0], [1], [0, 0, 1, 1], [], []>} : vector<8x32xf32>, vector<32x128xf32>, vector<8x128xf32> -> vector<8x128xf32>
    %517 = arith.index_cast %515 : i32 to index
    %c0_123 = arith.constant 0 : index
    %518 = vector.load %arg14[%517, %c0_123] : memref<64x256xf32, #tpu.memory_space<vmem>>, vector<8x128xf32>
    %519 = arith.addf %516, %518 : vector<8x128xf32>
    %520 = vector.extract_strided_slice %519 {offsets = [0, 0], sizes = [8, 96], strides = [1, 1]} : vector<8x128xf32> to vector<8x96xf32>
    %521 = arith.negf %520 : vector<8x96xf32>
    %522 = math.exp %521 : vector<8x96xf32>
    %cst_124 = arith.constant 1.000000e+00 : f32
    %523 = vector.broadcast %cst_124 : f32 to vector<8x96xf32>
    %524 = arith.addf %523, %522 : vector<8x96xf32>
    %525 = arith.divf %523, %524 : vector<8x96xf32>
    %526 = vector.extract_strided_slice %519 {offsets = [0, 96], sizes = [8, 32], strides = [1, 1]} : vector<8x128xf32> to vector<8x32xf32>
    %527 = math.tanh %526 : vector<8x32xf32>
    %528 = vector.extract_strided_slice %525 {offsets = [0, 0], sizes = [8, 32], strides = [1, 1]} : vector<8x96xf32> to vector<8x32xf32>
    %529 = vector.extract_strided_slice %525 {offsets = [0, 32], sizes = [8, 32], strides = [1, 1]} : vector<8x96xf32> to vector<8x32xf32>
    %530 = vector.extract_strided_slice %525 {offsets = [0, 64], sizes = [8, 32], strides = [1, 1]} : vector<8x96xf32> to vector<8x32xf32>
    %531 = arith.mulf %529, %511 : vector<8x32xf32>
    %532 = arith.mulf %528, %527 : vector<8x32xf32>
    %533 = arith.addf %531, %532 : vector<8x32xf32>
    %534 = math.tanh %533 : vector<8x32xf32>
    %535 = arith.mulf %530, %534 : vector<8x32xf32>
    %c5_i32_125 = arith.constant 5 : i32
    %c8_i32_126 = arith.constant 8 : i32
    %536 = arith.muli %c5_i32_125, %c8_i32_126 : i32
    %537 = tpu.assume_multiple %536, 8 : i32
    %cst_127 = arith.constant dense<0.000000e+00> : vector<8x128xf32>
    %538 = tpu.matmul %535, %425, %cst_127 {dimension_numbers = #tpu.dot_dimension_numbers<[1], [0], [0], [1], [0, 0, 1, 1], [], []>} : vector<8x32xf32>, vector<32x128xf32>, vector<8x128xf32> -> vector<8x128xf32>
    %539 = arith.index_cast %537 : i32 to index
    %c0_128 = arith.constant 0 : index
    %540 = vector.load %arg14[%539, %c0_128] : memref<64x256xf32, #tpu.memory_space<vmem>>, vector<8x128xf32>
    %541 = arith.addf %538, %540 : vector<8x128xf32>
    %542 = vector.extract_strided_slice %541 {offsets = [0, 0], sizes = [8, 96], strides = [1, 1]} : vector<8x128xf32> to vector<8x96xf32>
    %543 = arith.negf %542 : vector<8x96xf32>
    %544 = math.exp %543 : vector<8x96xf32>
    %cst_129 = arith.constant 1.000000e+00 : f32
    %545 = vector.broadcast %cst_129 : f32 to vector<8x96xf32>
    %546 = arith.addf %545, %544 : vector<8x96xf32>
    %547 = arith.divf %545, %546 : vector<8x96xf32>
    %548 = vector.extract_strided_slice %541 {offsets = [0, 96], sizes = [8, 32], strides = [1, 1]} : vector<8x128xf32> to vector<8x32xf32>
    %549 = math.tanh %548 : vector<8x32xf32>
    %550 = vector.extract_strided_slice %547 {offsets = [0, 0], sizes = [8, 32], strides = [1, 1]} : vector<8x96xf32> to vector<8x32xf32>
    %551 = vector.extract_strided_slice %547 {offsets = [0, 32], sizes = [8, 32], strides = [1, 1]} : vector<8x96xf32> to vector<8x32xf32>
    %552 = vector.extract_strided_slice %547 {offsets = [0, 64], sizes = [8, 32], strides = [1, 1]} : vector<8x96xf32> to vector<8x32xf32>
    %553 = arith.mulf %551, %533 : vector<8x32xf32>
    %554 = arith.mulf %550, %549 : vector<8x32xf32>
    %555 = arith.addf %553, %554 : vector<8x32xf32>
    %556 = math.tanh %555 : vector<8x32xf32>
    %557 = arith.mulf %552, %556 : vector<8x32xf32>
    %c6_i32_130 = arith.constant 6 : i32
    %c8_i32_131 = arith.constant 8 : i32
    %558 = arith.muli %c6_i32_130, %c8_i32_131 : i32
    %559 = tpu.assume_multiple %558, 8 : i32
    %cst_132 = arith.constant dense<0.000000e+00> : vector<8x128xf32>
    %560 = tpu.matmul %557, %425, %cst_132 {dimension_numbers = #tpu.dot_dimension_numbers<[1], [0], [0], [1], [0, 0, 1, 1], [], []>} : vector<8x32xf32>, vector<32x128xf32>, vector<8x128xf32> -> vector<8x128xf32>
    %561 = arith.index_cast %559 : i32 to index
    %c0_133 = arith.constant 0 : index
    %562 = vector.load %arg14[%561, %c0_133] : memref<64x256xf32, #tpu.memory_space<vmem>>, vector<8x128xf32>
    %563 = arith.addf %560, %562 : vector<8x128xf32>
    %564 = vector.extract_strided_slice %563 {offsets = [0, 0], sizes = [8, 96], strides = [1, 1]} : vector<8x128xf32> to vector<8x96xf32>
    %565 = arith.negf %564 : vector<8x96xf32>
    %566 = math.exp %565 : vector<8x96xf32>
    %cst_134 = arith.constant 1.000000e+00 : f32
    %567 = vector.broadcast %cst_134 : f32 to vector<8x96xf32>
    %568 = arith.addf %567, %566 : vector<8x96xf32>
    %569 = arith.divf %567, %568 : vector<8x96xf32>
    %570 = vector.extract_strided_slice %563 {offsets = [0, 96], sizes = [8, 32], strides = [1, 1]} : vector<8x128xf32> to vector<8x32xf32>
    %571 = math.tanh %570 : vector<8x32xf32>
    %572 = vector.extract_strided_slice %569 {offsets = [0, 0], sizes = [8, 32], strides = [1, 1]} : vector<8x96xf32> to vector<8x32xf32>
    %573 = vector.extract_strided_slice %569 {offsets = [0, 32], sizes = [8, 32], strides = [1, 1]} : vector<8x96xf32> to vector<8x32xf32>
    %574 = vector.extract_strided_slice %569 {offsets = [0, 64], sizes = [8, 32], strides = [1, 1]} : vector<8x96xf32> to vector<8x32xf32>
    %575 = arith.mulf %573, %555 : vector<8x32xf32>
    %576 = arith.mulf %572, %571 : vector<8x32xf32>
    %577 = arith.addf %575, %576 : vector<8x32xf32>
    %578 = math.tanh %577 : vector<8x32xf32>
    %579 = arith.mulf %574, %578 : vector<8x32xf32>
    %c7_i32_135 = arith.constant 7 : i32
    %c8_i32_136 = arith.constant 8 : i32
    %580 = arith.muli %c7_i32_135, %c8_i32_136 : i32
    %581 = tpu.assume_multiple %580, 8 : i32
    %cst_137 = arith.constant dense<0.000000e+00> : vector<8x128xf32>
    %582 = tpu.matmul %579, %425, %cst_137 {dimension_numbers = #tpu.dot_dimension_numbers<[1], [0], [0], [1], [0, 0, 1, 1], [], []>} : vector<8x32xf32>, vector<32x128xf32>, vector<8x128xf32> -> vector<8x128xf32>
    %583 = arith.index_cast %581 : i32 to index
    %c0_138 = arith.constant 0 : index
    %584 = vector.load %arg14[%583, %c0_138] : memref<64x256xf32, #tpu.memory_space<vmem>>, vector<8x128xf32>
    %585 = arith.addf %582, %584 : vector<8x128xf32>
    %586 = vector.extract_strided_slice %585 {offsets = [0, 0], sizes = [8, 96], strides = [1, 1]} : vector<8x128xf32> to vector<8x96xf32>
    %587 = arith.negf %586 : vector<8x96xf32>
    %588 = math.exp %587 : vector<8x96xf32>
    %cst_139 = arith.constant 1.000000e+00 : f32
    %589 = vector.broadcast %cst_139 : f32 to vector<8x96xf32>
    %590 = arith.addf %589, %588 : vector<8x96xf32>
    %591 = arith.divf %589, %590 : vector<8x96xf32>
    %592 = vector.extract_strided_slice %585 {offsets = [0, 96], sizes = [8, 32], strides = [1, 1]} : vector<8x128xf32> to vector<8x32xf32>
    %593 = math.tanh %592 : vector<8x32xf32>
    %594 = vector.extract_strided_slice %591 {offsets = [0, 0], sizes = [8, 32], strides = [1, 1]} : vector<8x96xf32> to vector<8x32xf32>
    %595 = vector.extract_strided_slice %591 {offsets = [0, 32], sizes = [8, 32], strides = [1, 1]} : vector<8x96xf32> to vector<8x32xf32>
    %596 = vector.extract_strided_slice %591 {offsets = [0, 64], sizes = [8, 32], strides = [1, 1]} : vector<8x96xf32> to vector<8x32xf32>
    %597 = arith.mulf %595, %577 : vector<8x32xf32>
    %598 = arith.mulf %594, %593 : vector<8x32xf32>
    %599 = arith.addf %597, %598 : vector<8x32xf32>
    %600 = math.tanh %599 : vector<8x32xf32>
    %601 = arith.mulf %596, %600 : vector<8x32xf32>
    %c8_i32_140 = arith.constant 8 : i32
    %602 = vector.extract_strided_slice %418 {offsets = [56, 0], sizes = [8, 64], strides = [1, 1]} : vector<64x64xf32> to vector<8x64xf32>
    %c0_141 = arith.constant 0 : index
    %c0_142 = arith.constant 0 : index
    %603 = vector.load %arg8[%c0_141, %c0_142] : memref<64x128xf32, #tpu.memory_space<vmem>>, vector<64x128xf32>
    %cst_143 = arith.constant dense<0.000000e+00> : vector<8x128xf32>
    %604 = tpu.matmul %602, %603, %cst_143 {dimension_numbers = #tpu.dot_dimension_numbers<[1], [0], [0], [1], [0, 0, 1, 1], [], []>} : vector<8x64xf32>, vector<64x128xf32>, vector<8x128xf32> -> vector<8x128xf32>
    %c0_144 = arith.constant 0 : index
    %c0_145 = arith.constant 0 : index
    %605 = vector.load %arg9[%c0_144, %c0_145] : memref<1x128xf32, #tpu.memory_space<vmem>>, vector<1x128xf32>
    %606 = vector.broadcast %605 : vector<1x128xf32> to vector<8x128xf32>
    %607 = arith.addf %604, %606 : vector<8x128xf32>
    %608 = vector.extract_strided_slice %607 {offsets = [0, 0], sizes = [8, 96], strides = [1, 1]} : vector<8x128xf32> to vector<8x96xf32>
    %609 = arith.negf %608 : vector<8x96xf32>
    %610 = math.exp %609 : vector<8x96xf32>
    %cst_146 = arith.constant 1.000000e+00 : f32
    %611 = vector.broadcast %cst_146 : f32 to vector<8x96xf32>
    %612 = arith.addf %611, %610 : vector<8x96xf32>
    %613 = arith.divf %611, %612 : vector<8x96xf32>
    %614 = vector.extract_strided_slice %607 {offsets = [0, 96], sizes = [8, 32], strides = [1, 1]} : vector<8x128xf32> to vector<8x32xf32>
    %615 = math.tanh %614 : vector<8x32xf32>
    %616 = vector.extract_strided_slice %613 {offsets = [0, 0], sizes = [8, 32], strides = [1, 1]} : vector<8x96xf32> to vector<8x32xf32>
    %617 = vector.extract_strided_slice %613 {offsets = [0, 32], sizes = [8, 32], strides = [1, 1]} : vector<8x96xf32> to vector<8x32xf32>
    %618 = vector.extract_strided_slice %613 {offsets = [0, 64], sizes = [8, 32], strides = [1, 1]} : vector<8x96xf32> to vector<8x32xf32>
    %619 = arith.mulf %617, %0 : vector<8x32xf32>
    %620 = arith.mulf %616, %615 : vector<8x32xf32>
    %621 = arith.addf %619, %620 : vector<8x32xf32>
    %622 = math.tanh %621 : vector<8x32xf32>
    %623 = arith.mulf %618, %622 : vector<8x32xf32>
    %c0_147 = arith.constant 0 : index
    %c0_148 = arith.constant 0 : index
    %624 = vector.load %arg10[%c0_147, %c0_148] : memref<32x4xf32, #tpu.memory_space<vmem>>, vector<32x4xf32>
    %cst_149 = arith.constant dense<0.000000e+00> : vector<8x4xf32>
    %625 = tpu.matmul %601, %624, %cst_149 {dimension_numbers = #tpu.dot_dimension_numbers<[1], [0], [0], [1], [0, 0, 1, 1], [], []>} : vector<8x32xf32>, vector<32x4xf32>, vector<8x4xf32> -> vector<8x4xf32>
    %c0_150 = arith.constant 0 : index
    %c0_151 = arith.constant 0 : index
    %626 = vector.load %arg11[%c0_150, %c0_151] : memref<32x4xf32, #tpu.memory_space<vmem>>, vector<32x4xf32>
    %cst_152 = arith.constant dense<0.000000e+00> : vector<8x4xf32>
    %627 = tpu.matmul %623, %626, %cst_152 {dimension_numbers = #tpu.dot_dimension_numbers<[1], [0], [0], [1], [0, 0, 1, 1], [], []>} : vector<8x32xf32>, vector<32x4xf32>, vector<8x4xf32> -> vector<8x4xf32>
    %628 = arith.addf %625, %627 : vector<8x4xf32>
    %c0_153 = arith.constant 0 : index
    %c0_154 = arith.constant 0 : index
    %629 = vector.load %arg12[%c0_153, %c0_154] : memref<1x4xf32, #tpu.memory_space<vmem>>, vector<1x4xf32>
    %630 = vector.broadcast %629 : vector<1x4xf32> to vector<8x4xf32>
    %631 = arith.addf %628, %630 : vector<8x4xf32>
    %c0_155 = arith.constant 0 : index
    %c0_156 = arith.constant 0 : index
    %632 = vector.load %arg13[%c0_155, %c0_156] : memref<8x4xf32, #tpu.memory_space<vmem>>, vector<8x4xf32>
    tpu.vector_store %arg13[%c0_155, %c0_156], %631 {strides = array<i32>} : memref<8x4xf32, #tpu.memory_space<vmem>>, vector<8x4xf32>,
    return
  }
  func.func @transform_0(%arg0: i32) -> (i32, i32) {
    %c0_i32 = arith.constant 0 : i32
    %c0_i32_0 = arith.constant 0 : i32
    %c0_i32_1 = arith.constant 0 : i32
    return %c0_i32, %c0_i32_0 : i32, i32
  }
  func.func @transform_1(%arg0: i32) -> (i32, i32) {
    %c0_i32 = arith.constant 0 : i32
    %c0_i32_0 = arith.constant 0 : i32
    %c0_i32_1 = arith.constant 0 : i32
    return %c0_i32, %c0_i32_0 : i32, i32
  }
  func.func @transform_2(%arg0: i32) -> (i32, i32) {
    %c0_i32 = arith.constant 0 : i32
    %c0_i32_0 = arith.constant 0 : i32
    %c0_i32_1 = arith.constant 0 : i32
    return %c0_i32, %c0_i32_0 : i32, i32
  }
  func.func @transform_3(%arg0: i32) -> (i32, i32) {
    %c0_i32 = arith.constant 0 : i32
    %c0_i32_0 = arith.constant 0 : i32
    %c0_i32_1 = arith.constant 0 : i32
    return %c0_i32, %c0_i32_0 : i32, i32
  }
  func.func @transform_4(%arg0: i32) -> (i32, i32) {
    %c0_i32 = arith.constant 0 : i32
    %c0_i32_0 = arith.constant 0 : i32
    %c0_i32_1 = arith.constant 0 : i32
    return %c0_i32, %c0_i32_0 : i32, i32
  }
  func.func @transform_5(%arg0: i32) -> (i32, i32) {
    %c0_i32 = arith.constant 0 : i32
    %c0_i32_0 = arith.constant 0 : i32
    %c0_i32_1 = arith.constant 0 : i32
    return %c0_i32, %c0_i32_0 : i32, i32
  }
  func.func @transform_6(%arg0: i32) -> (i32, i32) {
    %c0_i32 = arith.constant 0 : i32
    %c0_i32_0 = arith.constant 0 : i32
    %c0_i32_1 = arith.constant 0 : i32
    return %c0_i32, %c0_i32_0 : i32, i32
  }
  func.func @transform_7(%arg0: i32) -> (i32, i32) {
    %c0_i32 = arith.constant 0 : i32
    %c0_i32_0 = arith.constant 0 : i32
    %c0_i32_1 = arith.constant 0 : i32
    return %c0_i32, %c0_i32_0 : i32, i32
  }
  func.func @transform_8(%arg0: i32) -> (i32, i32) {
    %c0_i32 = arith.constant 0 : i32
    %c0_i32_0 = arith.constant 0 : i32
    %c0_i32_1 = arith.constant 0 : i32
    return %c0_i32, %c0_i32_0 : i32, i32
  }
  func.func @transform_9(%arg0: i32) -> (i32, i32) {
    %c0_i32 = arith.constant 0 : i32
    %c0_i32_0 = arith.constant 0 : i32
    %c0_i32_1 = arith.constant 0 : i32
    return %c0_i32, %c0_i32_0 : i32, i32
  }
  func.func @transform_10(%arg0: i32) -> (i32, i32) {
    %c0_i32 = arith.constant 0 : i32
    %c0_i32_0 = arith.constant 0 : i32
    %c0_i32_1 = arith.constant 0 : i32
    return %c0_i32, %c0_i32_0 : i32, i32
  }
  func.func @transform_11(%arg0: i32) -> (i32, i32) {
    %c0_i32 = arith.constant 0 : i32
    %c0_i32_0 = arith.constant 0 : i32
    %c0_i32_1 = arith.constant 0 : i32
    return %c0_i32, %c0_i32_0 : i32, i32
  }
  func.func @transform_12(%arg0: i32) -> (i32, i32) {
    %c0_i32 = arith.constant 0 : i32
    %c0_i32_0 = arith.constant 0 : i32
    %c0_i32_1 = arith.constant 0 : i32
    return %c0_i32, %c0_i32_0 : i32, i32
  }
}

</mosaic_0001>

<llo_original>
// kernel: bilstm_forward.1
$region0: #{bilstm_forward.1}
  #allocation0 [shape = 'u32[]', space=smem, size = 0x4, offset = 0x4, fixed_abs, tag = 'smem constant byte address 0x4 - core index']
  #allocation1 [shape = 'u32[72,128]{1,0:T(1,128)}', space=vmem, size = 0x9000, scoped, tag = 'internal scratch']
  #allocation2 [shape = 'f32[64,256]{1,0:T(8,128)}', space=vmem, size = 0x10000, scoped, tag = 'scratch operand']
  #allocation3 [shape = 'f32[64,64]{1,0:T(8,128)}', space=vmem, size = 0x8000, scoped, tag = 'scratch operand']
  %s0 = inlined_call_operand.vmem [shape: f32[64,8], index: 0, kind: input, shape index: {}]
  %s1 = inlined_call_operand.vmem [shape: f32[8,256], index: 1, kind: input, shape index: {}]
  %s2 = inlined_call_operand.vmem [shape: f32[64,256], index: 2, kind: input, shape index: {}]
  %s3 = inlined_call_operand.vmem [shape: f32[1,256], index: 3, kind: input, shape index: {}]
  %s4 = inlined_call_operand.vmem [shape: f32[64,128], index: 4, kind: input, shape index: {}]
  %s5 = inlined_call_operand.hbm [shape: f32[32,128], index: 5, kind: input, shape index: {}]
  %s6 = inlined_call_operand.hbm [shape: f32[1,128], index: 6, kind: input, shape index: {}]
  %s7 = inlined_call_operand.vmem [shape: f32[64,128], index: 7, kind: input, shape index: {}]
  %s8 = inlined_call_operand.hbm [shape: f32[1,128], index: 8, kind: input, shape index: {}]
  %s9 = inlined_call_operand.vmem [shape: f32[32,4], index: 9, kind: input, shape index: {}]
  %s10 = inlined_call_operand.vmem [shape: f32[32,4], index: 10, kind: input, shape index: {}]
  %s11 = inlined_call_operand.vmem [shape: f32[1,4], index: 11, kind: input, shape index: {}]
  %s12 = inlined_call_operand.vmem [shape: f32[8,4], index: 12, kind: output, shape index: {}]
  %s13 = sld [smem:[#allocation0]]
  $region70: #{bilstm_forward.1} parent=0
    _
  %s15 = ssub.s32 1, %s13
  %s16 = scalar_select 0, %s15, %s13
  $region1: #{bilstm_forward.1} parent=0
    #allocation4 [shape = 'u8[16384]{0}', space=vmem, size = 0x4000, scoped, tag = 'input window, operand 5, single buffered']
    #allocation5 [shape = 's32[1]{0}', space=sflag, size = 0x4, scoped, tag = 'scoped memory for bilstm_forward.1']
    #allocation6 [shape = 'u8[512]{0}', space=vmem, size = 0x400, scoped, tag = 'input window, operand 6, single buffered']
    #allocation7 [shape = 's32[1]{0}', space=sflag, size = 0x4, scoped, tag = 'scoped memory for bilstm_forward.1']
    #allocation8 [shape = 'u8[512]{0}', space=vmem, size = 0x400, scoped, tag = 'input window, operand 8, single buffered']
    %17 = vsyncpa [#allocation5], 0
    %18 = vsyncpa [#allocation7], 0
    // Predicated region
    $region2: #{bilstm_forward.1} parent=1 // pred_check
      _
    $region3: #{bilstm_forward.1} parent=1 // pred_check_branch
      %20 = sbr.rel (0) target = $region5
    $region4: #{bilstm_forward.1} parent=1 // pred_region
      _
    $region5: #{bilstm_forward.1} parent=1 // pred_fallthru
      _
    // Predicated region
    $region6: #{bilstm_forward.1} parent=1 // pred_check
      _
    $region7: #{bilstm_forward.1} parent=1 // pred_check_branch
      %22 = sbr.rel (0) target = $region9
    $region8: #{bilstm_forward.1} parent=1 // pred_region
      _
    $region9: #{bilstm_forward.1} parent=1 // pred_fallthru
      _
    // Predicated region
    $region10: #{bilstm_forward.1} parent=1 // pred_check
      _
    $region11: #{bilstm_forward.1} parent=1 // pred_check_branch
      %24 = sbr.rel (0) target = $region13
    $region12: #{bilstm_forward.1} parent=1 // pred_region
      _
    $region13: #{bilstm_forward.1} parent=1 // pred_fallthru
      _
    // Predicated region
    $region14: #{bilstm_forward.1} parent=1 // pred_check
      _
    $region15: #{bilstm_forward.1} parent=1 // pred_check_branch
      %26 = sbr.rel (0) target = $region17
    $region16: #{bilstm_forward.1} parent=1 // pred_region
      _
    $region17: #{bilstm_forward.1} parent=1 // pred_fallthru
      _
    // Predicated region
    $region18: #{bilstm_forward.1} parent=1 // pred_check
      _
    $region19: #{bilstm_forward.1} parent=1 // pred_check_branch
      %28 = sbr.rel (0) target = $region21
    $region20: #{bilstm_forward.1} parent=1 // pred_region
      _
    $region21: #{bilstm_forward.1} parent=1 // pred_fallthru
      _
    // Predicated region
    $region22: #{bilstm_forward.1} parent=1 // pred_check
      _
    $region23: #{bilstm_forward.1} parent=1 // pred_check_branch
      %30 = sbr.rel (0) target = $region25
    $region24: #{bilstm_forward.1} parent=1 // pred_region
      %32 = vsyncadd [#allocation5], 0
      %s33 = sshll.u32 %s5, 4
      %s34 = int_to_ptr.hbm [resolvable:$true] %s33
      %s35 = sshll.u32 [#allocation4], 4
      %s36 = int_to_ptr.vmem [resolvable:$true] %s35
      %41 = dma.hbm_to_vmem [thread:$0]  %s34, 512, %s36, [#allocation5], 128, 128, 8
    $region25: #{bilstm_forward.1} parent=1 // pred_fallthru
      _
    // Predicated region
    $region26: #{bilstm_forward.1} parent=1 // pred_check
      _
    $region27: #{bilstm_forward.1} parent=1 // pred_check_branch
      %43 = sbr.rel (0) target = $region29
    $region28: #{bilstm_forward.1} parent=1 // pred_region
      %45 = vsyncadd [#allocation7], 0
      %s47 = sshll.u32 %s6, 4
      %s48 = int_to_ptr.hbm [resolvable:$true] %s47
      %s49 = sshll.u32 [#allocation6], 4
      %s50 = int_to_ptr.vmem [resolvable:$true] %s49
      %52 = dma.hbm_to_vmem [thread:$0]  %s48, 16, %s50, [#allocation7]
    $region29: #{bilstm_forward.1} parent=1 // pred_fallthru
      _
    // Predicated region
    $region30: #{bilstm_forward.1} parent=1 // pred_check
      _
    $region31: #{bilstm_forward.1} parent=1 // pred_check_branch
      %54 = sbr.rel (0) target = $region33
    $region32: #{bilstm_forward.1} parent=1 // pred_region
      _
    $region33: #{bilstm_forward.1} parent=1 // pred_fallthru
      _
    // Predicated region
    $region34: #{bilstm_forward.1} parent=1 // pred_check
      _
    $region35: #{bilstm_forward.1} parent=1 // pred_check_branch
      %56 = sbr.rel (0) target = $region37
    $region36: #{bilstm_forward.1} parent=1 // pred_region
      %58 = vsyncadd [#allocation7], 0
      %s60 = sshll.u32 %s8, 4
      %s61 = int_to_ptr.hbm [resolvable:$true] %s60
      %s62 = sshll.u32 [#allocation8], 4
      %s63 = int_to_ptr.vmem [resolvable:$true] %s62
      %65 = dma.hbm_to_vmem [thread:$0]  %s61, 16, %s63, [#allocation7]
    $region37: #{bilstm_forward.1} parent=1 // pred_fallthru
      _
    // Predicated region
    $region38: #{bilstm_forward.1} parent=1 // pred_check
      _
    $region39: #{bilstm_forward.1} parent=1 // pred_check_branch
      %67 = sbr.rel (0) target = $region41
    $region40: #{bilstm_forward.1} parent=1 // pred_region
      _
    $region41: #{bilstm_forward.1} parent=1 // pred_fallthru
      _
    // Predicated region
    $region42: #{bilstm_forward.1} parent=1 // pred_check
      _
    $region43: #{bilstm_forward.1} parent=1 // pred_check_branch
      %69 = sbr.rel (0) target = $region45
    $region44: #{bilstm_forward.1} parent=1 // pred_region
      _
    $region45: #{bilstm_forward.1} parent=1 // pred_fallthru
      _
    // Predicated region
    $region46: #{bilstm_forward.1} parent=1 // pred_check
      _
    $region47: #{bilstm_forward.1} parent=1 // pred_check_branch
      %71 = sbr.rel (0) target = $region49
    $region48: #{bilstm_forward.1} parent=1 // pred_region
      _
    $region49: #{bilstm_forward.1} parent=1 // pred_fallthru
      _
    // Predicated region
    $region50: #{bilstm_forward.1} parent=1 // pred_check
      _
    $region51: #{bilstm_forward.1} parent=1 // pred_check_branch
      %73 = sbr.rel (0) target = $region53
    $region52: #{bilstm_forward.1} parent=1 // pred_region
      %75 = dma.done [#allocation5], 512
    $region53: #{bilstm_forward.1} parent=1 // pred_fallthru
      _
    // Predicated region
    $region54: #{bilstm_forward.1} parent=1 // pred_check
      _
    $region55: #{bilstm_forward.1} parent=1 // pred_check_branch
      %77 = sbr.rel (0) target = $region57
    $region56: #{bilstm_forward.1} parent=1 // pred_region
      %79 = dma.done [#allocation7], 16
    $region57: #{bilstm_forward.1} parent=1 // pred_fallthru
      _
    // Predicated region
    $region58: #{bilstm_forward.1} parent=1 // pred_check
      _
    $region59: #{bilstm_forward.1} parent=1 // pred_check_branch
      %81 = sbr.rel (0) target = $region61
    $region60: #{bilstm_forward.1} parent=1 // pred_region
      %83 = dma.done [#allocation7], 16
    $region61: #{bilstm_forward.1} parent=1 // pred_fallthru
      _
    %v84 = vld [vmem:[%s0] sm:$0xff]
    %v85 = vld [vmem:[%s0 + $0x8] sm:$0xff]
    %v86 = vld [vmem:[%s0 + $0x10] sm:$0xff]
    %v87 = vld [vmem:[%s0 + $0x18] sm:$0xff]
    %v88 = vld [vmem:[%s0 + $0x20] sm:$0xff]
    %v89 = vld [vmem:[%s0 + $0x28] sm:$0xff]
    %v90 = vld [vmem:[%s0 + $0x30] sm:$0xff]
    %v91 = vld [vmem:[%s0 + $0x38] sm:$0xff]
    %v92 = vld [vmem:[%s1] sm:$0xff]
    %v93 = vld [vmem:[%s1 + $0x8] sm:$0xff]
    %v94 = vld [vmem:[%s3] sm:$0x3]
    %v96 = vperm.slane %v94, 0
    %v97 = vperm.slane %v94, 1
    %vm100 = vcmask 64512
    %v102 = vsel %vm100, %v84, 0
    %v105 = vsel %vm100, %v85, 0
    %v108 = vsel %vm100, %v86, 0
    %v111 = vsel %vm100, %v87, 0
    %v114 = vsel %vm100, %v88, 0
    %v117 = vsel %vm100, %v89, 0
    %v120 = vsel %vm100, %v90, 0
    %v123 = vsel %vm100, %v91, 0
    %125 = vmatpush.msra.mxu0 0.0
    %126 = vmatpush.msra.mxu0 0.0
    %127 = vmatpush.msra.mxu0 0.0
    %128 = vmatpush.msra.mxu0 0.0
    %129 = vmatpush.msra.mxu0 0.0
    %130 = vmatpush.msra.mxu0 0.0
    %131 = vmatpush.msra.mxu0 0.0
    %132 = vmatpush.msra.mxu0 0.0
    %133 = vmatpush.msra.mxu0 0.0
    %134 = vmatpush.msra.mxu0 0.0
    %135 = vmatpush.msra.mxu0 0.0
    %136 = vmatpush.msra.mxu0 0.0
    %137 = vmatpush.msra.mxu0 0.0
    %138 = vmatpush.msra.mxu0 0.0
    %139 = vmatpush.msra.mxu0 0.0
    %140 = vmatpush.msra.mxu0 %v92
    %141 = vmatmul.f32.gmra.mxu0 %v102
    %v142 = vpop.f32.mrf.mxu0
    %v143 = vadd.f32 %v96, %v142
    %144 = vmatmul.f32.gmra.mxu0 %v105
    %v145 = vpop.f32.mrf.mxu0
    %v146 = vadd.f32 %v96, %v145
    %147 = vmatmul.f32.gmra.mxu0 %v108
    %v148 = vpop.f32.mrf.mxu0
    %v149 = vadd.f32 %v96, %v148
    %150 = vmatmul.f32.gmra.mxu0 %v111
    %v151 = vpop.f32.mrf.mxu0
    %v152 = vadd.f32 %v96, %v151
    %153 = vmatmul.f32.gmra.mxu0 %v114
    %v154 = vpop.f32.mrf.mxu0
    %v155 = vadd.f32 %v96, %v154
    %156 = vmatmul.f32.gmra.mxu0 %v117
    %v157 = vpop.f32.mrf.mxu0
    %v158 = vadd.f32 %v96, %v157
    %159 = vmatmul.f32.gmra.mxu0 %v120
    %v160 = vpop.f32.mrf.mxu0
    %v161 = vadd.f32 %v96, %v160
    %162 = vmatmul.f32.gmra.mxu0 %v123
    %v163 = vpop.f32.mrf.mxu0
    %v164 = vadd.f32 %v96, %v163
    %165 = vdwg.mxu0
    %166 = vmatpush.msra.mxu0 0.0
    %167 = vmatpush.msra.mxu0 0.0
    %168 = vmatpush.msra.mxu0 0.0
    %169 = vmatpush.msra.mxu0 0.0
    %170 = vmatpush.msra.mxu0 0.0
    %171 = vmatpush.msra.mxu0 0.0
    %172 = vmatpush.msra.mxu0 0.0
    %173 = vmatpush.msra.mxu0 0.0
    %174 = vmatpush.msra.mxu0 0.0
    %175 = vmatpush.msra.mxu0 0.0
    %176 = vmatpush.msra.mxu0 0.0
    %177 = vmatpush.msra.mxu0 0.0
    %178 = vmatpush.msra.mxu0 0.0
    %179 = vmatpush.msra.mxu0 0.0
    %180 = vmatpush.msra.mxu0 0.0
    %181 = vmatpush.msra.mxu0 %v93
    %182 = vmatmul.f32.gmra.mxu0 %v102
    %v183 = vpop.f32.mrf.mxu0
    %v184 = vadd.f32 %v97, %v183
    %185 = vmatmul.f32.gmra.mxu0 %v105
    %v186 = vpop.f32.mrf.mxu0
    %v187 = vadd.f32 %v97, %v186
    %188 = vmatmul.f32.gmra.mxu0 %v108
    %v189 = vpop.f32.mrf.mxu0
    %v190 = vadd.f32 %v97, %v189
    %191 = vmatmul.f32.gmra.mxu0 %v111
    %v192 = vpop.f32.mrf.mxu0
    %v193 = vadd.f32 %v97, %v192
    %194 = vmatmul.f32.gmra.mxu0 %v114
    %v195 = vpop.f32.mrf.mxu0
    %v196 = vadd.f32 %v97, %v195
    %197 = vmatmul.f32.gmra.mxu0 %v117
    %v198 = vpop.f32.mrf.mxu0
    %v199 = vadd.f32 %v97, %v198
    %200 = vmatmul.f32.gmra.mxu0 %v120
    %v201 = vpop.f32.mrf.mxu0
    %v202 = vadd.f32 %v97, %v201
    %203 = vmatmul.f32.gmra.mxu0 %v123
    %v204 = vpop.f32.mrf.mxu0
    %v205 = vadd.f32 %v97, %v204
    %206 = vdwg.mxu0
    %207 = vst [vmem:[#allocation2] sm:$0xff] %v143
    %208 = vst [vmem:[#allocation2 + $0x8] sm:$0xff] %v184
    %209 = vst [vmem:[#allocation2 + $0x10] sm:$0xff] %v146
    %210 = vst [vmem:[#allocation2 + $0x18] sm:$0xff] %v187
    %211 = vst [vmem:[#allocation2 + $0x20] sm:$0xff] %v149
    %212 = vst [vmem:[#allocation2 + $0x28] sm:$0xff] %v190
    %213 = vst [vmem:[#allocation2 + $0x30] sm:$0xff] %v152
    %214 = vst [vmem:[#allocation2 + $0x38] sm:$0xff] %v193
    %215 = vst [vmem:[#allocation2 + $0x40] sm:$0xff] %v155
    %216 = vst [vmem:[#allocation2 + $0x48] sm:$0xff] %v196
    %217 = vst [vmem:[#allocation2 + $0x50] sm:$0xff] %v158
    %218 = vst [vmem:[#allocation2 + $0x58] sm:$0xff] %v199
    %219 = vst [vmem:[#allocation2 + $0x60] sm:$0xff] %v161
    %220 = vst [vmem:[#allocation2 + $0x68] sm:$0xff] %v202
    %221 = vst [vmem:[#allocation2 + $0x70] sm:$0xff] %v164
    %222 = vst [vmem:[#allocation2 + $0x78] sm:$0xff] %v205
    %v223 = vld [vmem:[%s2] sm:$0xff]
    %v224 = vld [vmem:[%s2 + $0x8] sm:$0xff]
    %v225 = vld [vmem:[%s2 + $0x10] sm:$0xff]
    %v226 = vld [vmem:[%s2 + $0x18] sm:$0xff]
    %v227 = vld [vmem:[%s2 + $0x20] sm:$0xff]
    %v228 = vld [vmem:[%s2 + $0x28] sm:$0xff]
    %v229 = vld [vmem:[%s2 + $0x30] sm:$0xff]
    %v230 = vld [vmem:[%s2 + $0x38] sm:$0xff]
    %v231 = vld [vmem:[%s2 + $0x40] sm:$0xff]
    %v232 = vld [vmem:[%s2 + $0x48] sm:$0xff]
    %v233 = vld [vmem:[%s2 + $0x50] sm:$0xff]
    %v234 = vld [vmem:[%s2 + $0x58] sm:$0xff]
    %v235 = vld [vmem:[%s2 + $0x60] sm:$0xff]
    %v236 = vld [vmem:[%s2 + $0x68] sm:$0xff]
    %v237 = vld [vmem:[%s2 + $0x70] sm:$0xff]
    %v238 = vld [vmem:[%s2 + $0x78] sm:$0xff]
    %vm239 = vcmask 523264
    %v241 = vsel %vm239, 0.0, 0
    %243 = vmatpush.msra.mxu0 0.0
    %244 = vmatpush.msra.mxu0 0.0
    %245 = vmatpush.msra.mxu0 0.0
    %246 = vmatpush.msra.mxu0 0.0
    %247 = vmatpush.msra.mxu0 0.0
    %248 = vmatpush.msra.mxu0 0.0
    %249 = vmatpush.msra.mxu0 0.0
    %250 = vmatpush.msra.mxu0 0.0
    %251 = vmatpush.msra.mxu0 %v237
    %252 = vmatpush.msra.mxu0 %v235
    %253 = vmatpush.msra.mxu0 %v233
    %254 = vmatpush.msra.mxu0 %v231
    %255 = vmatpush.msra.mxu0 %v229
    %256 = vmatpush.msra.mxu0 %v227
    %257 = vmatpush.msra.mxu0 %v225
    %258 = vmatpush.msra.mxu0 %v223
    %259 = vmatmul.f32.gmra.mxu0 %v241
    %v260 = vpop.f32.mrf.mxu0
    %v261 = vadd.f32 0.0, %v260
    %262 = vdwg.mxu0
    %263 = vmatpush.msra.mxu0 0.0
    %264 = vmatpush.msra.mxu0 0.0
    %265 = vmatpush.msra.mxu0 0.0
    %266 = vmatpush.msra.mxu0 0.0
    %267 = vmatpush.msra.mxu0 0.0
    %268 = vmatpush.msra.mxu0 0.0
    %269 = vmatpush.msra.mxu0 0.0
    %270 = vmatpush.msra.mxu0 0.0
    %271 = vmatpush.msra.mxu0 %v238
    %272 = vmatpush.msra.mxu0 %v236
    %273 = vmatpush.msra.mxu0 %v234
    %274 = vmatpush.msra.mxu0 %v232
    %275 = vmatpush.msra.mxu0 %v230
    %276 = vmatpush.msra.mxu0 %v228
    %277 = vmatpush.msra.mxu0 %v226
    %278 = vmatpush.msra.mxu0 %v224
    %279 = vmatmul.f32.gmra.mxu0 %v241
    %v280 = vpop.f32.mrf.mxu0
    %v281 = vadd.f32 0.0, %v280
    %282 = vdwg.mxu0
    %s283 = smul.u32 0, 2
    %s284 = smul.addr %s283, 8
    %s285 = scalar_lea.vmem [#allocation2], %s284
    %v286 = vld [vmem:[%s285] sm:$0xff]
    %v287 = vadd.f32 %v261, %v286
    %s288 = smul.u32 7, 2
    %s289 = smul.addr %s288, 8
    %s290 = scalar_lea.vmem [#allocation2], %s289
    %v291 = vld [vmem:[%s290 + $0x8] sm:$0xff]
    %v292 = vadd.f32 %v281, %v291
    %v293 = vxor.u32 %v287, 2147483648
    %v294 = vmul.f32 %v293, 1.442695
    %v295 = vpow.pop %v294
    %v296 = vadd.f32 %v295, 1.0
    %v297 = vrcp.pop %v296
    %v298 = vmul.f32 %v296, %v297
    %v299 = vsub.f32 1.0, %v298
    %v300 = vmul.f32 %v297, %v299
    %v301 = vadd.f32 %v297, %v300
    %vm302 = vweird.f32 %v296
    %vm303 = vweird.f32 %v297
    %vm304 = vmor %vm302, %vm303
    %v305 = vsel %vm304, %v297, %v301
    %v306 = vand.u32 2147483647, %v296
    %vm307 = vcmp.eq.f32.partialorder %v306, 8.507059e+37
    %v308 = vand.u32 %v296, 2147483648
    %v309 = vor.u32 1.1754944e-38, %v308
    %v310 = vsel %vm307, %v309, %v305
    %v311 = vmul.f32 1.0, %v310
    %v312 = vtanh.pop %v287
    %v313 = vmul.f32 %v311, 0.0
    %315 = vrot.lane.b32.xlu0 %v312, 32
    %v316 = vpop.permute.xlu0 %315
    %v318 = vmul.f32 %v311, %v316
    %320 = vrot.lane.b32.xlu0 %v318, 32
    %v321 = vpop.permute.xlu0 %320
    %v323 = vadd.f32 %v313, %v321
    %v324 = vtanh.pop %v323
    %326 = vrot.lane.b32.xlu0 %v324, 32
    %v327 = vpop.permute.xlu0 %326
    %v329 = vmul.f32 %v311, %v327
    %v330 = vxor.u32 %v292, 2147483648
    %v331 = vmul.f32 %v330, 1.442695
    %v332 = vpow.pop %v331
    %v333 = vadd.f32 %v332, 1.0
    %v334 = vrcp.pop %v333
    %v335 = vmul.f32 %v333, %v334
    %v336 = vsub.f32 1.0, %v335
    %v337 = vmul.f32 %v334, %v336
    %v338 = vadd.f32 %v334, %v337
    %vm339 = vweird.f32 %v333
    %vm340 = vweird.f32 %v334
    %vm341 = vmor %vm339, %vm340
    %v342 = vsel %vm341, %v334, %v338
    %v343 = vand.u32 2147483647, %v333
    %vm344 = vcmp.eq.f32.partialorder %v343, 8.507059e+37
    %v345 = vand.u32 %v333, 2147483648
    %v346 = vor.u32 1.1754944e-38, %v345
    %v347 = vsel %vm344, %v346, %v342
    %v348 = vmul.f32 1.0, %v347
    %v349 = vtanh.pop %v292
    %v350 = vmul.f32 %v348, 0.0
    %352 = vrot.lane.b32.xlu0 %v349, 32
    %v353 = vpop.permute.xlu0 %352
    %v355 = vmul.f32 %v348, %v353
    %357 = vrot.lane.b32.xlu0 %v355, 32
    %v358 = vpop.permute.xlu0 %357
    %v360 = vadd.f32 %v350, %v358
    %v361 = vtanh.pop %v360
    %363 = vrot.lane.b32.xlu0 %v361, 32
    %v364 = vpop.permute.xlu0 %363
    %v366 = vmul.f32 %v348, %v364
    %368 = vrot.lane.b32.xlu0 %v329, 64
    %v369 = vpop.permute.xlu0 %368
    %vm371 = vcmask 261120
    %372 = vst.msk [vmem:[#allocation3] sm:$0xff] %vm371, %v369
    %374 = vrot.lane.b32.xlu0 %v366, 96
    %v375 = vpop.permute.xlu0 %374
    %s377 = scalar_lea.vmem [#allocation3], 56
    %vm378 = vcmask 523520
    %379 = vst.msk [vmem:[%s377] sm:$0xff] %vm378, %v375
    %v380 = vsel %vm371, %v369, %v375
    %v382 = vsel %vm239, %v380, 0
    %384 = vmatpush.msra.mxu0 0.0
    %385 = vmatpush.msra.mxu0 0.0
    %386 = vmatpush.msra.mxu0 0.0
    %387 = vmatpush.msra.mxu0 0.0
    %388 = vmatpush.msra.mxu0 0.0
    %389 = vmatpush.msra.mxu0 0.0
    %390 = vmatpush.msra.mxu0 0.0
    %391 = vmatpush.msra.mxu0 0.0
    %392 = vmatpush.msra.mxu0 %v237
    %393 = vmatpush.msra.mxu0 %v235
    %394 = vmatpush.msra.mxu0 %v233
    %395 = vmatpush.msra.mxu0 %v231
    %396 = vmatpush.msra.mxu0 %v229
    %397 = vmatpush.msra.mxu0 %v227
    %398 = vmatpush.msra.mxu0 %v225
    %399 = vmatpush.msra.mxu0 %v223
    %400 = vmatmul.f32.gmra.mxu0 %v382
    %v401 = vpop.f32.mrf.mxu0
    %v402 = vadd.f32 0.0, %v401
    %403 = vdwg.mxu0
    %404 = vmatpush.msra.mxu0 0.0
    %405 = vmatpush.msra.mxu0 0.0
    %406 = vmatpush.msra.mxu0 0.0
    %407 = vmatpush.msra.mxu0 0.0
    %408 = vmatpush.msra.mxu0 0.0
    %409 = vmatpush.msra.mxu0 0.0
    %410 = vmatpush.msra.mxu0 0.0
    %411 = vmatpush.msra.mxu0 0.0
    %412 = vmatpush.msra.mxu0 %v238
    %413 = vmatpush.msra.mxu0 %v236
    %414 = vmatpush.msra.mxu0 %v234
    %415 = vmatpush.msra.mxu0 %v232
    %416 = vmatpush.msra.mxu0 %v230
    %417 = vmatpush.msra.mxu0 %v228
    %418 = vmatpush.msra.mxu0 %v226
    %419 = vmatpush.msra.mxu0 %v224
    %420 = vmatmul.f32.gmra.mxu0 %v382
    %v421 = vpop.f32.mrf.mxu0
    %v422 = vadd.f32 0.0, %v421
    %423 = vdwg.mxu0
    %s424 = smul.u32 1, 2
    %s425 = smul.addr %s424, 8
    %s426 = scalar_lea.vmem [#allocation2], %s425
    %v427 = vld [vmem:[%s426] sm:$0xff]
    %v428 = vadd.f32 %v402, %v427
    %s429 = smul.u32 6, 2
    %s430 = smul.addr %s429, 8
    %s431 = scalar_lea.vmem [#allocation2], %s430
    %v432 = vld [vmem:[%s431 + $0x8] sm:$0xff]
    %v433 = vadd.f32 %v422, %v432
    %v434 = vxor.u32 %v428, 2147483648
    %v435 = vmul.f32 %v434, 1.442695
    %v436 = vpow.pop %v435
    %v437 = vadd.f32 %v436, 1.0
    %v438 = vrcp.pop %v437
    %v439 = vmul.f32 %v437, %v438
    %v440 = vsub.f32 1.0, %v439
    %v441 = vmul.f32 %v438, %v440
    %v442 = vadd.f32 %v438, %v441
    %vm443 = vweird.f32 %v437
    %vm444 = vweird.f32 %v438
    %vm445 = vmor %vm443, %vm444
    %v446 = vsel %vm445, %v438, %v442
    %v447 = vand.u32 2147483647, %v437
    %vm448 = vcmp.eq.f32.partialorder %v447, 8.507059e+37
    %v449 = vand.u32 %v437, 2147483648
    %v450 = vor.u32 1.1754944e-38, %v449
    %v451 = vsel %vm448, %v450, %v446
    %v452 = vmul.f32 1.0, %v451
    %v453 = vtanh.pop %v428
    %v454 = vmul.f32 %v452, %v323
    %456 = vrot.lane.b32.xlu0 %v453, 32
    %v457 = vpop.permute.xlu0 %456
    %v459 = vmul.f32 %v452, %v457
    %461 = vrot.lane.b32.xlu0 %v459, 32
    %v462 = vpop.permute.xlu0 %461
    %v464 = vadd.f32 %v454, %v462
    %v465 = vtanh.pop %v464
    %467 = vrot.lane.b32.xlu0 %v465, 32
    %v468 = vpop.permute.xlu0 %467
    %v470 = vmul.f32 %v452, %v468
    %v471 = vxor.u32 %v433, 2147483648
    %v472 = vmul.f32 %v471, 1.442695
    %v473 = vpow.pop %v472
    %v474 = vadd.f32 %v473, 1.0
    %v475 = vrcp.pop %v474
    %v476 = vmul.f32 %v474, %v475
    %v477 = vsub.f32 1.0, %v476
    %v478 = vmul.f32 %v475, %v477
    %v479 = vadd.f32 %v475, %v478
    %vm480 = vweird.f32 %v474
    %vm481 = vweird.f32 %v475
    %vm482 = vmor %vm480, %vm481
    %v483 = vsel %vm482, %v475, %v479
    %v484 = vand.u32 2147483647, %v474
    %vm485 = vcmp.eq.f32.partialorder %v484, 8.507059e+37
    %v486 = vand.u32 %v474, 2147483648
    %v487 = vor.u32 1.1754944e-38, %v486
    %v488 = vsel %vm485, %v487, %v483
    %v489 = vmul.f32 1.0, %v488
    %v490 = vtanh.pop %v433
    %v491 = vmul.f32 %v489, %v360
    %493 = vrot.lane.b32.xlu0 %v490, 32
    %v494 = vpop.permute.xlu0 %493
    %v496 = vmul.f32 %v489, %v494
    %498 = vrot.lane.b32.xlu0 %v496, 32
    %v499 = vpop.permute.xlu0 %498
    %v501 = vadd.f32 %v491, %v499
    %v502 = vtanh.pop %v501
    %504 = vrot.lane.b32.xlu0 %v502, 32
    %v505 = vpop.permute.xlu0 %504
    %v507 = vmul.f32 %v489, %v505
    %509 = vrot.lane.b32.xlu0 %v470, 64
    %v510 = vpop.permute.xlu0 %509
    %s512 = scalar_lea.vmem [#allocation3], 8
    %513 = vst.msk [vmem:[%s512] sm:$0xff] %vm371, %v510
    %515 = vrot.lane.b32.xlu0 %v507, 96
    %v516 = vpop.permute.xlu0 %515
    %s518 = scalar_lea.vmem [#allocation3], 48
    %519 = vst.msk [vmem:[%s518] sm:$0xff] %vm378, %v516
    %v520 = vsel %vm371, %v510, %v516
    %v522 = vsel %vm239, %v520, 0
    %524 = vmatpush.msra.mxu0 0.0
    %525 = vmatpush.msra.mxu0 0.0
    %526 = vmatpush.msra.mxu0 0.0
    %527 = vmatpush.msra.mxu0 0.0
    %528 = vmatpush.msra.mxu0 0.0
    %529 = vmatpush.msra.mxu0 0.0
    %530 = vmatpush.msra.mxu0 0.0
    %531 = vmatpush.msra.mxu0 0.0
    %532 = vmatpush.msra.mxu0 %v237
    %533 = vmatpush.msra.mxu0 %v235
    %534 = vmatpush.msra.mxu0 %v233
    %535 = vmatpush.msra.mxu0 %v231
    %536 = vmatpush.msra.mxu0 %v229
    %537 = vmatpush.msra.mxu0 %v227
    %538 = vmatpush.msra.mxu0 %v225
    %539 = vmatpush.msra.mxu0 %v223
    %540 = vmatmul.f32.gmra.mxu0 %v522
    %v541 = vpop.f32.mrf.mxu0
    %v542 = vadd.f32 0.0, %v541
    %543 = vdwg.mxu0
    %544 = vmatpush.msra.mxu0 0.0
    %545 = vmatpush.msra.mxu0 0.0
    %546 = vmatpush.msra.mxu0 0.0
    %547 = vmatpush.msra.mxu0 0.0
    %548 = vmatpush.msra.mxu0 0.0
    %549 = vmatpush.msra.mxu0 0.0
    %550 = vmatpush.msra.mxu0 0.0
    %551 = vmatpush.msra.mxu0 0.0
    %552 = vmatpush.msra.mxu0 %v238
    %553 = vmatpush.msra.mxu0 %v236
    %554 = vmatpush.msra.mxu0 %v234
    %555 = vmatpush.msra.mxu0 %v232
    %556 = vmatpush.msra.mxu0 %v230
    %557 = vmatpush.msra.mxu0 %v228
    %558 = vmatpush.msra.mxu0 %v226
    %559 = vmatpush.msra.mxu0 %v224
    %560 = vmatmul.f32.gmra.mxu0 %v522
    %v561 = vpop.f32.mrf.mxu0
    %v562 = vadd.f32 0.0, %v561
    %563 = vdwg.mxu0
    %s564 = smul.u32 2, 2
    %s565 = smul.addr %s564, 8
    %s566 = scalar_lea.vmem [#allocation2], %s565
    %v567 = vld [vmem:[%s566] sm:$0xff]
    %v568 = vadd.f32 %v542, %v567
    %s569 = smul.u32 5, 2
    %s570 = smul.addr %s569, 8
    %s571 = scalar_lea.vmem [#allocation2], %s570
    %v572 = vld [vmem:[%s571 + $0x8] sm:$0xff]
    %v573 = vadd.f32 %v562, %v572
    %v574 = vxor.u32 %v568, 2147483648
    %v575 = vmul.f32 %v574, 1.442695
    %v576 = vpow.pop %v575
    %v577 = vadd.f32 %v576, 1.0
    %v578 = vrcp.pop %v577
    %v579 = vmul.f32 %v577, %v578
    %v580 = vsub.f32 1.0, %v579
    %v581 = vmul.f32 %v578, %v580
    %v582 = vadd.f32 %v578, %v581
    %vm583 = vweird.f32 %v577
    %vm584 = vweird.f32 %v578
    %vm585 = vmor %vm583, %vm584
    %v586 = vsel %vm585, %v578, %v582
    %v587 = vand.u32 2147483647, %v577
    %vm588 = vcmp.eq.f32.partialorder %v587, 8.507059e+37
    %v589 = vand.u32 %v577, 2147483648
    %v590 = vor.u32 1.1754944e-38, %v589
    %v591 = vsel %vm588, %v590, %v586
    %v592 = vmul.f32 1.0, %v591
    %v593 = vtanh.pop %v568
    %v594 = vmul.f32 %v592, %v464
    %596 = vrot.lane.b32.xlu0 %v593, 32
    %v597 = vpop.permute.xlu0 %596
    %v599 = vmul.f32 %v592, %v597
    %601 = vrot.lane.b32.xlu0 %v599, 32
    %v602 = vpop.permute.xlu0 %601
    %v604 = vadd.f32 %v594, %v602
    %v605 = vtanh.pop %v604
    %607 = vrot.lane.b32.xlu0 %v605, 32
    %v608 = vpop.permute.xlu0 %607
    %v610 = vmul.f32 %v592, %v608
    %v611 = vxor.u32 %v573, 2147483648
    %v612 = vmul.f32 %v611, 1.442695
    %v613 = vpow.pop %v612
    %v614 = vadd.f32 %v613, 1.0
    %v615 = vrcp.pop %v614
    %v616 = vmul.f32 %v614, %v615
    %v617 = vsub.f32 1.0, %v616
    %v618 = vmul.f32 %v615, %v617
    %v619 = vadd.f32 %v615, %v618
    %vm620 = vweird.f32 %v614
    %vm621 = vweird.f32 %v615
    %vm622 = vmor %vm620, %vm621
    %v623 = vsel %vm622, %v615, %v619
    %v624 = vand.u32 2147483647, %v614
    %vm625 = vcmp.eq.f32.partialorder %v624, 8.507059e+37
    %v626 = vand.u32 %v614, 2147483648
    %v627 = vor.u32 1.1754944e-38, %v626
    %v628 = vsel %vm625, %v627, %v623
    %v629 = vmul.f32 1.0, %v628
    %v630 = vtanh.pop %v573
    %v631 = vmul.f32 %v629, %v501
    %633 = vrot.lane.b32.xlu0 %v630, 32
    %v634 = vpop.permute.xlu0 %633
    %v636 = vmul.f32 %v629, %v634
    %638 = vrot.lane.b32.xlu0 %v636, 32
    %v639 = vpop.permute.xlu0 %638
    %v641 = vadd.f32 %v631, %v639
    %v642 = vtanh.pop %v641
    %644 = vrot.lane.b32.xlu0 %v642, 32
    %v645 = vpop.permute.xlu0 %644
    %v647 = vmul.f32 %v629, %v645
    %649 = vrot.lane.b32.xlu0 %v610, 64
    %v650 = vpop.permute.xlu0 %649
    %s652 = scalar_lea.vmem [#allocation3], 16
    %653 = vst.msk [vmem:[%s652] sm:$0xff] %vm371, %v650
    %655 = vrot.lane.b32.xlu0 %v647, 96
    %v656 = vpop.permute.xlu0 %655
    %s658 = scalar_lea.vmem [#allocation3], 40
    %659 = vst.msk [vmem:[%s658] sm:$0xff] %vm378, %v656
    %v660 = vsel %vm371, %v650, %v656
    %v662 = vsel %vm239, %v660, 0
    %664 = vmatpush.msra.mxu0 0.0
    %665 = vmatpush.msra.mxu0 0.0
    %666 = vmatpush.msra.mxu0 0.0
    %667 = vmatpush.msra.mxu0 0.0
    %668 = vmatpush.msra.mxu0 0.0
    %669 = vmatpush.msra.mxu0 0.0
    %670 = vmatpush.msra.mxu0 0.0
    %671 = vmatpush.msra.mxu0 0.0
    %672 = vmatpush.msra.mxu0 %v237
    %673 = vmatpush.msra.mxu0 %v235
    %674 = vmatpush.msra.mxu0 %v233
    %675 = vmatpush.msra.mxu0 %v231
    %676 = vmatpush.msra.mxu0 %v229
    %677 = vmatpush.msra.mxu0 %v227
    %678 = vmatpush.msra.mxu0 %v225
    %679 = vmatpush.msra.mxu0 %v223
    %680 = vmatmul.f32.gmra.mxu0 %v662
    %v681 = vpop.f32.mrf.mxu0
    %v682 = vadd.f32 0.0, %v681
    %683 = vdwg.mxu0
    %684 = vmatpush.msra.mxu0 0.0
    %685 = vmatpush.msra.mxu0 0.0
    %686 = vmatpush.msra.mxu0 0.0
    %687 = vmatpush.msra.mxu0 0.0
    %688 = vmatpush.msra.mxu0 0.0
    %689 = vmatpush.msra.mxu0 0.0
    %690 = vmatpush.msra.mxu0 0.0
    %691 = vmatpush.msra.mxu0 0.0
    %692 = vmatpush.msra.mxu0 %v238
    %693 = vmatpush.msra.mxu0 %v236
    %694 = vmatpush.msra.mxu0 %v234
    %695 = vmatpush.msra.mxu0 %v232
    %696 = vmatpush.msra.mxu0 %v230
    %697 = vmatpush.msra.mxu0 %v228
    %698 = vmatpush.msra.mxu0 %v226
    %699 = vmatpush.msra.mxu0 %v224
    %700 = vmatmul.f32.gmra.mxu0 %v662
    %v701 = vpop.f32.mrf.mxu0
    %v702 = vadd.f32 0.0, %v701
    %703 = vdwg.mxu0
    %s704 = smul.u32 3, 2
    %s705 = smul.addr %s704, 8
    %s706 = scalar_lea.vmem [#allocation2], %s705
    %v707 = vld [vmem:[%s706] sm:$0xff]
    %v708 = vadd.f32 %v682, %v707
    %s709 = smul.u32 4, 2
    %s710 = smul.addr %s709, 8
    %s711 = scalar_lea.vmem [#allocation2], %s710
    %v712 = vld [vmem:[%s711 + $0x8] sm:$0xff]
    %v713 = vadd.f32 %v702, %v712
    %v714 = vxor.u32 %v708, 2147483648
    %v715 = vmul.f32 %v714, 1.442695
    %v716 = vpow.pop %v715
    %v717 = vadd.f32 %v716, 1.0
    %v718 = vrcp.pop %v717
    %v719 = vmul.f32 %v717, %v718
    %v720 = vsub.f32 1.0, %v719
    %v721 = vmul.f32 %v718, %v720
    %v722 = vadd.f32 %v718, %v721
    %vm723 = vweird.f32 %v717
    %vm724 = vweird.f32 %v718
    %vm725 = vmor %vm723, %vm724
    %v726 = vsel %vm725, %v718, %v722
    %v727 = vand.u32 2147483647, %v717
    %vm728 = vcmp.eq.f32.partialorder %v727, 8.507059e+37
    %v729 = vand.u32 %v717, 2147483648
    %v730 = vor.u32 1.1754944e-38, %v729
    %v731 = vsel %vm728, %v730, %v726
    %v732 = vmul.f32 1.0, %v731
    %v733 = vtanh.pop %v708
    %v734 = vmul.f32 %v732, %v604
    %736 = vrot.lane.b32.xlu0 %v733, 32
    %v737 = vpop.permute.xlu0 %736
    %v739 = vmul.f32 %v732, %v737
    %741 = vrot.lane.b32.xlu0 %v739, 32
    %v742 = vpop.permute.xlu0 %741
    %v744 = vadd.f32 %v734, %v742
    %v745 = vtanh.pop %v744
    %747 = vrot.lane.b32.xlu0 %v745, 32
    %v748 = vpop.permute.xlu0 %747
    %v750 = vmul.f32 %v732, %v748
    %v751 = vxor.u32 %v713, 2147483648
    %v752 = vmul.f32 %v751, 1.442695
    %v753 = vpow.pop %v752
    %v754 = vadd.f32 %v753, 1.0
    %v755 = vrcp.pop %v754
    %v756 = vmul.f32 %v754, %v755
    %v757 = vsub.f32 1.0, %v756
    %v758 = vmul.f32 %v755, %v757
    %v759 = vadd.f32 %v755, %v758
    %vm760 = vweird.f32 %v754
    %vm761 = vweird.f32 %v755
    %vm762 = vmor %vm760, %vm761
    %v763 = vsel %vm762, %v755, %v759
    %v764 = vand.u32 2147483647, %v754
    %vm765 = vcmp.eq.f32.partialorder %v764, 8.507059e+37
    %v766 = vand.u32 %v754, 2147483648
    %v767 = vor.u32 1.1754944e-38, %v766
    %v768 = vsel %vm765, %v767, %v763
    %v769 = vmul.f32 1.0, %v768
    %v770 = vtanh.pop %v713
    %v771 = vmul.f32 %v769, %v641
    %773 = vrot.lane.b32.xlu0 %v770, 32
    %v774 = vpop.permute.xlu0 %773
    %v776 = vmul.f32 %v769, %v774
    %778 = vrot.lane.b32.xlu0 %v776, 32
    %v779 = vpop.permute.xlu0 %778
    %v781 = vadd.f32 %v771, %v779
    %v782 = vtanh.pop %v781
    %784 = vrot.lane.b32.xlu0 %v782, 32
    %v785 = vpop.permute.xlu0 %784
    %v787 = vmul.f32 %v769, %v785
    %789 = vrot.lane.b32.xlu0 %v750, 64
    %v790 = vpop.permute.xlu0 %789
    %s792 = scalar_lea.vmem [#allocation3], 24
    %793 = vst.msk [vmem:[%s792] sm:$0xff] %vm371, %v790
    %795 = vrot.lane.b32.xlu0 %v787, 96
    %v796 = vpop.permute.xlu0 %795
    %s798 = scalar_lea.vmem [#allocation3], 32
    %799 = vst.msk [vmem:[%s798] sm:$0xff] %vm378, %v796
    %v800 = vsel %vm371, %v790, %v796
    %v802 = vsel %vm239, %v800, 0
    %804 = vmatpush.msra.mxu0 0.0
    %805 = vmatpush.msra.mxu0 0.0
    %806 = vmatpush.msra.mxu0 0.0
    %807 = vmatpush.msra.mxu0 0.0
    %808 = vmatpush.msra.mxu0 0.0
    %809 = vmatpush.msra.mxu0 0.0
    %810 = vmatpush.msra.mxu0 0.0
    %811 = vmatpush.msra.mxu0 0.0
    %812 = vmatpush.msra.mxu0 %v237
    %813 = vmatpush.msra.mxu0 %v235
    %814 = vmatpush.msra.mxu0 %v233
    %815 = vmatpush.msra.mxu0 %v231
    %816 = vmatpush.msra.mxu0 %v229
    %817 = vmatpush.msra.mxu0 %v227
    %818 = vmatpush.msra.mxu0 %v225
    %819 = vmatpush.msra.mxu0 %v223
    %820 = vmatmul.f32.gmra.mxu0 %v802
    %v821 = vpop.f32.mrf.mxu0
    %v822 = vadd.f32 0.0, %v821
    %823 = vdwg.mxu0
    %824 = vmatpush.msra.mxu0 0.0
    %825 = vmatpush.msra.mxu0 0.0
    %826 = vmatpush.msra.mxu0 0.0
    %827 = vmatpush.msra.mxu0 0.0
    %828 = vmatpush.msra.mxu0 0.0
    %829 = vmatpush.msra.mxu0 0.0
    %830 = vmatpush.msra.mxu0 0.0
    %831 = vmatpush.msra.mxu0 0.0
    %832 = vmatpush.msra.mxu0 %v238
    %833 = vmatpush.msra.mxu0 %v236
    %834 = vmatpush.msra.mxu0 %v234
    %835 = vmatpush.msra.mxu0 %v232
    %836 = vmatpush.msra.mxu0 %v230
    %837 = vmatpush.msra.mxu0 %v228
    %838 = vmatpush.msra.mxu0 %v226
    %839 = vmatpush.msra.mxu0 %v224
    %840 = vmatmul.f32.gmra.mxu0 %v802
    %v841 = vpop.f32.mrf.mxu0
    %v842 = vadd.f32 0.0, %v841
    %843 = vdwg.mxu0
    %v844 = vld [vmem:[%s711] sm:$0xff]
    %v845 = vadd.f32 %v822, %v844
    %v846 = vld [vmem:[%s706 + $0x8] sm:$0xff]
    %v847 = vadd.f32 %v842, %v846
    %v848 = vxor.u32 %v845, 2147483648
    %v849 = vmul.f32 %v848, 1.442695
    %v850 = vpow.pop %v849
    %v851 = vadd.f32 %v850, 1.0
    %v852 = vrcp.pop %v851
    %v853 = vmul.f32 %v851, %v852
    %v854 = vsub.f32 1.0, %v853
    %v855 = vmul.f32 %v852, %v854
    %v856 = vadd.f32 %v852, %v855
    %vm857 = vweird.f32 %v851
    %vm858 = vweird.f32 %v852
    %vm859 = vmor %vm857, %vm858
    %v860 = vsel %vm859, %v852, %v856
    %v861 = vand.u32 2147483647, %v851
    %vm862 = vcmp.eq.f32.partialorder %v861, 8.507059e+37
    %v863 = vand.u32 %v851, 2147483648
    %v864 = vor.u32 1.1754944e-38, %v863
    %v865 = vsel %vm862, %v864, %v860
    %v866 = vmul.f32 1.0, %v865
    %v867 = vtanh.pop %v845
    %v868 = vmul.f32 %v866, %v744
    %870 = vrot.lane.b32.xlu0 %v867, 32
    %v871 = vpop.permute.xlu0 %870
    %v873 = vmul.f32 %v866, %v871
    %875 = vrot.lane.b32.xlu0 %v873, 32
    %v876 = vpop.permute.xlu0 %875
    %v878 = vadd.f32 %v868, %v876
    %v879 = vtanh.pop %v878
    %881 = vrot.lane.b32.xlu0 %v879, 32
    %v882 = vpop.permute.xlu0 %881
    %v884 = vmul.f32 %v866, %v882
    %v885 = vxor.u32 %v847, 2147483648
    %v886 = vmul.f32 %v885, 1.442695
    %v887 = vpow.pop %v886
    %v888 = vadd.f32 %v887, 1.0
    %v889 = vrcp.pop %v888
    %v890 = vmul.f32 %v888, %v889
    %v891 = vsub.f32 1.0, %v890
    %v892 = vmul.f32 %v889, %v891
    %v893 = vadd.f32 %v889, %v892
    %vm894 = vweird.f32 %v888
    %vm895 = vweird.f32 %v889
    %vm896 = vmor %vm894, %vm895
    %v897 = vsel %vm896, %v889, %v893
    %v898 = vand.u32 2147483647, %v888
    %vm899 = vcmp.eq.f32.partialorder %v898, 8.507059e+37
    %v900 = vand.u32 %v888, 2147483648
    %v901 = vor.u32 1.1754944e-38, %v900
    %v902 = vsel %vm899, %v901, %v897
    %v903 = vmul.f32 1.0, %v902
    %v904 = vtanh.pop %v847
    %v905 = vmul.f32 %v903, %v781
    %907 = vrot.lane.b32.xlu0 %v904, 32
    %v908 = vpop.permute.xlu0 %907
    %v910 = vmul.f32 %v903, %v908
    %912 = vrot.lane.b32.xlu0 %v910, 32
    %v913 = vpop.permute.xlu0 %912
    %v915 = vadd.f32 %v905, %v913
    %v916 = vtanh.pop %v915
    %918 = vrot.lane.b32.xlu0 %v916, 32
    %v919 = vpop.permute.xlu0 %918
    %v921 = vmul.f32 %v903, %v919
    %923 = vrot.lane.b32.xlu0 %v884, 64
    %v924 = vpop.permute.xlu0 %923
    %926 = vst.msk [vmem:[%s798] sm:$0xff] %vm371, %v924
    %928 = vrot.lane.b32.xlu0 %v921, 96
    %v929 = vpop.permute.xlu0 %928
    %931 = vst.msk [vmem:[%s792] sm:$0xff] %vm378, %v929
    %v932 = vsel %vm371, %v924, %v929
    %v934 = vsel %vm239, %v932, 0
    %936 = vmatpush.msra.mxu0 0.0
    %937 = vmatpush.msra.mxu0 0.0
    %938 = vmatpush.msra.mxu0 0.0
    %939 = vmatpush.msra.mxu0 0.0
    %940 = vmatpush.msra.mxu0 0.0
    %941 = vmatpush.msra.mxu0 0.0
    %942 = vmatpush.msra.mxu0 0.0
    %943 = vmatpush.msra.mxu0 0.0
    %944 = vmatpush.msra.mxu0 %v237
    %945 = vmatpush.msra.mxu0 %v235
    %946 = vmatpush.msra.mxu0 %v233
    %947 = vmatpush.msra.mxu0 %v231
    %948 = vmatpush.msra.mxu0 %v229
    %949 = vmatpush.msra.mxu0 %v227
    %950 = vmatpush.msra.mxu0 %v225
    %951 = vmatpush.msra.mxu0 %v223
    %952 = vmatmul.f32.gmra.mxu0 %v934
    %v953 = vpop.f32.mrf.mxu0
    %v954 = vadd.f32 0.0, %v953
    %955 = vdwg.mxu0
    %956 = vmatpush.msra.mxu0 0.0
    %957 = vmatpush.msra.mxu0 0.0
    %958 = vmatpush.msra.mxu0 0.0
    %959 = vmatpush.msra.mxu0 0.0
    %960 = vmatpush.msra.mxu0 0.0
    %961 = vmatpush.msra.mxu0 0.0
    %962 = vmatpush.msra.mxu0 0.0
    %963 = vmatpush.msra.mxu0 0.0
    %964 = vmatpush.msra.mxu0 %v238
    %965 = vmatpush.msra.mxu0 %v236
    %966 = vmatpush.msra.mxu0 %v234
    %967 = vmatpush.msra.mxu0 %v232
    %968 = vmatpush.msra.mxu0 %v230
    %969 = vmatpush.msra.mxu0 %v228
    %970 = vmatpush.msra.mxu0 %v226
    %971 = vmatpush.msra.mxu0 %v224
    %972 = vmatmul.f32.gmra.mxu0 %v934
    %v973 = vpop.f32.mrf.mxu0
    %v974 = vadd.f32 0.0, %v973
    %975 = vdwg.mxu0
    %v976 = vld [vmem:[%s571] sm:$0xff]
    %v977 = vadd.f32 %v954, %v976
    %v978 = vld [vmem:[%s566 + $0x8] sm:$0xff]
    %v979 = vadd.f32 %v974, %v978
    %v980 = vxor.u32 %v977, 2147483648
    %v981 = vmul.f32 %v980, 1.442695
    %v982 = vpow.pop %v981
    %v983 = vadd.f32 %v982, 1.0
    %v984 = vrcp.pop %v983
    %v985 = vmul.f32 %v983, %v984
    %v986 = vsub.f32 1.0, %v985
    %v987 = vmul.f32 %v984, %v986
    %v988 = vadd.f32 %v984, %v987
    %vm989 = vweird.f32 %v983
    %vm990 = vweird.f32 %v984
    %vm991 = vmor %vm989, %vm990
    %v992 = vsel %vm991, %v984, %v988
    %v993 = vand.u32 2147483647, %v983
    %vm994 = vcmp.eq.f32.partialorder %v993, 8.507059e+37
    %v995 = vand.u32 %v983, 2147483648
    %v996 = vor.u32 1.1754944e-38, %v995
    %v997 = vsel %vm994, %v996, %v992
    %v998 = vmul.f32 1.0, %v997
    %v999 = vtanh.pop %v977
    %v1000 = vmul.f32 %v998, %v878
    %1002 = vrot.lane.b32.xlu0 %v999, 32
    %v1003 = vpop.permute.xlu0 %1002
    %v1005 = vmul.f32 %v998, %v1003
    %1007 = vrot.lane.b32.xlu0 %v1005, 32
    %v1008 = vpop.permute.xlu0 %1007
    %v1010 = vadd.f32 %v1000, %v1008
    %v1011 = vtanh.pop %v1010
    %1013 = vrot.lane.b32.xlu0 %v1011, 32
    %v1014 = vpop.permute.xlu0 %1013
    %v1016 = vmul.f32 %v998, %v1014
    %v1017 = vxor.u32 %v979, 2147483648
    %v1018 = vmul.f32 %v1017, 1.442695
    %v1019 = vpow.pop %v1018
    %v1020 = vadd.f32 %v1019, 1.0
    %v1021 = vrcp.pop %v1020
    %v1022 = vmul.f32 %v1020, %v1021
    %v1023 = vsub.f32 1.0, %v1022
    %v1024 = vmul.f32 %v1021, %v1023
    %v1025 = vadd.f32 %v1021, %v1024
    %vm1026 = vweird.f32 %v1020
    %vm1027 = vweird.f32 %v1021
    %vm1028 = vmor %vm1026, %vm1027
    %v1029 = vsel %vm1028, %v1021, %v1025
    %v1030 = vand.u32 2147483647, %v1020
    %vm1031 = vcmp.eq.f32.partialorder %v1030, 8.507059e+37
    %v1032 = vand.u32 %v1020, 2147483648
    %v1033 = vor.u32 1.1754944e-38, %v1032
    %v1034 = vsel %vm1031, %v1033, %v1029
    %v1035 = vmul.f32 1.0, %v1034
    %v1036 = vtanh.pop %v979
    %v1037 = vmul.f32 %v1035, %v915
    %1039 = vrot.lane.b32.xlu0 %v1036, 32
    %v1040 = vpop.permute.xlu0 %1039
    %v1042 = vmul.f32 %v1035, %v1040
    %1044 = vrot.lane.b32.xlu0 %v1042, 32
    %v1045 = vpop.permute.xlu0 %1044
    %v1047 = vadd.f32 %v1037, %v1045
    %v1048 = vtanh.pop %v1047
    %1050 = vrot.lane.b32.xlu0 %v1048, 32
    %v1051 = vpop.permute.xlu0 %1050
    %v1053 = vmul.f32 %v1035, %v1051
    %1055 = vrot.lane.b32.xlu0 %v1016, 64
    %v1056 = vpop.permute.xlu0 %1055
    %1058 = vst.msk [vmem:[%s658] sm:$0xff] %vm371, %v1056
    %1060 = vrot.lane.b32.xlu0 %v1053, 96
    %v1061 = vpop.permute.xlu0 %1060
    %1063 = vst.msk [vmem:[%s652] sm:$0xff] %vm378, %v1061
    %v1064 = vsel %vm371, %v1056, %v1061
    %v1066 = vsel %vm239, %v1064, 0
    %1068 = vmatpush.msra.mxu0 0.0
    %1069 = vmatpush.msra.mxu0 0.0
    %1070 = vmatpush.msra.mxu0 0.0
    %1071 = vmatpush.msra.mxu0 0.0
    %1072 = vmatpush.msra.mxu0 0.0
    %1073 = vmatpush.msra.mxu0 0.0
    %1074 = vmatpush.msra.mxu0 0.0
    %1075 = vmatpush.msra.mxu0 0.0
    %1076 = vmatpush.msra.mxu0 %v237
    %1077 = vmatpush.msra.mxu0 %v235
    %1078 = vmatpush.msra.mxu0 %v233
    %1079 = vmatpush.msra.mxu0 %v231
    %1080 = vmatpush.msra.mxu0 %v229
    %1081 = vmatpush.msra.mxu0 %v227
    %1082 = vmatpush.msra.mxu0 %v225
    %1083 = vmatpush.msra.mxu0 %v223
    %1084 = vmatmul.f32.gmra.mxu0 %v1066
    %v1085 = vpop.f32.mrf.mxu0
    %v1086 = vadd.f32 0.0, %v1085
    %1087 = vdwg.mxu0
    %1088 = vmatpush.msra.mxu0 0.0
    %1089 = vmatpush.msra.mxu0 0.0
    %1090 = vmatpush.msra.mxu0 0.0
    %1091 = vmatpush.msra.mxu0 0.0
    %1092 = vmatpush.msra.mxu0 0.0
    %1093 = vmatpush.msra.mxu0 0.0
    %1094 = vmatpush.msra.mxu0 0.0
    %1095 = vmatpush.msra.mxu0 0.0
    %1096 = vmatpush.msra.mxu0 %v238
    %1097 = vmatpush.msra.mxu0 %v236
    %1098 = vmatpush.msra.mxu0 %v234
    %1099 = vmatpush.msra.mxu0 %v232
    %1100 = vmatpush.msra.mxu0 %v230
    %1101 = vmatpush.msra.mxu0 %v228
    %1102 = vmatpush.msra.mxu0 %v226
    %1103 = vmatpush.msra.mxu0 %v224
    %1104 = vmatmul.f32.gmra.mxu0 %v1066
    %v1105 = vpop.f32.mrf.mxu0
    %v1106 = vadd.f32 0.0, %v1105
    %1107 = vdwg.mxu0
    %v1108 = vld [vmem:[%s431] sm:$0xff]
    %v1109 = vadd.f32 %v1086, %v1108
    %v1110 = vld [vmem:[%s426 + $0x8] sm:$0xff]
    %v1111 = vadd.f32 %v1106, %v1110
    %v1112 = vxor.u32 %v1109, 2147483648
    %v1113 = vmul.f32 %v1112, 1.442695
    %v1114 = vpow.pop %v1113
    %v1115 = vadd.f32 %v1114, 1.0
    %v1116 = vrcp.pop %v1115
    %v1117 = vmul.f32 %v1115, %v1116
    %v1118 = vsub.f32 1.0, %v1117
    %v1119 = vmul.f32 %v1116, %v1118
    %v1120 = vadd.f32 %v1116, %v1119
    %vm1121 = vweird.f32 %v1115
    %vm1122 = vweird.f32 %v1116
    %vm1123 = vmor %vm1121, %vm1122
    %v1124 = vsel %vm1123, %v1116, %v1120
    %v1125 = vand.u32 2147483647, %v1115
    %vm1126 = vcmp.eq.f32.partialorder %v1125, 8.507059e+37
    %v1127 = vand.u32 %v1115, 2147483648
    %v1128 = vor.u32 1.1754944e-38, %v1127
    %v1129 = vsel %vm1126, %v1128, %v1124
    %v1130 = vmul.f32 1.0, %v1129
    %v1131 = vtanh.pop %v1109
    %v1132 = vmul.f32 %v1130, %v1010
    %1134 = vrot.lane.b32.xlu0 %v1131, 32
    %v1135 = vpop.permute.xlu0 %1134
    %v1137 = vmul.f32 %v1130, %v1135
    %1139 = vrot.lane.b32.xlu0 %v1137, 32
    %v1140 = vpop.permute.xlu0 %1139
    %v1142 = vadd.f32 %v1132, %v1140
    %v1143 = vtanh.pop %v1142
    %1145 = vrot.lane.b32.xlu0 %v1143, 32
    %v1146 = vpop.permute.xlu0 %1145
    %v1148 = vmul.f32 %v1130, %v1146
    %v1149 = vxor.u32 %v1111, 2147483648
    %v1150 = vmul.f32 %v1149, 1.442695
    %v1151 = vpow.pop %v1150
    %v1152 = vadd.f32 %v1151, 1.0
    %v1153 = vrcp.pop %v1152
    %v1154 = vmul.f32 %v1152, %v1153
    %v1155 = vsub.f32 1.0, %v1154
    %v1156 = vmul.f32 %v1153, %v1155
    %v1157 = vadd.f32 %v1153, %v1156
    %vm1158 = vweird.f32 %v1152
    %vm1159 = vweird.f32 %v1153
    %vm1160 = vmor %vm1158, %vm1159
    %v1161 = vsel %vm1160, %v1153, %v1157
    %v1162 = vand.u32 2147483647, %v1152
    %vm1163 = vcmp.eq.f32.partialorder %v1162, 8.507059e+37
    %v1164 = vand.u32 %v1152, 2147483648
    %v1165 = vor.u32 1.1754944e-38, %v1164
    %v1166 = vsel %vm1163, %v1165, %v1161
    %v1167 = vmul.f32 1.0, %v1166
    %v1168 = vtanh.pop %v1111
    %v1169 = vmul.f32 %v1167, %v1047
    %1171 = vrot.lane.b32.xlu0 %v1168, 32
    %v1172 = vpop.permute.xlu0 %1171
    %v1174 = vmul.f32 %v1167, %v1172
    %1176 = vrot.lane.b32.xlu0 %v1174, 32
    %v1177 = vpop.permute.xlu0 %1176
    %v1179 = vadd.f32 %v1169, %v1177
    %v1180 = vtanh.pop %v1179
    %1182 = vrot.lane.b32.xlu0 %v1180, 32
    %v1183 = vpop.permute.xlu0 %1182
    %v1185 = vmul.f32 %v1167, %v1183
    %1187 = vrot.lane.b32.xlu0 %v1148, 64
    %v1188 = vpop.permute.xlu0 %1187
    %1190 = vst.msk [vmem:[%s518] sm:$0xff] %vm371, %v1188
    %1192 = vrot.lane.b32.xlu0 %v1185, 96
    %v1193 = vpop.permute.xlu0 %1192
    %1195 = vst.msk [vmem:[%s512] sm:$0xff] %vm378, %v1193
    %v1196 = vsel %vm371, %v1188, %v1193
    %v1198 = vsel %vm239, %v1196, 0
    %1200 = vmatpush.msra.mxu0 0.0
    %1201 = vmatpush.msra.mxu0 0.0
    %1202 = vmatpush.msra.mxu0 0.0
    %1203 = vmatpush.msra.mxu0 0.0
    %1204 = vmatpush.msra.mxu0 0.0
    %1205 = vmatpush.msra.mxu0 0.0
    %1206 = vmatpush.msra.mxu0 0.0
    %1207 = vmatpush.msra.mxu0 0.0
    %1208 = vmatpush.msra.mxu0 %v237
    %1209 = vmatpush.msra.mxu0 %v235
    %1210 = vmatpush.msra.mxu0 %v233
    %1211 = vmatpush.msra.mxu0 %v231
    %1212 = vmatpush.msra.mxu0 %v229
    %1213 = vmatpush.msra.mxu0 %v227
    %1214 = vmatpush.msra.mxu0 %v225
    %1215 = vmatpush.msra.mxu0 %v223
    %1216 = vmatmul.f32.gmra.mxu0 %v1198
    %v1217 = vpop.f32.mrf.mxu0
    %v1218 = vadd.f32 0.0, %v1217
    %1219 = vdwg.mxu0
    %1220 = vmatpush.msra.mxu0 0.0
    %1221 = vmatpush.msra.mxu0 0.0
    %1222 = vmatpush.msra.mxu0 0.0
    %1223 = vmatpush.msra.mxu0 0.0
    %1224 = vmatpush.msra.mxu0 0.0
    %1225 = vmatpush.msra.mxu0 0.0
    %1226 = vmatpush.msra.mxu0 0.0
    %1227 = vmatpush.msra.mxu0 0.0
    %1228 = vmatpush.msra.mxu0 %v238
    %1229 = vmatpush.msra.mxu0 %v236
    %1230 = vmatpush.msra.mxu0 %v234
    %1231 = vmatpush.msra.mxu0 %v232
    %1232 = vmatpush.msra.mxu0 %v230
    %1233 = vmatpush.msra.mxu0 %v228
    %1234 = vmatpush.msra.mxu0 %v226
    %1235 = vmatpush.msra.mxu0 %v224
    %1236 = vmatmul.f32.gmra.mxu0 %v1198
    %v1237 = vpop.f32.mrf.mxu0
    %v1238 = vadd.f32 0.0, %v1237
    %1239 = vdwg.mxu0
    %v1240 = vld [vmem:[%s290] sm:$0xff]
    %v1241 = vadd.f32 %v1218, %v1240
    %v1242 = vld [vmem:[%s285 + $0x8] sm:$0xff]
    %v1243 = vadd.f32 %v1238, %v1242
    %v1244 = vxor.u32 %v1241, 2147483648
    %v1245 = vmul.f32 %v1244, 1.442695
    %v1246 = vpow.pop %v1245
    %v1247 = vadd.f32 %v1246, 1.0
    %v1248 = vrcp.pop %v1247
    %v1249 = vmul.f32 %v1247, %v1248
    %v1250 = vsub.f32 1.0, %v1249
    %v1251 = vmul.f32 %v1248, %v1250
    %v1252 = vadd.f32 %v1248, %v1251
    %vm1253 = vweird.f32 %v1247
    %vm1254 = vweird.f32 %v1248
    %vm1255 = vmor %vm1253, %vm1254
    %v1256 = vsel %vm1255, %v1248, %v1252
    %v1257 = vand.u32 2147483647, %v1247
    %vm1258 = vcmp.eq.f32.partialorder %v1257, 8.507059e+37
    %v1259 = vand.u32 %v1247, 2147483648
    %v1260 = vor.u32 1.1754944e-38, %v1259
    %v1261 = vsel %vm1258, %v1260, %v1256
    %v1262 = vmul.f32 1.0, %v1261
    %v1263 = vtanh.pop %v1241
    %v1264 = vmul.f32 %v1262, %v1142
    %1266 = vrot.lane.b32.xlu0 %v1263, 32
    %v1267 = vpop.permute.xlu0 %1266
    %v1269 = vmul.f32 %v1262, %v1267
    %1271 = vrot.lane.b32.xlu0 %v1269, 32
    %v1272 = vpop.permute.xlu0 %1271
    %v1274 = vadd.f32 %v1264, %v1272
    %v1275 = vtanh.pop %v1274
    %1277 = vrot.lane.b32.xlu0 %v1275, 32
    %v1278 = vpop.permute.xlu0 %1277
    %v1280 = vmul.f32 %v1262, %v1278
    %v1281 = vxor.u32 %v1243, 2147483648
    %v1282 = vmul.f32 %v1281, 1.442695
    %v1283 = vpow.pop %v1282
    %v1284 = vadd.f32 %v1283, 1.0
    %v1285 = vrcp.pop %v1284
    %v1286 = vmul.f32 %v1284, %v1285
    %v1287 = vsub.f32 1.0, %v1286
    %v1288 = vmul.f32 %v1285, %v1287
    %v1289 = vadd.f32 %v1285, %v1288
    %vm1290 = vweird.f32 %v1284
    %vm1291 = vweird.f32 %v1285
    %vm1292 = vmor %vm1290, %vm1291
    %v1293 = vsel %vm1292, %v1285, %v1289
    %v1294 = vand.u32 2147483647, %v1284
    %vm1295 = vcmp.eq.f32.partialorder %v1294, 8.507059e+37
    %v1296 = vand.u32 %v1284, 2147483648
    %v1297 = vor.u32 1.1754944e-38, %v1296
    %v1298 = vsel %vm1295, %v1297, %v1293
    %v1299 = vmul.f32 1.0, %v1298
    %v1300 = vtanh.pop %v1243
    %v1301 = vmul.f32 %v1299, %v1179
    %1303 = vrot.lane.b32.xlu0 %v1300, 32
    %v1304 = vpop.permute.xlu0 %1303
    %v1306 = vmul.f32 %v1299, %v1304
    %1308 = vrot.lane.b32.xlu0 %v1306, 32
    %v1309 = vpop.permute.xlu0 %1308
    %v1311 = vadd.f32 %v1301, %v1309
    %v1312 = vtanh.pop %v1311
    %1314 = vrot.lane.b32.xlu0 %v1312, 32
    %v1315 = vpop.permute.xlu0 %1314
    %v1317 = vmul.f32 %v1299, %v1315
    %1319 = vrot.lane.b32.xlu0 %v1280, 64
    %v1320 = vpop.permute.xlu0 %1319
    %1322 = vst.msk [vmem:[%s377] sm:$0xff] %vm371, %v1320
    %1324 = vrot.lane.b32.xlu0 %v1317, 96
    %v1325 = vpop.permute.xlu0 %1324
    %1327 = vst.msk [vmem:[#allocation3] sm:$0xff] %vm378, %v1325
    %v1328 = vld [vmem:[#allocation3] sm:$0xff]
    %v1329 = vld [vmem:[#allocation3 + $0x8] sm:$0xff]
    %v1330 = vld [vmem:[#allocation3 + $0x10] sm:$0xff]
    %v1331 = vld [vmem:[#allocation3 + $0x18] sm:$0xff]
    %v1332 = vld [vmem:[#allocation3 + $0x20] sm:$0xff]
    %v1333 = vld [vmem:[#allocation3 + $0x28] sm:$0xff]
    %v1334 = vld [vmem:[#allocation3 + $0x30] sm:$0xff]
    %v1335 = vld [vmem:[#allocation3 + $0x38] sm:$0xff]
    %v1336 = vld [vmem:[%s4] sm:$0xff]
    %v1337 = vld [vmem:[%s4 + $0x8] sm:$0xff]
    %v1338 = vld [vmem:[%s4 + $0x10] sm:$0xff]
    %v1339 = vld [vmem:[%s4 + $0x18] sm:$0xff]
    %v1340 = vld [vmem:[%s4 + $0x20] sm:$0xff]
    %v1341 = vld [vmem:[%s4 + $0x28] sm:$0xff]
    %v1342 = vld [vmem:[%s4 + $0x30] sm:$0xff]
    %v1343 = vld [vmem:[%s4 + $0x38] sm:$0xff]
    %v1344 = vld [vmem:[#allocation6] sm:$0x1]
    %v1346 = vperm.slane %v1344, 0
    %v1349 = vsel %vm239, %v1328, 0
    %v1352 = vsel %vm239, %v1329, 0
    %v1355 = vsel %vm239, %v1330, 0
    %v1358 = vsel %vm239, %v1331, 0
    %v1361 = vsel %vm239, %v1332, 0
    %v1364 = vsel %vm239, %v1333, 0
    %v1367 = vsel %vm239, %v1334, 0
    %v1370 = vsel %vm239, %v1335, 0
    %1372 = vmatpush.msra.mxu0 0.0
    %1373 = vmatpush.msra.mxu0 0.0
    %1374 = vmatpush.msra.mxu0 0.0
    %1375 = vmatpush.msra.mxu0 0.0
    %1376 = vmatpush.msra.mxu0 0.0
    %1377 = vmatpush.msra.mxu0 0.0
    %1378 = vmatpush.msra.mxu0 0.0
    %1379 = vmatpush.msra.mxu0 0.0
    %1380 = vmatpush.msra.mxu0 %v1343
    %1381 = vmatpush.msra.mxu0 %v1342
    %1382 = vmatpush.msra.mxu0 %v1341
    %1383 = vmatpush.msra.mxu0 %v1340
    %1384 = vmatpush.msra.mxu0 %v1339
    %1385 = vmatpush.msra.mxu0 %v1338
    %1386 = vmatpush.msra.mxu0 %v1337
    %1387 = vmatpush.msra.mxu0 %v1336
    %1388 = vmatmul.f32.gmra.mxu0 %v1349
    %v1389 = vpop.f32.mrf.mxu0
    %v1390 = vadd.f32 %v1346, %v1389
    %1391 = vmatmul.f32.gmra.mxu0 %v1352
    %v1392 = vpop.f32.mrf.mxu0
    %v1393 = vadd.f32 %v1346, %v1392
    %1394 = vmatmul.f32.gmra.mxu0 %v1355
    %v1395 = vpop.f32.mrf.mxu0
    %v1396 = vadd.f32 %v1346, %v1395
    %1397 = vmatmul.f32.gmra.mxu0 %v1358
    %v1398 = vpop.f32.mrf.mxu0
    %v1399 = vadd.f32 %v1346, %v1398
    %1400 = vmatmul.f32.gmra.mxu0 %v1361
    %v1401 = vpop.f32.mrf.mxu0
    %v1402 = vadd.f32 %v1346, %v1401
    %1403 = vmatmul.f32.gmra.mxu0 %v1364
    %v1404 = vpop.f32.mrf.mxu0
    %v1405 = vadd.f32 %v1346, %v1404
    %1406 = vmatmul.f32.gmra.mxu0 %v1367
    %v1407 = vpop.f32.mrf.mxu0
    %v1408 = vadd.f32 %v1346, %v1407
    %1409 = vmatmul.f32.gmra.mxu0 %v1370
    %v1410 = vpop.f32.mrf.mxu0
    %v1411 = vadd.f32 %v1346, %v1410
    %1412 = vdwg.mxu0
    %1413 = vst [vmem:[#allocation2] sm:$0xff] %v1390
    %1414 = vst [vmem:[#allocation2 + $0x10] sm:$0xff] %v1393
    %1415 = vst [vmem:[#allocation2 + $0x20] sm:$0xff] %v1396
    %1416 = vst [vmem:[#allocation2 + $0x30] sm:$0xff] %v1399
    %1417 = vst [vmem:[#allocation2 + $0x40] sm:$0xff] %v1402
    %1418 = vst [vmem:[#allocation2 + $0x50] sm:$0xff] %v1405
    %1419 = vst [vmem:[#allocation2 + $0x60] sm:$0xff] %v1408
    %1420 = vst [vmem:[#allocation2 + $0x70] sm:$0xff] %v1411
    %v1421 = vld [vmem:[#allocation4] sm:$0xff]
    %v1422 = vld [vmem:[#allocation4 + $0x8] sm:$0xff]
    %v1423 = vld [vmem:[#allocation4 + $0x10] sm:$0xff]
    %v1424 = vld [vmem:[#allocation4 + $0x18] sm:$0xff]
    %v1425 = vld [vmem:[%s285] sm:$0xff]
    %v1426 = vsel %vm371, 0.0, 0
    %1428 = vmatpush.msra.mxu0 0.0
    %1429 = vmatpush.msra.mxu0 0.0
    %1430 = vmatpush.msra.mxu0 0.0
    %1431 = vmatpush.msra.mxu0 0.0
    %1432 = vmatpush.msra.mxu0 0.0
    %1433 = vmatpush.msra.mxu0 0.0
    %1434 = vmatpush.msra.mxu0 0.0
    %1435 = vmatpush.msra.mxu0 0.0
    %1436 = vmatpush.msra.mxu0 0.0
    %1437 = vmatpush.msra.mxu0 0.0
    %1438 = vmatpush.msra.mxu0 0.0
    %1439 = vmatpush.msra.mxu0 0.0
    %1440 = vmatpush.msra.mxu0 %v1424
    %1441 = vmatpush.msra.mxu0 %v1423
    %1442 = vmatpush.msra.mxu0 %v1422
    %1443 = vmatpush.msra.mxu0 %v1421
    %1444 = vmatmul.f32.gmra.mxu0 %v1426
    %v1445 = vpop.f32.mrf.mxu0
    %v1446 = vadd.f32 %v1425, %v1445
    %1447 = vdwg.mxu0
    %v1448 = vxor.u32 %v1446, 2147483648
    %v1449 = vmul.f32 %v1448, 1.442695
    %v1450 = vpow.pop %v1449
    %v1451 = vadd.f32 %v1450, 1.0
    %v1452 = vrcp.pop %v1451
    %v1453 = vmul.f32 %v1451, %v1452
    %v1454 = vsub.f32 1.0, %v1453
    %v1455 = vmul.f32 %v1452, %v1454
    %v1456 = vadd.f32 %v1452, %v1455
    %vm1457 = vweird.f32 %v1451
    %vm1458 = vweird.f32 %v1452
    %vm1459 = vmor %vm1457, %vm1458
    %v1460 = vsel %vm1459, %v1452, %v1456
    %v1461 = vand.u32 2147483647, %v1451
    %vm1462 = vcmp.eq.f32.partialorder %v1461, 8.507059e+37
    %v1463 = vand.u32 %v1451, 2147483648
    %v1464 = vor.u32 1.1754944e-38, %v1463
    %v1465 = vsel %vm1462, %v1464, %v1460
    %v1466 = vmul.f32 1.0, %v1465
    %v1467 = vtanh.pop %v1446
    %v1468 = vmul.f32 %v1466, 0.0
    %1470 = vrot.lane.b32.xlu0 %v1467, 32
    %v1471 = vpop.permute.xlu0 %1470
    %v1473 = vmul.f32 %v1466, %v1471
    %1475 = vrot.lane.b32.xlu0 %v1473, 32
    %v1476 = vpop.permute.xlu0 %1475
    %v1478 = vadd.f32 %v1468, %v1476
    %v1479 = vtanh.pop %v1478
    %1481 = vrot.lane.b32.xlu0 %v1479, 32
    %v1482 = vpop.permute.xlu0 %1481
    %v1484 = vmul.f32 %v1466, %v1482
    %v1485 = vld [vmem:[%s426] sm:$0xff]
    %1487 = vrot.lane.b32.xlu0 %v1484, 64
    %v1488 = vpop.permute.xlu0 %1487
    %v1489 = vsel %vm371, %v1488, 0
    %1491 = vmatpush.msra.mxu0 0.0
    %1492 = vmatpush.msra.mxu0 0.0
    %1493 = vmatpush.msra.mxu0 0.0
    %1494 = vmatpush.msra.mxu0 0.0
    %1495 = vmatpush.msra.mxu0 0.0
    %1496 = vmatpush.msra.mxu0 0.0
    %1497 = vmatpush.msra.mxu0 0.0
    %1498 = vmatpush.msra.mxu0 0.0
    %1499 = vmatpush.msra.mxu0 0.0
    %1500 = vmatpush.msra.mxu0 0.0
    %1501 = vmatpush.msra.mxu0 0.0
    %1502 = vmatpush.msra.mxu0 0.0
    %1503 = vmatpush.msra.mxu0 %v1424
    %1504 = vmatpush.msra.mxu0 %v1423
    %1505 = vmatpush.msra.mxu0 %v1422
    %1506 = vmatpush.msra.mxu0 %v1421
    %1507 = vmatmul.f32.gmra.mxu0 %v1489
    %v1508 = vpop.f32.mrf.mxu0
    %v1509 = vadd.f32 %v1485, %v1508
    %1510 = vdwg.mxu0
    %v1511 = vxor.u32 %v1509, 2147483648
    %v1512 = vmul.f32 %v1511, 1.442695
    %v1513 = vpow.pop %v1512
    %v1514 = vadd.f32 %v1513, 1.0
    %v1515 = vrcp.pop %v1514
    %v1516 = vmul.f32 %v1514, %v1515
    %v1517 = vsub.f32 1.0, %v1516
    %v1518 = vmul.f32 %v1515, %v1517
    %v1519 = vadd.f32 %v1515, %v1518
    %vm1520 = vweird.f32 %v1514
    %vm1521 = vweird.f32 %v1515
    %vm1522 = vmor %vm1520, %vm1521
    %v1523 = vsel %vm1522, %v1515, %v1519
    %v1524 = vand.u32 2147483647, %v1514
    %vm1525 = vcmp.eq.f32.partialorder %v1524, 8.507059e+37
    %v1526 = vand.u32 %v1514, 2147483648
    %v1527 = vor.u32 1.1754944e-38, %v1526
    %v1528 = vsel %vm1525, %v1527, %v1523
    %v1529 = vmul.f32 1.0, %v1528
    %v1530 = vtanh.pop %v1509
    %v1531 = vmul.f32 %v1529, %v1478
    %1533 = vrot.lane.b32.xlu0 %v1530, 32
    %v1534 = vpop.permute.xlu0 %1533
    %v1536 = vmul.f32 %v1529, %v1534
    %1538 = vrot.lane.b32.xlu0 %v1536, 32
    %v1539 = vpop.permute.xlu0 %1538
    %v1541 = vadd.f32 %v1531, %v1539
    %v1542 = vtanh.pop %v1541
    %1544 = vrot.lane.b32.xlu0 %v1542, 32
    %v1545 = vpop.permute.xlu0 %1544
    %v1547 = vmul.f32 %v1529, %v1545
    %v1548 = vld [vmem:[%s566] sm:$0xff]
    %1550 = vrot.lane.b32.xlu0 %v1547, 64
    %v1551 = vpop.permute.xlu0 %1550
    %v1552 = vsel %vm371, %v1551, 0
    %1554 = vmatpush.msra.mxu0 0.0
    %1555 = vmatpush.msra.mxu0 0.0
    %1556 = vmatpush.msra.mxu0 0.0
    %1557 = vmatpush.msra.mxu0 0.0
    %1558 = vmatpush.msra.mxu0 0.0
    %1559 = vmatpush.msra.mxu0 0.0
    %1560 = vmatpush.msra.mxu0 0.0
    %1561 = vmatpush.msra.mxu0 0.0
    %1562 = vmatpush.msra.mxu0 0.0
    %1563 = vmatpush.msra.mxu0 0.0
    %1564 = vmatpush.msra.mxu0 0.0
    %1565 = vmatpush.msra.mxu0 0.0
    %1566 = vmatpush.msra.mxu0 %v1424
    %1567 = vmatpush.msra.mxu0 %v1423
    %1568 = vmatpush.msra.mxu0 %v1422
    %1569 = vmatpush.msra.mxu0 %v1421
    %1570 = vmatmul.f32.gmra.mxu0 %v1552
    %v1571 = vpop.f32.mrf.mxu0
    %v1572 = vadd.f32 %v1548, %v1571
    %1573 = vdwg.mxu0
    %v1574 = vxor.u32 %v1572, 2147483648
    %v1575 = vmul.f32 %v1574, 1.442695
    %v1576 = vpow.pop %v1575
    %v1577 = vadd.f32 %v1576, 1.0
    %v1578 = vrcp.pop %v1577
    %v1579 = vmul.f32 %v1577, %v1578
    %v1580 = vsub.f32 1.0, %v1579
    %v1581 = vmul.f32 %v1578, %v1580
    %v1582 = vadd.f32 %v1578, %v1581
    %vm1583 = vweird.f32 %v1577
    %vm1584 = vweird.f32 %v1578
    %vm1585 = vmor %vm1583, %vm1584
    %v1586 = vsel %vm1585, %v1578, %v1582
    %v1587 = vand.u32 2147483647, %v1577
    %vm1588 = vcmp.eq.f32.partialorder %v1587, 8.507059e+37
    %v1589 = vand.u32 %v1577, 2147483648
    %v1590 = vor.u32 1.1754944e-38, %v1589
    %v1591 = vsel %vm1588, %v1590, %v1586
    %v1592 = vmul.f32 1.0, %v1591
    %v1593 = vtanh.pop %v1572
    %v1594 = vmul.f32 %v1592, %v1541
    %1596 = vrot.lane.b32.xlu0 %v1593, 32
    %v1597 = vpop.permute.xlu0 %1596
    %v1599 = vmul.f32 %v1592, %v1597
    %1601 = vrot.lane.b32.xlu0 %v1599, 32
    %v1602 = vpop.permute.xlu0 %1601
    %v1604 = vadd.f32 %v1594, %v1602
    %v1605 = vtanh.pop %v1604
    %1607 = vrot.lane.b32.xlu0 %v1605, 32
    %v1608 = vpop.permute.xlu0 %1607
    %v1610 = vmul.f32 %v1592, %v1608
    %v1611 = vld [vmem:[%s706] sm:$0xff]
    %1613 = vrot.lane.b32.xlu0 %v1610, 64
    %v1614 = vpop.permute.xlu0 %1613
    %v1615 = vsel %vm371, %v1614, 0
    %1617 = vmatpush.msra.mxu0 0.0
    %1618 = vmatpush.msra.mxu0 0.0
    %1619 = vmatpush.msra.mxu0 0.0
    %1620 = vmatpush.msra.mxu0 0.0
    %1621 = vmatpush.msra.mxu0 0.0
    %1622 = vmatpush.msra.mxu0 0.0
    %1623 = vmatpush.msra.mxu0 0.0
    %1624 = vmatpush.msra.mxu0 0.0
    %1625 = vmatpush.msra.mxu0 0.0
    %1626 = vmatpush.msra.mxu0 0.0
    %1627 = vmatpush.msra.mxu0 0.0
    %1628 = vmatpush.msra.mxu0 0.0
    %1629 = vmatpush.msra.mxu0 %v1424
    %1630 = vmatpush.msra.mxu0 %v1423
    %1631 = vmatpush.msra.mxu0 %v1422
    %1632 = vmatpush.msra.mxu0 %v1421
    %1633 = vmatmul.f32.gmra.mxu0 %v1615
    %v1634 = vpop.f32.mrf.mxu0
    %v1635 = vadd.f32 %v1611, %v1634
    %1636 = vdwg.mxu0
    %v1637 = vxor.u32 %v1635, 2147483648
    %v1638 = vmul.f32 %v1637, 1.442695
    %v1639 = vpow.pop %v1638
    %v1640 = vadd.f32 %v1639, 1.0
    %v1641 = vrcp.pop %v1640
    %v1642 = vmul.f32 %v1640, %v1641
    %v1643 = vsub.f32 1.0, %v1642
    %v1644 = vmul.f32 %v1641, %v1643
    %v1645 = vadd.f32 %v1641, %v1644
    %vm1646 = vweird.f32 %v1640
    %vm1647 = vweird.f32 %v1641
    %vm1648 = vmor %vm1646, %vm1647
    %v1649 = vsel %vm1648, %v1641, %v1645
    %v1650 = vand.u32 2147483647, %v1640
    %vm1651 = vcmp.eq.f32.partialorder %v1650, 8.507059e+37
    %v1652 = vand.u32 %v1640, 2147483648
    %v1653 = vor.u32 1.1754944e-38, %v1652
    %v1654 = vsel %vm1651, %v1653, %v1649
    %v1655 = vmul.f32 1.0, %v1654
    %v1656 = vtanh.pop %v1635
    %v1657 = vmul.f32 %v1655, %v1604
    %1659 = vrot.lane.b32.xlu0 %v1656, 32
    %v1660 = vpop.permute.xlu0 %1659
    %v1662 = vmul.f32 %v1655, %v1660
    %1664 = vrot.lane.b32.xlu0 %v1662, 32
    %v1665 = vpop.permute.xlu0 %1664
    %v1667 = vadd.f32 %v1657, %v1665
    %v1668 = vtanh.pop %v1667
    %1670 = vrot.lane.b32.xlu0 %v1668, 32
    %v1671 = vpop.permute.xlu0 %1670
    %v1673 = vmul.f32 %v1655, %v1671
    %v1674 = vld [vmem:[%s711] sm:$0xff]
    %1676 = vrot.lane.b32.xlu0 %v1673, 64
    %v1677 = vpop.permute.xlu0 %1676
    %v1678 = vsel %vm371, %v1677, 0
    %1680 = vmatpush.msra.mxu0 0.0
    %1681 = vmatpush.msra.mxu0 0.0
    %1682 = vmatpush.msra.mxu0 0.0
    %1683 = vmatpush.msra.mxu0 0.0
    %1684 = vmatpush.msra.mxu0 0.0
    %1685 = vmatpush.msra.mxu0 0.0
    %1686 = vmatpush.msra.mxu0 0.0
    %1687 = vmatpush.msra.mxu0 0.0
    %1688 = vmatpush.msra.mxu0 0.0
    %1689 = vmatpush.msra.mxu0 0.0
    %1690 = vmatpush.msra.mxu0 0.0
    %1691 = vmatpush.msra.mxu0 0.0
    %1692 = vmatpush.msra.mxu0 %v1424
    %1693 = vmatpush.msra.mxu0 %v1423
    %1694 = vmatpush.msra.mxu0 %v1422
    %1695 = vmatpush.msra.mxu0 %v1421
    %1696 = vmatmul.f32.gmra.mxu0 %v1678
    %v1697 = vpop.f32.mrf.mxu0
    %v1698 = vadd.f32 %v1674, %v1697
    %1699 = vdwg.mxu0
    %v1700 = vxor.u32 %v1698, 2147483648
    %v1701 = vmul.f32 %v1700, 1.442695
    %v1702 = vpow.pop %v1701
    %v1703 = vadd.f32 %v1702, 1.0
    %v1704 = vrcp.pop %v1703
    %v1705 = vmul.f32 %v1703, %v1704
    %v1706 = vsub.f32 1.0, %v1705
    %v1707 = vmul.f32 %v1704, %v1706
    %v1708 = vadd.f32 %v1704, %v1707
    %vm1709 = vweird.f32 %v1703
    %vm1710 = vweird.f32 %v1704
    %vm1711 = vmor %vm1709, %vm1710
    %v1712 = vsel %vm1711, %v1704, %v1708
    %v1713 = vand.u32 2147483647, %v1703
    %vm1714 = vcmp.eq.f32.partialorder %v1713, 8.507059e+37
    %v1715 = vand.u32 %v1703, 2147483648
    %v1716 = vor.u32 1.1754944e-38, %v1715
    %v1717 = vsel %vm1714, %v1716, %v1712
    %v1718 = vmul.f32 1.0, %v1717
    %v1719 = vtanh.pop %v1698
    %v1720 = vmul.f32 %v1718, %v1667
    %1722 = vrot.lane.b32.xlu0 %v1719, 32
    %v1723 = vpop.permute.xlu0 %1722
    %v1725 = vmul.f32 %v1718, %v1723
    %1727 = vrot.lane.b32.xlu0 %v1725, 32
    %v1728 = vpop.permute.xlu0 %1727
    %v1730 = vadd.f32 %v1720, %v1728
    %v1731 = vtanh.pop %v1730
    %1733 = vrot.lane.b32.xlu0 %v1731, 32
    %v1734 = vpop.permute.xlu0 %1733
    %v1736 = vmul.f32 %v1718, %v1734
    %v1737 = vld [vmem:[%s571] sm:$0xff]
    %1739 = vrot.lane.b32.xlu0 %v1736, 64
    %v1740 = vpop.permute.xlu0 %1739
    %v1741 = vsel %vm371, %v1740, 0
    %1743 = vmatpush.msra.mxu0 0.0
    %1744 = vmatpush.msra.mxu0 0.0
    %1745 = vmatpush.msra.mxu0 0.0
    %1746 = vmatpush.msra.mxu0 0.0
    %1747 = vmatpush.msra.mxu0 0.0
    %1748 = vmatpush.msra.mxu0 0.0
    %1749 = vmatpush.msra.mxu0 0.0
    %1750 = vmatpush.msra.mxu0 0.0
    %1751 = vmatpush.msra.mxu0 0.0
    %1752 = vmatpush.msra.mxu0 0.0
    %1753 = vmatpush.msra.mxu0 0.0
    %1754 = vmatpush.msra.mxu0 0.0
    %1755 = vmatpush.msra.mxu0 %v1424
    %1756 = vmatpush.msra.mxu0 %v1423
    %1757 = vmatpush.msra.mxu0 %v1422
    %1758 = vmatpush.msra.mxu0 %v1421
    %1759 = vmatmul.f32.gmra.mxu0 %v1741
    %v1760 = vpop.f32.mrf.mxu0
    %v1761 = vadd.f32 %v1737, %v1760
    %1762 = vdwg.mxu0
    %v1763 = vxor.u32 %v1761, 2147483648
    %v1764 = vmul.f32 %v1763, 1.442695
    %v1765 = vpow.pop %v1764
    %v1766 = vadd.f32 %v1765, 1.0
    %v1767 = vrcp.pop %v1766
    %v1768 = vmul.f32 %v1766, %v1767
    %v1769 = vsub.f32 1.0, %v1768
    %v1770 = vmul.f32 %v1767, %v1769
    %v1771 = vadd.f32 %v1767, %v1770
    %vm1772 = vweird.f32 %v1766
    %vm1773 = vweird.f32 %v1767
    %vm1774 = vmor %vm1772, %vm1773
    %v1775 = vsel %vm1774, %v1767, %v1771
    %v1776 = vand.u32 2147483647, %v1766
    %vm1777 = vcmp.eq.f32.partialorder %v1776, 8.507059e+37
    %v1778 = vand.u32 %v1766, 2147483648
    %v1779 = vor.u32 1.1754944e-38, %v1778
    %v1780 = vsel %vm1777, %v1779, %v1775
    %v1781 = vmul.f32 1.0, %v1780
    %v1782 = vtanh.pop %v1761
    %v1783 = vmul.f32 %v1781, %v1730
    %1785 = vrot.lane.b32.xlu0 %v1782, 32
    %v1786 = vpop.permute.xlu0 %1785
    %v1788 = vmul.f32 %v1781, %v1786
    %1790 = vrot.lane.b32.xlu0 %v1788, 32
    %v1791 = vpop.permute.xlu0 %1790
    %v1793 = vadd.f32 %v1783, %v1791
    %v1794 = vtanh.pop %v1793
    %1796 = vrot.lane.b32.xlu0 %v1794, 32
    %v1797 = vpop.permute.xlu0 %1796
    %v1799 = vmul.f32 %v1781, %v1797
    %v1800 = vld [vmem:[%s431] sm:$0xff]
    %1802 = vrot.lane.b32.xlu0 %v1799, 64
    %v1803 = vpop.permute.xlu0 %1802
    %v1804 = vsel %vm371, %v1803, 0
    %1806 = vmatpush.msra.mxu0 0.0
    %1807 = vmatpush.msra.mxu0 0.0
    %1808 = vmatpush.msra.mxu0 0.0
    %1809 = vmatpush.msra.mxu0 0.0
    %1810 = vmatpush.msra.mxu0 0.0
    %1811 = vmatpush.msra.mxu0 0.0
    %1812 = vmatpush.msra.mxu0 0.0
    %1813 = vmatpush.msra.mxu0 0.0
    %1814 = vmatpush.msra.mxu0 0.0
    %1815 = vmatpush.msra.mxu0 0.0
    %1816 = vmatpush.msra.mxu0 0.0
    %1817 = vmatpush.msra.mxu0 0.0
    %1818 = vmatpush.msra.mxu0 %v1424
    %1819 = vmatpush.msra.mxu0 %v1423
    %1820 = vmatpush.msra.mxu0 %v1422
    %1821 = vmatpush.msra.mxu0 %v1421
    %1822 = vmatmul.f32.gmra.mxu0 %v1804
    %v1823 = vpop.f32.mrf.mxu0
    %v1824 = vadd.f32 %v1800, %v1823
    %1825 = vdwg.mxu0
    %v1826 = vxor.u32 %v1824, 2147483648
    %v1827 = vmul.f32 %v1826, 1.442695
    %v1828 = vpow.pop %v1827
    %v1829 = vadd.f32 %v1828, 1.0
    %v1830 = vrcp.pop %v1829
    %v1831 = vmul.f32 %v1829, %v1830
    %v1832 = vsub.f32 1.0, %v1831
    %v1833 = vmul.f32 %v1830, %v1832
    %v1834 = vadd.f32 %v1830, %v1833
    %vm1835 = vweird.f32 %v1829
    %vm1836 = vweird.f32 %v1830
    %vm1837 = vmor %vm1835, %vm1836
    %v1838 = vsel %vm1837, %v1830, %v1834
    %v1839 = vand.u32 2147483647, %v1829
    %vm1840 = vcmp.eq.f32.partialorder %v1839, 8.507059e+37
    %v1841 = vand.u32 %v1829, 2147483648
    %v1842 = vor.u32 1.1754944e-38, %v1841
    %v1843 = vsel %vm1840, %v1842, %v1838
    %v1844 = vmul.f32 1.0, %v1843
    %v1845 = vtanh.pop %v1824
    %v1846 = vmul.f32 %v1844, %v1793
    %1848 = vrot.lane.b32.xlu0 %v1845, 32
    %v1849 = vpop.permute.xlu0 %1848
    %v1851 = vmul.f32 %v1844, %v1849
    %1853 = vrot.lane.b32.xlu0 %v1851, 32
    %v1854 = vpop.permute.xlu0 %1853
    %v1856 = vadd.f32 %v1846, %v1854
    %v1857 = vtanh.pop %v1856
    %1859 = vrot.lane.b32.xlu0 %v1857, 32
    %v1860 = vpop.permute.xlu0 %1859
    %v1862 = vmul.f32 %v1844, %v1860
    %v1863 = vld [vmem:[%s290] sm:$0xff]
    %1865 = vrot.lane.b32.xlu0 %v1862, 64
    %v1866 = vpop.permute.xlu0 %1865
    %v1867 = vsel %vm371, %v1866, 0
    %1869 = vmatpush.msra.mxu0 0.0
    %1870 = vmatpush.msra.mxu0 0.0
    %1871 = vmatpush.msra.mxu0 0.0
    %1872 = vmatpush.msra.mxu0 0.0
    %1873 = vmatpush.msra.mxu0 0.0
    %1874 = vmatpush.msra.mxu0 0.0
    %1875 = vmatpush.msra.mxu0 0.0
    %1876 = vmatpush.msra.mxu0 0.0
    %1877 = vmatpush.msra.mxu0 0.0
    %1878 = vmatpush.msra.mxu0 0.0
    %1879 = vmatpush.msra.mxu0 0.0
    %1880 = vmatpush.msra.mxu0 0.0
    %1881 = vmatpush.msra.mxu0 %v1424
    %1882 = vmatpush.msra.mxu0 %v1423
    %1883 = vmatpush.msra.mxu0 %v1422
    %1884 = vmatpush.msra.mxu0 %v1421
    %1885 = vmatmul.f32.gmra.mxu0 %v1867
    %v1886 = vpop.f32.mrf.mxu0
    %v1887 = vadd.f32 %v1863, %v1886
    %1888 = vdwg.mxu0
    %v1889 = vxor.u32 %v1887, 2147483648
    %v1890 = vmul.f32 %v1889, 1.442695
    %v1891 = vpow.pop %v1890
    %v1892 = vadd.f32 %v1891, 1.0
    %v1893 = vrcp.pop %v1892
    %v1894 = vmul.f32 %v1892, %v1893
    %v1895 = vsub.f32 1.0, %v1894
    %v1896 = vmul.f32 %v1893, %v1895
    %v1897 = vadd.f32 %v1893, %v1896
    %vm1898 = vweird.f32 %v1892
    %vm1899 = vweird.f32 %v1893
    %vm1900 = vmor %vm1898, %vm1899
    %v1901 = vsel %vm1900, %v1893, %v1897
    %v1902 = vand.u32 2147483647, %v1892
    %vm1903 = vcmp.eq.f32.partialorder %v1902, 8.507059e+37
    %v1904 = vand.u32 %v1892, 2147483648
    %v1905 = vor.u32 1.1754944e-38, %v1904
    %v1906 = vsel %vm1903, %v1905, %v1901
    %v1907 = vmul.f32 1.0, %v1906
    %v1908 = vtanh.pop %v1887
    %v1909 = vmul.f32 %v1907, %v1856
    %1911 = vrot.lane.b32.xlu0 %v1908, 32
    %v1912 = vpop.permute.xlu0 %1911
    %v1914 = vmul.f32 %v1907, %v1912
    %1916 = vrot.lane.b32.xlu0 %v1914, 32
    %v1917 = vpop.permute.xlu0 %1916
    %v1919 = vadd.f32 %v1909, %v1917
    %v1920 = vtanh.pop %v1919
    %1922 = vrot.lane.b32.xlu0 %v1920, 32
    %v1923 = vpop.permute.xlu0 %1922
    %v1925 = vmul.f32 %v1907, %v1923
    %v1926 = vld [vmem:[%s7] sm:$0xff]
    %v1927 = vld [vmem:[%s7 + $0x8] sm:$0xff]
    %v1928 = vld [vmem:[%s7 + $0x10] sm:$0xff]
    %v1929 = vld [vmem:[%s7 + $0x18] sm:$0xff]
    %v1930 = vld [vmem:[%s7 + $0x20] sm:$0xff]
    %v1931 = vld [vmem:[%s7 + $0x28] sm:$0xff]
    %v1932 = vld [vmem:[%s7 + $0x30] sm:$0xff]
    %v1933 = vld [vmem:[%s7 + $0x38] sm:$0xff]
    %v1934 = vld [vmem:[#allocation8] sm:$0x1]
    %v1936 = vperm.slane %v1934, 0
    %1938 = vmatpush.msra.mxu0 0.0
    %1939 = vmatpush.msra.mxu0 0.0
    %1940 = vmatpush.msra.mxu0 0.0
    %1941 = vmatpush.msra.mxu0 0.0
    %1942 = vmatpush.msra.mxu0 0.0
    %1943 = vmatpush.msra.mxu0 0.0
    %1944 = vmatpush.msra.mxu0 0.0
    %1945 = vmatpush.msra.mxu0 0.0
    %1946 = vmatpush.msra.mxu0 %v1933
    %1947 = vmatpush.msra.mxu0 %v1932
    %1948 = vmatpush.msra.mxu0 %v1931
    %1949 = vmatpush.msra.mxu0 %v1930
    %1950 = vmatpush.msra.mxu0 %v1929
    %1951 = vmatpush.msra.mxu0 %v1928
    %1952 = vmatpush.msra.mxu0 %v1927
    %1953 = vmatpush.msra.mxu0 %v1926
    %1954 = vmatmul.f32.gmra.mxu0 %v1370
    %v1955 = vpop.f32.mrf.mxu0
    %v1956 = vadd.f32 %v1936, %v1955
    %1957 = vdwg.mxu0
    %v1958 = vxor.u32 %v1956, 2147483648
    %v1959 = vmul.f32 %v1958, 1.442695
    %v1960 = vpow.pop %v1959
    %v1961 = vadd.f32 %v1960, 1.0
    %v1962 = vrcp.pop %v1961
    %v1963 = vmul.f32 %v1961, %v1962
    %v1964 = vsub.f32 1.0, %v1963
    %v1965 = vmul.f32 %v1962, %v1964
    %v1966 = vadd.f32 %v1962, %v1965
    %vm1967 = vweird.f32 %v1961
    %vm1968 = vweird.f32 %v1962
    %vm1969 = vmor %vm1967, %vm1968
    %v1970 = vsel %vm1969, %v1962, %v1966
    %v1971 = vand.u32 2147483647, %v1961
    %vm1972 = vcmp.eq.f32.partialorder %v1971, 8.507059e+37
    %v1973 = vand.u32 %v1961, 2147483648
    %v1974 = vor.u32 1.1754944e-38, %v1973
    %v1975 = vsel %vm1972, %v1974, %v1970
    %v1976 = vmul.f32 1.0, %v1975
    %v1977 = vtanh.pop %v1956
    %v1978 = vmul.f32 %v1976, 0.0
    %1980 = vrot.lane.b32.xlu0 %v1977, 32
    %v1981 = vpop.permute.xlu0 %1980
    %v1983 = vmul.f32 %v1976, %v1981
    %1985 = vrot.lane.b32.xlu0 %v1983, 32
    %v1986 = vpop.permute.xlu0 %1985
    %v1988 = vadd.f32 %v1978, %v1986
    %v1989 = vtanh.pop %v1988
    %1991 = vrot.lane.b32.xlu0 %v1989, 32
    %v1992 = vpop.permute.xlu0 %1991
    %v1994 = vmul.f32 %v1976, %v1992
    %v1995 = vld [vmem:[%s9] sm:$0xff]
    %v1996 = vld [vmem:[%s9 + $0x8] sm:$0xff]
    %v1997 = vld [vmem:[%s9 + $0x10] sm:$0xff]
    %v1998 = vld [vmem:[%s9 + $0x18] sm:$0xff]
    %v1999 = vld [vmem:[%s10] sm:$0xff]
    %v2000 = vld [vmem:[%s10 + $0x8] sm:$0xff]
    %v2001 = vld [vmem:[%s10 + $0x10] sm:$0xff]
    %v2002 = vld [vmem:[%s10 + $0x18] sm:$0xff]
    %2004 = vrot.lane.b32.xlu0 %v1994, 64
    %v2005 = vpop.permute.xlu0 %2004
    %v2006 = vsel %vm371, %v2005, 0
    %2008 = vmatpush.msra.mxu0 0.0
    %2009 = vmatpush.msra.mxu0 0.0
    %2010 = vmatpush.msra.mxu0 0.0
    %2011 = vmatpush.msra.mxu0 0.0
    %2012 = vmatpush.msra.mxu0 0.0
    %2013 = vmatpush.msra.mxu0 0.0
    %2014 = vmatpush.msra.mxu0 0.0
    %2015 = vmatpush.msra.mxu0 0.0
    %2016 = vmatpush.msra.mxu0 0.0
    %2017 = vmatpush.msra.mxu0 0.0
    %2018 = vmatpush.msra.mxu0 0.0
    %2019 = vmatpush.msra.mxu0 0.0
    %2020 = vmatpush.msra.mxu0 %v2002
    %2021 = vmatpush.msra.mxu0 %v2001
    %2022 = vmatpush.msra.mxu0 %v2000
    %2023 = vmatpush.msra.mxu0 %v1999
    %2024 = vmatmul.f32.gmra.mxu0 %v2006
    %v2025 = vpop.f32.mrf.mxu0
    %v2026 = vadd.f32 0.0, %v2025
    %2027 = vdwg.mxu0
    %2029 = vrot.lane.b32.xlu0 %v1925, 64
    %v2030 = vpop.permute.xlu0 %2029
    %v2031 = vsel %vm371, %v2030, 0
    %2033 = vmatpush.msra.mxu0 0.0
    %2034 = vmatpush.msra.mxu0 0.0
    %2035 = vmatpush.msra.mxu0 0.0
    %2036 = vmatpush.msra.mxu0 0.0
    %2037 = vmatpush.msra.mxu0 0.0
    %2038 = vmatpush.msra.mxu0 0.0
    %2039 = vmatpush.msra.mxu0 0.0
    %2040 = vmatpush.msra.mxu0 0.0
    %2041 = vmatpush.msra.mxu0 0.0
    %2042 = vmatpush.msra.mxu0 0.0
    %2043 = vmatpush.msra.mxu0 0.0
    %2044 = vmatpush.msra.mxu0 0.0
    %2045 = vmatpush.msra.mxu0 %v1998
    %2046 = vmatpush.msra.mxu0 %v1997
    %2047 = vmatpush.msra.mxu0 %v1996
    %2048 = vmatpush.msra.mxu0 %v1995
    %2049 = vmatmul.f32.gmra.mxu0 %v2031
    %v2050 = vpop.f32.mrf.mxu0
    %v2051 = vadd.f32 %v2026, %v2050
    %2052 = vdwg.mxu0
    %v2053 = vld [vmem:[%s11] sm:$0x1]
    %v2055 = vperm.slane %v2053, 0
    %v2057 = vadd.f32 %v2051, %v2055
    %vm2058 = vcmask 31744
    %2059 = vst.msk [vmem:[%s12] sm:$0xff] %vm2058, %v2057
    // Predicated region
    $region62: #{bilstm_forward.1} parent=1 // pred_check
      _
    $region63: #{bilstm_forward.1} parent=1 // pred_check_branch
      %2061 = sbr.rel (0) target = $region65
    $region64: #{bilstm_forward.1} parent=1 // pred_region
      _
    $region65: #{bilstm_forward.1} parent=1 // pred_fallthru
      _
    // Predicated region
    $region66: #{bilstm_forward.1} parent=1 // pred_check
      _
    $region67: #{bilstm_forward.1} parent=1 // pred_check_branch
      %2063 = sbr.rel (0) target = $region69
    $region68: #{bilstm_forward.1} parent=1 // pred_region
      _
    $region69: #{bilstm_forward.1} parent=1 // pred_fallthru
      _
    %2064 = vsyncpa [#allocation5], 1
    %2065 = vsyncpa [#allocation7], 1

</llo_original>
